<compile_context>
chip_gen: v5e
topology: v5e:2x2
jax: 0.10.0
libtpu: 0.0.40
codegen_flags: <defaults>
</compile_context>

<pallas_src>
import functools

import jax
import jax.numpy as jnp
import numpy as np
from jax import lax
from jax.experimental import pallas as pl
from jax.experimental.pallas import tpu as pltpu


def _round_up(x, m):
    return (x + m - 1) // m * m


def gru_chunk_kernel(x_ref, wih_ref, whh_ref, bg_ref, bhn_ref, wfc_ref,
                     y_ref, h_ref, *, hs, unroll):
    """One (batch-tile, time-chunk) grid cell of the fused GRU + fc.

    Layout: batch on LANES, gates/hidden on SUBLANES (no 128-lane padding).

    x_ref:   (TC, F, BT)   raw input chunk (time, feature, batch-on-lanes)
    wih_ref: (3*Hs, F)     packed W_ih   (each gate's rows padded H -> Hs)
    whh_ref: (3*Hs, Hs)    packed W_hh
    bg_ref:  (3*Hs, 1)     b_ih with b_hr/b_hz folded in (n block = b_in only)
    bhn_ref: (Hs, 1)       b_hn (stays inside r * (W_hn h + b_hn))
    wfc_ref: (Hs, 1)       fc weight column (fc bias added in the wrapper)
    y_ref:   (TC, BT)      fused fc outputs, one row per time step
    h_ref:   (Hs, BT)      hidden-state carry (VMEM scratch, persists across
                           the sequential time-chunk grid axis)
    """
    # Time-chunk axis (grid axis 1) is sequential; re-init the carry at the
    # start of each batch tile's time loop.
    @pl.when(pl.program_id(1) == 0)
    def _():
        h_ref[...] = jnp.zeros_like(h_ref)

    g = 3 * hs
    bt = h_ref.shape[-1]
    tc = x_ref.shape[0]

    # Loop-invariant loads / broadcasts hoisted out of the unrolled time loop.
    wih = wih_ref[...]                                     # (G, F)
    whh = whh_ref[...]                                     # (G, Hs)
    bg = jnp.broadcast_to(bg_ref[...], (g, bt))            # (G, BT)
    bhn = jnp.broadcast_to(bhn_ref[...], (hs, bt))         # (Hs, BT)
    wfc = jnp.broadcast_to(wfc_ref[...], (hs, bt))         # (Hs, BT)

    def step(t, h):
        # Fused input projection (tiny K = F, off the serial h-dependency).
        gi = jnp.dot(wih, x_ref[t], preferred_element_type=jnp.float32) + bg
        # Recurrent projection: the only matmul on the serial critical path.
        gh = jnp.dot(whh, h, preferred_element_type=jnp.float32)
        # Gate slices are sublane-aligned (Hs is a multiple of 8) -> free.
        r = jax.nn.sigmoid(gi[0 * hs:1 * hs] + gh[0 * hs:1 * hs])
        z = jax.nn.sigmoid(gi[1 * hs:2 * hs] + gh[1 * hs:2 * hs])
        n = jnp.tanh(gi[2 * hs:3 * hs] + r * (gh[2 * hs:3 * hs] + bhn))
        h_new = n + z * (h - n)
        # Fused fc: sublane reduce (XLU slot), lane-dense row store.
        y = jnp.sum(h_new * wfc, axis=0, keepdims=True)    # (1, BT)
        y_ref[pl.ds(t, 1), :] = y
        return h_new

    h_ref[...] = lax.fori_loop(0, tc, step, h_ref[...], unroll=unroll)


def posthoc_rnn_forward(x, params):
    """x: (B, T, F) float32 -> (B, T, 1) float32 (matches PyTorch PosthocRNN)."""
    B, T, F = x.shape
    H = params["w_hh"].shape[0] // 3
    f32 = jnp.float32

    # ---- tiling decisions ------------------------------------------------
    Hs = _round_up(H, 8)            # gate/hidden rows on sublanes, no lane pad
    G = 3 * Hs
    Bp = _round_up(B, 128)          # batch on lanes (lane quantum = 128)
    BT = 128 if Bp >= 256 else Bp   # only split batch tiles when Bp >= 2*BT
    nb = Bp // BT
    nt = pl.cdiv(T, 128)            # time chunks of ~<=128 sequential steps
    TC = pl.cdiv(T, nt)
    if nt > 1:
        TC = _round_up(TC, 8)       # (8,128) rule on the (TC, BT) output block
    Tp = nt * TC

    # ---- weight packing: gate order [r | z | n], rows padded H -> Hs ------
    # Padded rows have zero weights/biases -> gi = gh = 0 -> r = z = 0.5,
    # n = 0, so padded hidden rows stay exactly 0 (and wfc rows there are 0).
    def pack_rows(w):
        pad = [(0, Hs - H)] + [(0, 0)] * (w.ndim - 1)
        return jnp.concatenate(
            [jnp.pad(w[g * H:(g + 1) * H], pad) for g in range(3)], axis=0)

    w_ih = pack_rows(params["w_ih"].astype(f32))                    # (G, F)
    w_hh = pack_rows(params["w_hh"].astype(f32))                    # (G, H)
    w_hh = jnp.pad(w_hh, ((0, 0), (0, Hs - H)))                     # (G, Hs)
    b_ih = params["b_ih"].astype(f32)
    b_hh = params["b_hh"].astype(f32)
    bg = pack_rows(jnp.concatenate(
        [b_ih[:2 * H] + b_hh[:2 * H], b_ih[2 * H:]]))[:, None]      # (G, 1)
    bhn = jnp.pad(b_hh[2 * H:], (0, Hs - H))[:, None]               # (Hs, 1)
    wfc = jnp.pad(params["w_fc"].astype(f32)[0], (0, Hs - H))[:, None]  # (Hs, 1)

    # ---- batch-on-lanes input layout: (T, F, B) zero-padded ---------------
    x_tfb = jnp.transpose(x.astype(f32), (1, 2, 0))                 # (T, F, B)
    x_tfb = jnp.pad(x_tfb, ((0, Tp - T), (0, 0), (0, Bp - B)))      # (Tp, F, Bp)

    kernel = functools.partial(gru_chunk_kernel, hs=Hs, unroll=min(TC, 8))

    y = pl.pallas_call(
        kernel,
        out_shape=jax.ShapeDtypeStruct((Tp, Bp), f32),
        grid_spec=pltpu.PrefetchScalarGridSpec(
            num_scalar_prefetch=0,
            grid=(nb, nt),    # batch tiles (parallel) x time chunks (sequential)
            in_specs=[
                pl.BlockSpec((TC, F, BT), lambda b, t: (t, 0, b)),   # x chunk
                pl.BlockSpec((G, F), lambda b, t: (0, 0)),           # W_ih
                pl.BlockSpec((G, Hs), lambda b, t: (0, 0)),          # W_hh
                pl.BlockSpec((G, 1), lambda b, t: (0, 0)),           # fused bias
                pl.BlockSpec((Hs, 1), lambda b, t: (0, 0)),          # b_hn
                pl.BlockSpec((Hs, 1), lambda b, t: (0, 0)),          # w_fc
            ],
            out_specs=pl.BlockSpec((TC, BT), lambda b, t: (t, b)),
            scratch_shapes=[pltpu.VMEM((Hs, BT), f32)],              # h carry
        ),
        compiler_params=pltpu.CompilerParams(
            dimension_semantics=("parallel", "arbitrary")),
    )(x_tfb, w_ih, w_hh, bg, bhn, wfc)

    # (Tp, Bp) -> (B, T, 1); fc bias added here (cheap O(B*T) scalar add).
    return jnp.transpose(y[:T, :B])[..., None] + params["b_fc"].astype(f32)


def reference_forward(x, params):
    """Pure-JAX reference matching torch.nn.GRU(batch_first=True) + Linear."""
    H = params["w_hh"].shape[0] // 3
    w_ih, w_hh = params["w_ih"], params["w_hh"]
    b_ih, b_hh = params["b_ih"], params["b_hh"]

    def step(h, x_t):
        gi = x_t @ w_ih.T + b_ih
        gh = h @ w_hh.T + b_hh
        r = jax.nn.sigmoid(gi[:, :H] + gh[:, :H])
        z = jax.nn.sigmoid(gi[:, H:2 * H] + gh[:, H:2 * H])
        n = jnp.tanh(gi[:, 2 * H:] + r * gh[:, 2 * H:])
        h_new = (1.0 - z) * n + z * h
        return h_new, h_new

    B = x.shape[0]
    h0 = jnp.zeros((B, H), jnp.float32)
    _, hs = lax.scan(step, h0, jnp.transpose(x, (1, 0, 2)))
    hs = jnp.transpose(hs, (1, 0, 2))             # (B, T, H)
    return hs @ params["w_fc"].T + params["b_fc"]


if __name__ == "__main__":
    # Shapes implied by the module: x is (batch, seq, input_dim - 1), batch_first.
    B, T = 2, 8
    input_dim, hidden_dim = 5, 32
    F = input_dim - 1

    key = jax.random.PRNGKey(0)
    ks = jax.random.split(key, 7)
    k_inv = 1.0 / np.sqrt(hidden_dim)   # PyTorch-style uniform init scale

    params = {
        # nn.GRU parameters (single layer), gate order [r, z, n]:
        "w_ih": jax.random.uniform(ks[0], (3 * hidden_dim, F), jnp.float32, -k_inv, k_inv),
        "w_hh": jax.random.uniform(ks[1], (3 * hidden_dim, hidden_dim), jnp.float32, -k_inv, k_inv),
        "b_ih": jax.random.uniform(ks[2], (3 * hidden_dim,), jnp.float32, -k_inv, k_inv),
        "b_hh": jax.random.uniform(ks[3], (3 * hidden_dim,), jnp.float32, -k_inv, k_inv),
        # nn.Linear(hidden_dim, 1):
        "w_fc": jax.random.uniform(ks[4], (1, hidden_dim), jnp.float32, -k_inv, k_inv),
        "b_fc": jax.random.uniform(ks[5], (1,), jnp.float32, -k_inv, k_inv),
    }
    x = jax.random.normal(ks[6], (B, T, F), jnp.float32)

    fwd = jax.jit(posthoc_rnn_forward)
    out = fwd(x, params)
    out = jax.block_until_ready(out)
    assert out.shape == (B, T, 1)

    ref = reference_forward(x, params)
    np.testing.assert_allclose(np.asarray(out), np.asarray(ref), rtol=1e-5, atol=1e-5)

    print("KERNEL_OK")
</pallas_src>

<mosaic_0001>
module attributes {stable_mosaic.version = 11 : i64} {
  func.func @gru_chunk_kernel(%arg0: i32, %arg1: i32, %arg2: memref<8x4x128xf32, #tpu.memory_space<vmem>>, %arg3: memref<96x4xf32, #tpu.memory_space<vmem>>, %arg4: memref<96x32xf32, #tpu.memory_space<vmem>>, %arg5: memref<96x1xf32, #tpu.memory_space<vmem>>, %arg6: memref<32x1xf32, #tpu.memory_space<vmem>>, %arg7: memref<32x1xf32, #tpu.memory_space<vmem>>, %arg8: memref<8x128xf32, #tpu.memory_space<vmem>>, %arg9: memref<32x128xf32, #tpu.memory_space<vmem>>) attributes {dimension_semantics = [#tpu.dimension_semantics<parallel>, #tpu.dimension_semantics<arbitrary>], iteration_bounds = array<i64: 1, 1>, scalar_prefetch = 0 : i64, scratch_operands = 1 : i64, tpu.core_type = #tpu.core_type<tc>, window_params = [{transform_indices = @transform_0, window_bounds = array<i64: 8, 4, 128>}, {pipeline_mode = #tpu.pipeline_mode<synchronous>, transform_indices = @transform_1, window_bounds = array<i64: 96, 4>}, {pipeline_mode = #tpu.pipeline_mode<synchronous>, transform_indices = @transform_2, window_bounds = array<i64: 96, 32>}, {pipeline_mode = #tpu.pipeline_mode<synchronous>, transform_indices = @transform_3, window_bounds = array<i64: 96, 1>}, {pipeline_mode = #tpu.pipeline_mode<synchronous>, transform_indices = @transform_4, window_bounds = array<i64: 32, 1>}, {pipeline_mode = #tpu.pipeline_mode<synchronous>, transform_indices = @transform_5, window_bounds = array<i64: 32, 1>}, {transform_indices = @transform_6, window_bounds = array<i64: 8, 128>}]} {
    %c0_i32 = arith.constant 0 : i32
    %0 = arith.cmpi eq, %arg1, %c0_i32 : i32
    %1 = arith.extui %0 : i1 to i32
    %c0_i32_0 = arith.constant 0 : i32
    %2 = arith.cmpi ne, %1, %c0_i32_0 : i32
    scf.if %2 {
      %cst_78 = arith.constant 0.000000e+00 : f32
      %304 = vector.broadcast %cst_78 : f32 to vector<32x128xf32>
      %c0_79 = arith.constant 0 : index
      %c0_80 = arith.constant 0 : index
      %305 = vector.load %arg9[%c0_79, %c0_80] : memref<32x128xf32, #tpu.memory_space<vmem>>, vector<32x128xf32>
      tpu.vector_store %arg9[%c0_79, %c0_80], %304 {strides = array<i32>} : memref<32x128xf32, #tpu.memory_space<vmem>>, vector<32x128xf32>,
    } else {
    }
    %c0 = arith.constant 0 : index
    %c0_1 = arith.constant 0 : index
    %3 = vector.load %arg3[%c0, %c0_1] : memref<96x4xf32, #tpu.memory_space<vmem>>, vector<96x4xf32>
    %c0_2 = arith.constant 0 : index
    %c0_3 = arith.constant 0 : index
    %4 = vector.load %arg4[%c0_2, %c0_3] : memref<96x32xf32, #tpu.memory_space<vmem>>, vector<96x32xf32>
    %c0_4 = arith.constant 0 : index
    %c0_5 = arith.constant 0 : index
    %5 = vector.load %arg5[%c0_4, %c0_5] : memref<96x1xf32, #tpu.memory_space<vmem>>, vector<96x1xf32>
    %6 = vector.shape_cast %5 : vector<96x1xf32> to vector<96x1xf32>
    %7 = vector.broadcast %6 : vector<96x1xf32> to vector<96x128xf32>
    %c0_6 = arith.constant 0 : index
    %c0_7 = arith.constant 0 : index
    %8 = vector.load %arg6[%c0_6, %c0_7] : memref<32x1xf32, #tpu.memory_space<vmem>>, vector<32x1xf32>
    %9 = vector.shape_cast %8 : vector<32x1xf32> to vector<32x1xf32>
    %10 = vector.broadcast %9 : vector<32x1xf32> to vector<32x128xf32>
    %c0_8 = arith.constant 0 : index
    %c0_9 = arith.constant 0 : index
    %11 = vector.load %arg7[%c0_8, %c0_9] : memref<32x1xf32, #tpu.memory_space<vmem>>, vector<32x1xf32>
    %12 = vector.shape_cast %11 : vector<32x1xf32> to vector<32x1xf32>
    %13 = vector.broadcast %12 : vector<32x1xf32> to vector<32x128xf32>
    %c0_10 = arith.constant 0 : index
    %c0_11 = arith.constant 0 : index
    %14 = vector.load %arg9[%c0_10, %c0_11] : memref<32x128xf32, #tpu.memory_space<vmem>>, vector<32x128xf32>
    %c0_i32_12 = arith.constant 0 : i32
    %15 = arith.index_cast %c0_i32_12 : i32 to index
    %c0_13 = arith.constant 0 : index
    %c0_14 = arith.constant 0 : index
    %16 = vector.load %arg2[%15, %c0_13, %c0_14] : memref<8x4x128xf32, #tpu.memory_space<vmem>>, vector<1x4x128xf32>
    %17 = vector.shape_cast %16 : vector<1x4x128xf32> to vector<4x128xf32>
    %cst = arith.constant dense<0.000000e+00> : vector<96x128xf32>
    %18 = tpu.matmul %3, %17, %cst {dimension_numbers = #tpu.dot_dimension_numbers<[1], [0], [0], [1], [0, 0, 1, 1], [], []>} : vector<96x4xf32>, vector<4x128xf32>, vector<96x128xf32> -> vector<96x128xf32>
    %19 = arith.addf %18, %7 : vector<96x128xf32>
    %cst_15 = arith.constant dense<0.000000e+00> : vector<96x128xf32>
    %20 = tpu.matmul %4, %14, %cst_15 {dimension_numbers = #tpu.dot_dimension_numbers<[1], [0], [0], [1], [0, 0, 1, 1], [], []>} : vector<96x32xf32>, vector<32x128xf32>, vector<96x128xf32> -> vector<96x128xf32>
    %21 = vector.extract_strided_slice %19 {offsets = [0, 0], sizes = [32, 128], strides = [1, 1]} : vector<96x128xf32> to vector<32x128xf32>
    %22 = vector.extract_strided_slice %20 {offsets = [0, 0], sizes = [32, 128], strides = [1, 1]} : vector<96x128xf32> to vector<32x128xf32>
    %23 = arith.addf %21, %22 : vector<32x128xf32>
    %24 = arith.negf %23 : vector<32x128xf32>
    %25 = math.exp %24 : vector<32x128xf32>
    %cst_16 = arith.constant 1.000000e+00 : f32
    %26 = vector.broadcast %cst_16 : f32 to vector<32x128xf32>
    %27 = arith.addf %26, %25 : vector<32x128xf32>
    %28 = arith.divf %26, %27 : vector<32x128xf32>
    %29 = vector.extract_strided_slice %19 {offsets = [32, 0], sizes = [32, 128], strides = [1, 1]} : vector<96x128xf32> to vector<32x128xf32>
    %30 = vector.extract_strided_slice %20 {offsets = [32, 0], sizes = [32, 128], strides = [1, 1]} : vector<96x128xf32> to vector<32x128xf32>
    %31 = arith.addf %29, %30 : vector<32x128xf32>
    %32 = arith.negf %31 : vector<32x128xf32>
    %33 = math.exp %32 : vector<32x128xf32>
    %cst_17 = arith.constant 1.000000e+00 : f32
    %34 = vector.broadcast %cst_17 : f32 to vector<32x128xf32>
    %35 = arith.addf %34, %33 : vector<32x128xf32>
    %36 = arith.divf %34, %35 : vector<32x128xf32>
    %37 = vector.extract_strided_slice %19 {offsets = [64, 0], sizes = [32, 128], strides = [1, 1]} : vector<96x128xf32> to vector<32x128xf32>
    %38 = vector.extract_strided_slice %20 {offsets = [64, 0], sizes = [32, 128], strides = [1, 1]} : vector<96x128xf32> to vector<32x128xf32>
    %39 = arith.addf %38, %10 : vector<32x128xf32>
    %40 = arith.mulf %28, %39 : vector<32x128xf32>
    %41 = arith.addf %37, %40 : vector<32x128xf32>
    %42 = math.tanh %41 : vector<32x128xf32>
    %43 = arith.subf %14, %42 : vector<32x128xf32>
    %44 = arith.mulf %36, %43 : vector<32x128xf32>
    %45 = arith.addf %42, %44 : vector<32x128xf32>
    %46 = arith.mulf %45, %13 : vector<32x128xf32>
    %cst_18 = arith.constant dense<0.000000e+00> : vector<128xf32>
    %47 = vector.multi_reduction <add>, %46, %cst_18 [0] : vector<32x128xf32> to vector<128xf32>
    %48 = vector.shape_cast %47 : vector<128xf32> to vector<1x128xf32>
    %49 = arith.index_cast %c0_i32_12 : i32 to index
    %c0_19 = arith.constant 0 : index
    %50 = vector.load %arg8[%49, %c0_19] : memref<8x128xf32, #tpu.memory_space<vmem>>, vector<1x128xf32>
    tpu.vector_store %arg8[%49, %c0_19], %48 {strides = array<i32>} : memref<8x128xf32, #tpu.memory_space<vmem>>, vector<1x128xf32>,
    %c1_i32 = arith.constant 1 : i32
    %51 = arith.index_cast %c1_i32 : i32 to index
    %c0_20 = arith.constant 0 : index
    %c0_21 = arith.constant 0 : index
    %52 = vector.load %arg2[%51, %c0_20, %c0_21] : memref<8x4x128xf32, #tpu.memory_space<vmem>>, vector<1x4x128xf32>
    %53 = vector.shape_cast %52 : vector<1x4x128xf32> to vector<4x128xf32>
    %cst_22 = arith.constant dense<0.000000e+00> : vector<96x128xf32>
    %54 = tpu.matmul %3, %53, %cst_22 {dimension_numbers = #tpu.dot_dimension_numbers<[1], [0], [0], [1], [0, 0, 1, 1], [], []>} : vector<96x4xf32>, vector<4x128xf32>, vector<96x128xf32> -> vector<96x128xf32>
    %55 = arith.addf %54, %7 : vector<96x128xf32>
    %cst_23 = arith.constant dense<0.000000e+00> : vector<96x128xf32>
    %56 = tpu.matmul %4, %45, %cst_23 {dimension_numbers = #tpu.dot_dimension_numbers<[1], [0], [0], [1], [0, 0, 1, 1], [], []>} : vector<96x32xf32>, vector<32x128xf32>, vector<96x128xf32> -> vector<96x128xf32>
    %57 = vector.extract_strided_slice %55 {offsets = [0, 0], sizes = [32, 128], strides = [1, 1]} : vector<96x128xf32> to vector<32x128xf32>
    %58 = vector.extract_strided_slice %56 {offsets = [0, 0], sizes = [32, 128], strides = [1, 1]} : vector<96x128xf32> to vector<32x128xf32>
    %59 = arith.addf %57, %58 : vector<32x128xf32>
    %60 = arith.negf %59 : vector<32x128xf32>
    %61 = math.exp %60 : vector<32x128xf32>
    %cst_24 = arith.constant 1.000000e+00 : f32
    %62 = vector.broadcast %cst_24 : f32 to vector<32x128xf32>
    %63 = arith.addf %62, %61 : vector<32x128xf32>
    %64 = arith.divf %62, %63 : vector<32x128xf32>
    %65 = vector.extract_strided_slice %55 {offsets = [32, 0], sizes = [32, 128], strides = [1, 1]} : vector<96x128xf32> to vector<32x128xf32>
    %66 = vector.extract_strided_slice %56 {offsets = [32, 0], sizes = [32, 128], strides = [1, 1]} : vector<96x128xf32> to vector<32x128xf32>
    %67 = arith.addf %65, %66 : vector<32x128xf32>
    %68 = arith.negf %67 : vector<32x128xf32>
    %69 = math.exp %68 : vector<32x128xf32>
    %cst_25 = arith.constant 1.000000e+00 : f32
    %70 = vector.broadcast %cst_25 : f32 to vector<32x128xf32>
    %71 = arith.addf %70, %69 : vector<32x128xf32>
    %72 = arith.divf %70, %71 : vector<32x128xf32>
    %73 = vector.extract_strided_slice %55 {offsets = [64, 0], sizes = [32, 128], strides = [1, 1]} : vector<96x128xf32> to vector<32x128xf32>
    %74 = vector.extract_strided_slice %56 {offsets = [64, 0], sizes = [32, 128], strides = [1, 1]} : vector<96x128xf32> to vector<32x128xf32>
    %75 = arith.addf %74, %10 : vector<32x128xf32>
    %76 = arith.mulf %64, %75 : vector<32x128xf32>
    %77 = arith.addf %73, %76 : vector<32x128xf32>
    %78 = math.tanh %77 : vector<32x128xf32>
    %79 = arith.subf %45, %78 : vector<32x128xf32>
    %80 = arith.mulf %72, %79 : vector<32x128xf32>
    %81 = arith.addf %78, %80 : vector<32x128xf32>
    %82 = arith.mulf %81, %13 : vector<32x128xf32>
    %cst_26 = arith.constant dense<0.000000e+00> : vector<128xf32>
    %83 = vector.multi_reduction <add>, %82, %cst_26 [0] : vector<32x128xf32> to vector<128xf32>
    %84 = vector.shape_cast %83 : vector<128xf32> to vector<1x128xf32>
    %85 = arith.index_cast %c1_i32 : i32 to index
    %c0_27 = arith.constant 0 : index
    %86 = vector.load %arg8[%85, %c0_27] : memref<8x128xf32, #tpu.memory_space<vmem>>, vector<1x128xf32>
    tpu.vector_store %arg8[%85, %c0_27], %84 {strides = array<i32>} : memref<8x128xf32, #tpu.memory_space<vmem>>, vector<1x128xf32>,
    %c2_i32 = arith.constant 2 : i32
    %87 = arith.index_cast %c2_i32 : i32 to index
    %c0_28 = arith.constant 0 : index
    %c0_29 = arith.constant 0 : index
    %88 = vector.load %arg2[%87, %c0_28, %c0_29] : memref<8x4x128xf32, #tpu.memory_space<vmem>>, vector<1x4x128xf32>
    %89 = vector.shape_cast %88 : vector<1x4x128xf32> to vector<4x128xf32>
    %cst_30 = arith.constant dense<0.000000e+00> : vector<96x128xf32>
    %90 = tpu.matmul %3, %89, %cst_30 {dimension_numbers = #tpu.dot_dimension_numbers<[1], [0], [0], [1], [0, 0, 1, 1], [], []>} : vector<96x4xf32>, vector<4x128xf32>, vector<96x128xf32> -> vector<96x128xf32>
    %91 = arith.addf %90, %7 : vector<96x128xf32>
    %cst_31 = arith.constant dense<0.000000e+00> : vector<96x128xf32>
    %92 = tpu.matmul %4, %81, %cst_31 {dimension_numbers = #tpu.dot_dimension_numbers<[1], [0], [0], [1], [0, 0, 1, 1], [], []>} : vector<96x32xf32>, vector<32x128xf32>, vector<96x128xf32> -> vector<96x128xf32>
    %93 = vector.extract_strided_slice %91 {offsets = [0, 0], sizes = [32, 128], strides = [1, 1]} : vector<96x128xf32> to vector<32x128xf32>
    %94 = vector.extract_strided_slice %92 {offsets = [0, 0], sizes = [32, 128], strides = [1, 1]} : vector<96x128xf32> to vector<32x128xf32>
    %95 = arith.addf %93, %94 : vector<32x128xf32>
    %96 = arith.negf %95 : vector<32x128xf32>
    %97 = math.exp %96 : vector<32x128xf32>
    %cst_32 = arith.constant 1.000000e+00 : f32
    %98 = vector.broadcast %cst_32 : f32 to vector<32x128xf32>
    %99 = arith.addf %98, %97 : vector<32x128xf32>
    %100 = arith.divf %98, %99 : vector<32x128xf32>
    %101 = vector.extract_strided_slice %91 {offsets = [32, 0], sizes = [32, 128], strides = [1, 1]} : vector<96x128xf32> to vector<32x128xf32>
    %102 = vector.extract_strided_slice %92 {offsets = [32, 0], sizes = [32, 128], strides = [1, 1]} : vector<96x128xf32> to vector<32x128xf32>
    %103 = arith.addf %101, %102 : vector<32x128xf32>
    %104 = arith.negf %103 : vector<32x128xf32>
    %105 = math.exp %104 : vector<32x128xf32>
    %cst_33 = arith.constant 1.000000e+00 : f32
    %106 = vector.broadcast %cst_33 : f32 to vector<32x128xf32>
    %107 = arith.addf %106, %105 : vector<32x128xf32>
    %108 = arith.divf %106, %107 : vector<32x128xf32>
    %109 = vector.extract_strided_slice %91 {offsets = [64, 0], sizes = [32, 128], strides = [1, 1]} : vector<96x128xf32> to vector<32x128xf32>
    %110 = vector.extract_strided_slice %92 {offsets = [64, 0], sizes = [32, 128], strides = [1, 1]} : vector<96x128xf32> to vector<32x128xf32>
    %111 = arith.addf %110, %10 : vector<32x128xf32>
    %112 = arith.mulf %100, %111 : vector<32x128xf32>
    %113 = arith.addf %109, %112 : vector<32x128xf32>
    %114 = math.tanh %113 : vector<32x128xf32>
    %115 = arith.subf %81, %114 : vector<32x128xf32>
    %116 = arith.mulf %108, %115 : vector<32x128xf32>
    %117 = arith.addf %114, %116 : vector<32x128xf32>
    %118 = arith.mulf %117, %13 : vector<32x128xf32>
    %cst_34 = arith.constant dense<0.000000e+00> : vector<128xf32>
    %119 = vector.multi_reduction <add>, %118, %cst_34 [0] : vector<32x128xf32> to vector<128xf32>
    %120 = vector.shape_cast %119 : vector<128xf32> to vector<1x128xf32>
    %121 = arith.index_cast %c2_i32 : i32 to index
    %c0_35 = arith.constant 0 : index
    %122 = vector.load %arg8[%121, %c0_35] : memref<8x128xf32, #tpu.memory_space<vmem>>, vector<1x128xf32>
    tpu.vector_store %arg8[%121, %c0_35], %120 {strides = array<i32>} : memref<8x128xf32, #tpu.memory_space<vmem>>, vector<1x128xf32>,
    %c3_i32 = arith.constant 3 : i32
    %123 = arith.index_cast %c3_i32 : i32 to index
    %c0_36 = arith.constant 0 : index
    %c0_37 = arith.constant 0 : index
    %124 = vector.load %arg2[%123, %c0_36, %c0_37] : memref<8x4x128xf32, #tpu.memory_space<vmem>>, vector<1x4x128xf32>
    %125 = vector.shape_cast %124 : vector<1x4x128xf32> to vector<4x128xf32>
    %cst_38 = arith.constant dense<0.000000e+00> : vector<96x128xf32>
    %126 = tpu.matmul %3, %125, %cst_38 {dimension_numbers = #tpu.dot_dimension_numbers<[1], [0], [0], [1], [0, 0, 1, 1], [], []>} : vector<96x4xf32>, vector<4x128xf32>, vector<96x128xf32> -> vector<96x128xf32>
    %127 = arith.addf %126, %7 : vector<96x128xf32>
    %cst_39 = arith.constant dense<0.000000e+00> : vector<96x128xf32>
    %128 = tpu.matmul %4, %117, %cst_39 {dimension_numbers = #tpu.dot_dimension_numbers<[1], [0], [0], [1], [0, 0, 1, 1], [], []>} : vector<96x32xf32>, vector<32x128xf32>, vector<96x128xf32> -> vector<96x128xf32>
    %129 = vector.extract_strided_slice %127 {offsets = [0, 0], sizes = [32, 128], strides = [1, 1]} : vector<96x128xf32> to vector<32x128xf32>
    %130 = vector.extract_strided_slice %128 {offsets = [0, 0], sizes = [32, 128], strides = [1, 1]} : vector<96x128xf32> to vector<32x128xf32>
    %131 = arith.addf %129, %130 : vector<32x128xf32>
    %132 = arith.negf %131 : vector<32x128xf32>
    %133 = math.exp %132 : vector<32x128xf32>
    %cst_40 = arith.constant 1.000000e+00 : f32
    %134 = vector.broadcast %cst_40 : f32 to vector<32x128xf32>
    %135 = arith.addf %134, %133 : vector<32x128xf32>
    %136 = arith.divf %134, %135 : vector<32x128xf32>
    %137 = vector.extract_strided_slice %127 {offsets = [32, 0], sizes = [32, 128], strides = [1, 1]} : vector<96x128xf32> to vector<32x128xf32>
    %138 = vector.extract_strided_slice %128 {offsets = [32, 0], sizes = [32, 128], strides = [1, 1]} : vector<96x128xf32> to vector<32x128xf32>
    %139 = arith.addf %137, %138 : vector<32x128xf32>
    %140 = arith.negf %139 : vector<32x128xf32>
    %141 = math.exp %140 : vector<32x128xf32>
    %cst_41 = arith.constant 1.000000e+00 : f32
    %142 = vector.broadcast %cst_41 : f32 to vector<32x128xf32>
    %143 = arith.addf %142, %141 : vector<32x128xf32>
    %144 = arith.divf %142, %143 : vector<32x128xf32>
    %145 = vector.extract_strided_slice %127 {offsets = [64, 0], sizes = [32, 128], strides = [1, 1]} : vector<96x128xf32> to vector<32x128xf32>
    %146 = vector.extract_strided_slice %128 {offsets = [64, 0], sizes = [32, 128], strides = [1, 1]} : vector<96x128xf32> to vector<32x128xf32>
    %147 = arith.addf %146, %10 : vector<32x128xf32>
    %148 = arith.mulf %136, %147 : vector<32x128xf32>
    %149 = arith.addf %145, %148 : vector<32x128xf32>
    %150 = math.tanh %149 : vector<32x128xf32>
    %151 = arith.subf %117, %150 : vector<32x128xf32>
    %152 = arith.mulf %144, %151 : vector<32x128xf32>
    %153 = arith.addf %150, %152 : vector<32x128xf32>
    %154 = arith.mulf %153, %13 : vector<32x128xf32>
    %cst_42 = arith.constant dense<0.000000e+00> : vector<128xf32>
    %155 = vector.multi_reduction <add>, %154, %cst_42 [0] : vector<32x128xf32> to vector<128xf32>
    %156 = vector.shape_cast %155 : vector<128xf32> to vector<1x128xf32>
    %157 = arith.index_cast %c3_i32 : i32 to index
    %c0_43 = arith.constant 0 : index
    %158 = vector.load %arg8[%157, %c0_43] : memref<8x128xf32, #tpu.memory_space<vmem>>, vector<1x128xf32>
    tpu.vector_store %arg8[%157, %c0_43], %156 {strides = array<i32>} : memref<8x128xf32, #tpu.memory_space<vmem>>, vector<1x128xf32>,
    %c4_i32 = arith.constant 4 : i32
    %159 = arith.index_cast %c4_i32 : i32 to index
    %c0_44 = arith.constant 0 : index
    %c0_45 = arith.constant 0 : index
    %160 = vector.load %arg2[%159, %c0_44, %c0_45] : memref<8x4x128xf32, #tpu.memory_space<vmem>>, vector<1x4x128xf32>
    %161 = vector.shape_cast %160 : vector<1x4x128xf32> to vector<4x128xf32>
    %cst_46 = arith.constant dense<0.000000e+00> : vector<96x128xf32>
    %162 = tpu.matmul %3, %161, %cst_46 {dimension_numbers = #tpu.dot_dimension_numbers<[1], [0], [0], [1], [0, 0, 1, 1], [], []>} : vector<96x4xf32>, vector<4x128xf32>, vector<96x128xf32> -> vector<96x128xf32>
    %163 = arith.addf %162, %7 : vector<96x128xf32>
    %cst_47 = arith.constant dense<0.000000e+00> : vector<96x128xf32>
    %164 = tpu.matmul %4, %153, %cst_47 {dimension_numbers = #tpu.dot_dimension_numbers<[1], [0], [0], [1], [0, 0, 1, 1], [], []>} : vector<96x32xf32>, vector<32x128xf32>, vector<96x128xf32> -> vector<96x128xf32>
    %165 = vector.extract_strided_slice %163 {offsets = [0, 0], sizes = [32, 128], strides = [1, 1]} : vector<96x128xf32> to vector<32x128xf32>
    %166 = vector.extract_strided_slice %164 {offsets = [0, 0], sizes = [32, 128], strides = [1, 1]} : vector<96x128xf32> to vector<32x128xf32>
    %167 = arith.addf %165, %166 : vector<32x128xf32>
    %168 = arith.negf %167 : vector<32x128xf32>
    %169 = math.exp %168 : vector<32x128xf32>
    %cst_48 = arith.constant 1.000000e+00 : f32
    %170 = vector.broadcast %cst_48 : f32 to vector<32x128xf32>
    %171 = arith.addf %170, %169 : vector<32x128xf32>
    %172 = arith.divf %170, %171 : vector<32x128xf32>
    %173 = vector.extract_strided_slice %163 {offsets = [32, 0], sizes = [32, 128], strides = [1, 1]} : vector<96x128xf32> to vector<32x128xf32>
    %174 = vector.extract_strided_slice %164 {offsets = [32, 0], sizes = [32, 128], strides = [1, 1]} : vector<96x128xf32> to vector<32x128xf32>
    %175 = arith.addf %173, %174 : vector<32x128xf32>
    %176 = arith.negf %175 : vector<32x128xf32>
    %177 = math.exp %176 : vector<32x128xf32>
    %cst_49 = arith.constant 1.000000e+00 : f32
    %178 = vector.broadcast %cst_49 : f32 to vector<32x128xf32>
    %179 = arith.addf %178, %177 : vector<32x128xf32>
    %180 = arith.divf %178, %179 : vector<32x128xf32>
    %181 = vector.extract_strided_slice %163 {offsets = [64, 0], sizes = [32, 128], strides = [1, 1]} : vector<96x128xf32> to vector<32x128xf32>
    %182 = vector.extract_strided_slice %164 {offsets = [64, 0], sizes = [32, 128], strides = [1, 1]} : vector<96x128xf32> to vector<32x128xf32>
    %183 = arith.addf %182, %10 : vector<32x128xf32>
    %184 = arith.mulf %172, %183 : vector<32x128xf32>
    %185 = arith.addf %181, %184 : vector<32x128xf32>
    %186 = math.tanh %185 : vector<32x128xf32>
    %187 = arith.subf %153, %186 : vector<32x128xf32>
    %188 = arith.mulf %180, %187 : vector<32x128xf32>
    %189 = arith.addf %186, %188 : vector<32x128xf32>
    %190 = arith.mulf %189, %13 : vector<32x128xf32>
    %cst_50 = arith.constant dense<0.000000e+00> : vector<128xf32>
    %191 = vector.multi_reduction <add>, %190, %cst_50 [0] : vector<32x128xf32> to vector<128xf32>
    %192 = vector.shape_cast %191 : vector<128xf32> to vector<1x128xf32>
    %193 = arith.index_cast %c4_i32 : i32 to index
    %c0_51 = arith.constant 0 : index
    %194 = vector.load %arg8[%193, %c0_51] : memref<8x128xf32, #tpu.memory_space<vmem>>, vector<1x128xf32>
    tpu.vector_store %arg8[%193, %c0_51], %192 {strides = array<i32>} : memref<8x128xf32, #tpu.memory_space<vmem>>, vector<1x128xf32>,
    %c5_i32 = arith.constant 5 : i32
    %195 = arith.index_cast %c5_i32 : i32 to index
    %c0_52 = arith.constant 0 : index
    %c0_53 = arith.constant 0 : index
    %196 = vector.load %arg2[%195, %c0_52, %c0_53] : memref<8x4x128xf32, #tpu.memory_space<vmem>>, vector<1x4x128xf32>
    %197 = vector.shape_cast %196 : vector<1x4x128xf32> to vector<4x128xf32>
    %cst_54 = arith.constant dense<0.000000e+00> : vector<96x128xf32>
    %198 = tpu.matmul %3, %197, %cst_54 {dimension_numbers = #tpu.dot_dimension_numbers<[1], [0], [0], [1], [0, 0, 1, 1], [], []>} : vector<96x4xf32>, vector<4x128xf32>, vector<96x128xf32> -> vector<96x128xf32>
    %199 = arith.addf %198, %7 : vector<96x128xf32>
    %cst_55 = arith.constant dense<0.000000e+00> : vector<96x128xf32>
    %200 = tpu.matmul %4, %189, %cst_55 {dimension_numbers = #tpu.dot_dimension_numbers<[1], [0], [0], [1], [0, 0, 1, 1], [], []>} : vector<96x32xf32>, vector<32x128xf32>, vector<96x128xf32> -> vector<96x128xf32>
    %201 = vector.extract_strided_slice %199 {offsets = [0, 0], sizes = [32, 128], strides = [1, 1]} : vector<96x128xf32> to vector<32x128xf32>
    %202 = vector.extract_strided_slice %200 {offsets = [0, 0], sizes = [32, 128], strides = [1, 1]} : vector<96x128xf32> to vector<32x128xf32>
    %203 = arith.addf %201, %202 : vector<32x128xf32>
    %204 = arith.negf %203 : vector<32x128xf32>
    %205 = math.exp %204 : vector<32x128xf32>
    %cst_56 = arith.constant 1.000000e+00 : f32
    %206 = vector.broadcast %cst_56 : f32 to vector<32x128xf32>
    %207 = arith.addf %206, %205 : vector<32x128xf32>
    %208 = arith.divf %206, %207 : vector<32x128xf32>
    %209 = vector.extract_strided_slice %199 {offsets = [32, 0], sizes = [32, 128], strides = [1, 1]} : vector<96x128xf32> to vector<32x128xf32>
    %210 = vector.extract_strided_slice %200 {offsets = [32, 0], sizes = [32, 128], strides = [1, 1]} : vector<96x128xf32> to vector<32x128xf32>
    %211 = arith.addf %209, %210 : vector<32x128xf32>
    %212 = arith.negf %211 : vector<32x128xf32>
    %213 = math.exp %212 : vector<32x128xf32>
    %cst_57 = arith.constant 1.000000e+00 : f32
    %214 = vector.broadcast %cst_57 : f32 to vector<32x128xf32>
    %215 = arith.addf %214, %213 : vector<32x128xf32>
    %216 = arith.divf %214, %215 : vector<32x128xf32>
    %217 = vector.extract_strided_slice %199 {offsets = [64, 0], sizes = [32, 128], strides = [1, 1]} : vector<96x128xf32> to vector<32x128xf32>
    %218 = vector.extract_strided_slice %200 {offsets = [64, 0], sizes = [32, 128], strides = [1, 1]} : vector<96x128xf32> to vector<32x128xf32>
    %219 = arith.addf %218, %10 : vector<32x128xf32>
    %220 = arith.mulf %208, %219 : vector<32x128xf32>
    %221 = arith.addf %217, %220 : vector<32x128xf32>
    %222 = math.tanh %221 : vector<32x128xf32>
    %223 = arith.subf %189, %222 : vector<32x128xf32>
    %224 = arith.mulf %216, %223 : vector<32x128xf32>
    %225 = arith.addf %222, %224 : vector<32x128xf32>
    %226 = arith.mulf %225, %13 : vector<32x128xf32>
    %cst_58 = arith.constant dense<0.000000e+00> : vector<128xf32>
    %227 = vector.multi_reduction <add>, %226, %cst_58 [0] : vector<32x128xf32> to vector<128xf32>
    %228 = vector.shape_cast %227 : vector<128xf32> to vector<1x128xf32>
    %229 = arith.index_cast %c5_i32 : i32 to index
    %c0_59 = arith.constant 0 : index
    %230 = vector.load %arg8[%229, %c0_59] : memref<8x128xf32, #tpu.memory_space<vmem>>, vector<1x128xf32>
    tpu.vector_store %arg8[%229, %c0_59], %228 {strides = array<i32>} : memref<8x128xf32, #tpu.memory_space<vmem>>, vector<1x128xf32>,
    %c6_i32 = arith.constant 6 : i32
    %231 = arith.index_cast %c6_i32 : i32 to index
    %c0_60 = arith.constant 0 : index
    %c0_61 = arith.constant 0 : index
    %232 = vector.load %arg2[%231, %c0_60, %c0_61] : memref<8x4x128xf32, #tpu.memory_space<vmem>>, vector<1x4x128xf32>
    %233 = vector.shape_cast %232 : vector<1x4x128xf32> to vector<4x128xf32>
    %cst_62 = arith.constant dense<0.000000e+00> : vector<96x128xf32>
    %234 = tpu.matmul %3, %233, %cst_62 {dimension_numbers = #tpu.dot_dimension_numbers<[1], [0], [0], [1], [0, 0, 1, 1], [], []>} : vector<96x4xf32>, vector<4x128xf32>, vector<96x128xf32> -> vector<96x128xf32>
    %235 = arith.addf %234, %7 : vector<96x128xf32>
    %cst_63 = arith.constant dense<0.000000e+00> : vector<96x128xf32>
    %236 = tpu.matmul %4, %225, %cst_63 {dimension_numbers = #tpu.dot_dimension_numbers<[1], [0], [0], [1], [0, 0, 1, 1], [], []>} : vector<96x32xf32>, vector<32x128xf32>, vector<96x128xf32> -> vector<96x128xf32>
    %237 = vector.extract_strided_slice %235 {offsets = [0, 0], sizes = [32, 128], strides = [1, 1]} : vector<96x128xf32> to vector<32x128xf32>
    %238 = vector.extract_strided_slice %236 {offsets = [0, 0], sizes = [32, 128], strides = [1, 1]} : vector<96x128xf32> to vector<32x128xf32>
    %239 = arith.addf %237, %238 : vector<32x128xf32>
    %240 = arith.negf %239 : vector<32x128xf32>
    %241 = math.exp %240 : vector<32x128xf32>
    %cst_64 = arith.constant 1.000000e+00 : f32
    %242 = vector.broadcast %cst_64 : f32 to vector<32x128xf32>
    %243 = arith.addf %242, %241 : vector<32x128xf32>
    %244 = arith.divf %242, %243 : vector<32x128xf32>
    %245 = vector.extract_strided_slice %235 {offsets = [32, 0], sizes = [32, 128], strides = [1, 1]} : vector<96x128xf32> to vector<32x128xf32>
    %246 = vector.extract_strided_slice %236 {offsets = [32, 0], sizes = [32, 128], strides = [1, 1]} : vector<96x128xf32> to vector<32x128xf32>
    %247 = arith.addf %245, %246 : vector<32x128xf32>
    %248 = arith.negf %247 : vector<32x128xf32>
    %249 = math.exp %248 : vector<32x128xf32>
    %cst_65 = arith.constant 1.000000e+00 : f32
    %250 = vector.broadcast %cst_65 : f32 to vector<32x128xf32>
    %251 = arith.addf %250, %249 : vector<32x128xf32>
    %252 = arith.divf %250, %251 : vector<32x128xf32>
    %253 = vector.extract_strided_slice %235 {offsets = [64, 0], sizes = [32, 128], strides = [1, 1]} : vector<96x128xf32> to vector<32x128xf32>
    %254 = vector.extract_strided_slice %236 {offsets = [64, 0], sizes = [32, 128], strides = [1, 1]} : vector<96x128xf32> to vector<32x128xf32>
    %255 = arith.addf %254, %10 : vector<32x128xf32>
    %256 = arith.mulf %244, %255 : vector<32x128xf32>
    %257 = arith.addf %253, %256 : vector<32x128xf32>
    %258 = math.tanh %257 : vector<32x128xf32>
    %259 = arith.subf %225, %258 : vector<32x128xf32>
    %260 = arith.mulf %252, %259 : vector<32x128xf32>
    %261 = arith.addf %258, %260 : vector<32x128xf32>
    %262 = arith.mulf %261, %13 : vector<32x128xf32>
    %cst_66 = arith.constant dense<0.000000e+00> : vector<128xf32>
    %263 = vector.multi_reduction <add>, %262, %cst_66 [0] : vector<32x128xf32> to vector<128xf32>
    %264 = vector.shape_cast %263 : vector<128xf32> to vector<1x128xf32>
    %265 = arith.index_cast %c6_i32 : i32 to index
    %c0_67 = arith.constant 0 : index
    %266 = vector.load %arg8[%265, %c0_67] : memref<8x128xf32, #tpu.memory_space<vmem>>, vector<1x128xf32>
    tpu.vector_store %arg8[%265, %c0_67], %264 {strides = array<i32>} : memref<8x128xf32, #tpu.memory_space<vmem>>, vector<1x128xf32>,
    %c7_i32 = arith.constant 7 : i32
    %267 = arith.index_cast %c7_i32 : i32 to index
    %c0_68 = arith.constant 0 : index
    %c0_69 = arith.constant 0 : index
    %268 = vector.load %arg2[%267, %c0_68, %c0_69] : memref<8x4x128xf32, #tpu.memory_space<vmem>>, vector<1x4x128xf32>
    %269 = vector.shape_cast %268 : vector<1x4x128xf32> to vector<4x128xf32>
    %cst_70 = arith.constant dense<0.000000e+00> : vector<96x128xf32>
    %270 = tpu.matmul %3, %269, %cst_70 {dimension_numbers = #tpu.dot_dimension_numbers<[1], [0], [0], [1], [0, 0, 1, 1], [], []>} : vector<96x4xf32>, vector<4x128xf32>, vector<96x128xf32> -> vector<96x128xf32>
    %271 = arith.addf %270, %7 : vector<96x128xf32>
    %cst_71 = arith.constant dense<0.000000e+00> : vector<96x128xf32>
    %272 = tpu.matmul %4, %261, %cst_71 {dimension_numbers = #tpu.dot_dimension_numbers<[1], [0], [0], [1], [0, 0, 1, 1], [], []>} : vector<96x32xf32>, vector<32x128xf32>, vector<96x128xf32> -> vector<96x128xf32>
    %273 = vector.extract_strided_slice %271 {offsets = [0, 0], sizes = [32, 128], strides = [1, 1]} : vector<96x128xf32> to vector<32x128xf32>
    %274 = vector.extract_strided_slice %272 {offsets = [0, 0], sizes = [32, 128], strides = [1, 1]} : vector<96x128xf32> to vector<32x128xf32>
    %275 = arith.addf %273, %274 : vector<32x128xf32>
    %276 = arith.negf %275 : vector<32x128xf32>
    %277 = math.exp %276 : vector<32x128xf32>
    %cst_72 = arith.constant 1.000000e+00 : f32
    %278 = vector.broadcast %cst_72 : f32 to vector<32x128xf32>
    %279 = arith.addf %278, %277 : vector<32x128xf32>
    %280 = arith.divf %278, %279 : vector<32x128xf32>
    %281 = vector.extract_strided_slice %271 {offsets = [32, 0], sizes = [32, 128], strides = [1, 1]} : vector<96x128xf32> to vector<32x128xf32>
    %282 = vector.extract_strided_slice %272 {offsets = [32, 0], sizes = [32, 128], strides = [1, 1]} : vector<96x128xf32> to vector<32x128xf32>
    %283 = arith.addf %281, %282 : vector<32x128xf32>
    %284 = arith.negf %283 : vector<32x128xf32>
    %285 = math.exp %284 : vector<32x128xf32>
    %cst_73 = arith.constant 1.000000e+00 : f32
    %286 = vector.broadcast %cst_73 : f32 to vector<32x128xf32>
    %287 = arith.addf %286, %285 : vector<32x128xf32>
    %288 = arith.divf %286, %287 : vector<32x128xf32>
    %289 = vector.extract_strided_slice %271 {offsets = [64, 0], sizes = [32, 128], strides = [1, 1]} : vector<96x128xf32> to vector<32x128xf32>
    %290 = vector.extract_strided_slice %272 {offsets = [64, 0], sizes = [32, 128], strides = [1, 1]} : vector<96x128xf32> to vector<32x128xf32>
    %291 = arith.addf %290, %10 : vector<32x128xf32>
    %292 = arith.mulf %280, %291 : vector<32x128xf32>
    %293 = arith.addf %289, %292 : vector<32x128xf32>
    %294 = math.tanh %293 : vector<32x128xf32>
    %295 = arith.subf %261, %294 : vector<32x128xf32>
    %296 = arith.mulf %288, %295 : vector<32x128xf32>
    %297 = arith.addf %294, %296 : vector<32x128xf32>
    %298 = arith.mulf %297, %13 : vector<32x128xf32>
    %cst_74 = arith.constant dense<0.000000e+00> : vector<128xf32>
    %299 = vector.multi_reduction <add>, %298, %cst_74 [0] : vector<32x128xf32> to vector<128xf32>
    %300 = vector.shape_cast %299 : vector<128xf32> to vector<1x128xf32>
    %301 = arith.index_cast %c7_i32 : i32 to index
    %c0_75 = arith.constant 0 : index
    %302 = vector.load %arg8[%301, %c0_75] : memref<8x128xf32, #tpu.memory_space<vmem>>, vector<1x128xf32>
    tpu.vector_store %arg8[%301, %c0_75], %300 {strides = array<i32>} : memref<8x128xf32, #tpu.memory_space<vmem>>, vector<1x128xf32>,
    %c8_i32 = arith.constant 8 : i32
    %c0_76 = arith.constant 0 : index
    %c0_77 = arith.constant 0 : index
    %303 = vector.load %arg9[%c0_76, %c0_77] : memref<32x128xf32, #tpu.memory_space<vmem>>, vector<32x128xf32>
    tpu.vector_store %arg9[%c0_76, %c0_77], %297 {strides = array<i32>} : memref<32x128xf32, #tpu.memory_space<vmem>>, vector<32x128xf32>,
    return
  }
  func.func @transform_0(%arg0: i32, %arg1: i32) -> (i32, i32, i32) {
    %c0_i32 = arith.constant 0 : i32
    %c0_i32_0 = arith.constant 0 : i32
    return %arg1, %c0_i32, %arg0 : i32, i32, i32
  }
  func.func @transform_1(%arg0: i32, %arg1: i32) -> (i32, i32) {
    %c0_i32 = arith.constant 0 : i32
    %c0_i32_0 = arith.constant 0 : i32
    %c0_i32_1 = arith.constant 0 : i32
    return %c0_i32, %c0_i32_0 : i32, i32
  }
  func.func @transform_2(%arg0: i32, %arg1: i32) -> (i32, i32) {
    %c0_i32 = arith.constant 0 : i32
    %c0_i32_0 = arith.constant 0 : i32
    %c0_i32_1 = arith.constant 0 : i32
    return %c0_i32, %c0_i32_0 : i32, i32
  }
  func.func @transform_3(%arg0: i32, %arg1: i32) -> (i32, i32) {
    %c0_i32 = arith.constant 0 : i32
    %c0_i32_0 = arith.constant 0 : i32
    %c0_i32_1 = arith.constant 0 : i32
    return %c0_i32, %c0_i32_0 : i32, i32
  }
  func.func @transform_4(%arg0: i32, %arg1: i32) -> (i32, i32) {
    %c0_i32 = arith.constant 0 : i32
    %c0_i32_0 = arith.constant 0 : i32
    %c0_i32_1 = arith.constant 0 : i32
    return %c0_i32, %c0_i32_0 : i32, i32
  }
  func.func @transform_5(%arg0: i32, %arg1: i32) -> (i32, i32) {
    %c0_i32 = arith.constant 0 : i32
    %c0_i32_0 = arith.constant 0 : i32
    %c0_i32_1 = arith.constant 0 : i32
    return %c0_i32, %c0_i32_0 : i32, i32
  }
  func.func @transform_6(%arg0: i32, %arg1: i32) -> (i32, i32) {
    %c0_i32 = arith.constant 0 : i32
    return %arg1, %arg0 : i32, i32
  }
}

</mosaic_0001>

<llo_original>
// kernel: posthoc_rnn_forward.1
$region0: #{posthoc_rnn_forward.1}
  #allocation0 [shape = 'u32[]', space=smem, size = 0x4, offset = 0x4, fixed_abs, tag = 'smem constant byte address 0x4 - core index']
  #allocation1 [shape = 'u32[72,128]{1,0:T(1,128)}', space=vmem, size = 0x9000, scoped, tag = 'internal scratch']
  #allocation2 [shape = 'f32[32,128]{1,0:T(8,128)}', space=vmem, size = 0x4000, scoped, tag = 'scratch operand']
  %s0 = inlined_call_operand.vmem [shape: f32[8,4,128], index: 0, kind: input, shape index: {}]
  %s1 = inlined_call_operand.vmem [shape: f32[96,4], index: 1, kind: input, shape index: {}]
  %s2 = inlined_call_operand.vmem [shape: f32[96,32], index: 2, kind: input, shape index: {}]
  %s3 = inlined_call_operand.vmem [shape: f32[96,1], index: 3, kind: input, shape index: {}]
  %s4 = inlined_call_operand.vmem [shape: f32[32,1], index: 4, kind: input, shape index: {}]
  %s5 = inlined_call_operand.vmem [shape: f32[32,1], index: 5, kind: input, shape index: {}]
  %s6 = inlined_call_operand.vmem [shape: f32[8,128], index: 6, kind: output, shape index: {}]
  %s7 = sld [smem:[#allocation0]]
  $region38: #{posthoc_rnn_forward.1} parent=0
    _
  %s9 = ssub.s32 1, %s7
  %s10 = scalar_select 0, %s9, %s7
  // Predicated region
  $region2: #{posthoc_rnn_forward.1} parent=0 // pred_check
    _
  $region3: #{posthoc_rnn_forward.1} parent=0 // pred_check_branch
    %12 = sbr.rel (0) target = $region5
  $region4: #{posthoc_rnn_forward.1} parent=0 // pred_region
    _
  $region5: #{posthoc_rnn_forward.1} parent=0 // pred_fallthru
    _
  // Predicated region
  $region6: #{posthoc_rnn_forward.1} parent=0 // pred_check
    _
  $region7: #{posthoc_rnn_forward.1} parent=0 // pred_check_branch
    %14 = sbr.rel (0) target = $region9
  $region8: #{posthoc_rnn_forward.1} parent=0 // pred_region
    _
  $region9: #{posthoc_rnn_forward.1} parent=0 // pred_fallthru
    _
  // Predicated region
  $region10: #{posthoc_rnn_forward.1} parent=0 // pred_check
    _
  $region11: #{posthoc_rnn_forward.1} parent=0 // pred_check_branch
    %16 = sbr.rel (0) target = $region13
  $region12: #{posthoc_rnn_forward.1} parent=0 // pred_region
    _
  $region13: #{posthoc_rnn_forward.1} parent=0 // pred_fallthru
    _
  // Predicated region
  $region14: #{posthoc_rnn_forward.1} parent=0 // pred_check
    _
  $region15: #{posthoc_rnn_forward.1} parent=0 // pred_check_branch
    %18 = sbr.rel (0) target = $region17
  $region16: #{posthoc_rnn_forward.1} parent=0 // pred_region
    _
  $region17: #{posthoc_rnn_forward.1} parent=0 // pred_fallthru
    _
  // Predicated region
  $region18: #{posthoc_rnn_forward.1} parent=0 // pred_check
    _
  $region19: #{posthoc_rnn_forward.1} parent=0 // pred_check_branch
    %20 = sbr.rel (0) target = $region21
  $region20: #{posthoc_rnn_forward.1} parent=0 // pred_region
    _
  $region21: #{posthoc_rnn_forward.1} parent=0 // pred_fallthru
    _
  // Predicated region
  $region22: #{posthoc_rnn_forward.1} parent=0 // pred_check
    _
  $region23: #{posthoc_rnn_forward.1} parent=0 // pred_check_branch
    %22 = sbr.rel (0) target = $region25
  $region24: #{posthoc_rnn_forward.1} parent=0 // pred_region
    _
  $region25: #{posthoc_rnn_forward.1} parent=0 // pred_fallthru
    _
  %p23 = scmp.eq.s32.totalorder 0, 0
  // Predicated region
  $region26: #{posthoc_rnn_forward.1} parent=0 // pred_check
    %p24 = pneg %p23
  $region27: #{posthoc_rnn_forward.1} parent=0 // pred_check_branch
    %26 = sbr.rel (%p24) target = $region29
  $region28: #{posthoc_rnn_forward.1} parent=0 // pred_region
    %27 = vst [vmem:[#allocation2] sm:$0xff] 0.0
    %28 = vst [vmem:[#allocation2 + $0x8] sm:$0xff] 0.0
    %29 = vst [vmem:[#allocation2 + $0x10] sm:$0xff] 0.0
    %30 = vst [vmem:[#allocation2 + $0x18] sm:$0xff] 0.0
  $region29: #{posthoc_rnn_forward.1} parent=0 // pred_fallthru
    _
  %v31 = vld [vmem:[%s1] sm:$0xff]
  %v32 = vld [vmem:[%s1 + $0x8] sm:$0xff]
  %v33 = vld [vmem:[%s1 + $0x10] sm:$0xff]
  %v34 = vld [vmem:[%s1 + $0x18] sm:$0xff]
  %v35 = vld [vmem:[%s1 + $0x20] sm:$0xff]
  %v36 = vld [vmem:[%s1 + $0x28] sm:$0xff]
  %v37 = vld [vmem:[%s1 + $0x30] sm:$0xff]
  %v38 = vld [vmem:[%s1 + $0x38] sm:$0xff]
  %v39 = vld [vmem:[%s1 + $0x40] sm:$0xff]
  %v40 = vld [vmem:[%s1 + $0x48] sm:$0xff]
  %v41 = vld [vmem:[%s1 + $0x50] sm:$0xff]
  %v42 = vld [vmem:[%s1 + $0x58] sm:$0xff]
  %v43 = vld [vmem:[%s2] sm:$0xff]
  %v44 = vld [vmem:[%s2 + $0x8] sm:$0xff]
  %v45 = vld [vmem:[%s2 + $0x10] sm:$0xff]
  %v46 = vld [vmem:[%s2 + $0x18] sm:$0xff]
  %v47 = vld [vmem:[%s2 + $0x20] sm:$0xff]
  %v48 = vld [vmem:[%s2 + $0x28] sm:$0xff]
  %v49 = vld [vmem:[%s2 + $0x30] sm:$0xff]
  %v50 = vld [vmem:[%s2 + $0x38] sm:$0xff]
  %v51 = vld [vmem:[%s2 + $0x40] sm:$0xff]
  %v52 = vld [vmem:[%s2 + $0x48] sm:$0xff]
  %v53 = vld [vmem:[%s2 + $0x50] sm:$0xff]
  %v54 = vld [vmem:[%s2 + $0x58] sm:$0xff]
  %v55 = vld [vmem:[%s3] sm:$0xff]
  %v56 = vld [vmem:[%s3 + $0x8] sm:$0xff]
  %v57 = vld [vmem:[%s3 + $0x10] sm:$0xff]
  %v58 = vld [vmem:[%s3 + $0x18] sm:$0xff]
  %v59 = vld [vmem:[%s3 + $0x20] sm:$0xff]
  %v60 = vld [vmem:[%s3 + $0x28] sm:$0xff]
  %v61 = vld [vmem:[%s3 + $0x30] sm:$0xff]
  %v62 = vld [vmem:[%s3 + $0x38] sm:$0xff]
  %v63 = vld [vmem:[%s3 + $0x40] sm:$0xff]
  %v64 = vld [vmem:[%s3 + $0x48] sm:$0xff]
  %v65 = vld [vmem:[%s3 + $0x50] sm:$0xff]
  %v66 = vld [vmem:[%s3 + $0x58] sm:$0xff]
  %68 = vset.pattern.permute.xlu0 0
  %69 = vperm.xlu0 %68, %v55
  %v70 = vpop.permute.xlu0 %69
  %73 = vset.pattern.permute.xlu0 0
  %74 = vperm.xlu0 %73, %v56
  %v75 = vpop.permute.xlu0 %74
  %78 = vset.pattern.permute.xlu0 0
  %79 = vperm.xlu0 %78, %v57
  %v80 = vpop.permute.xlu0 %79
  %83 = vset.pattern.permute.xlu0 0
  %84 = vperm.xlu0 %83, %v58
  %v85 = vpop.permute.xlu0 %84
  %88 = vset.pattern.permute.xlu0 0
  %89 = vperm.xlu0 %88, %v59
  %v90 = vpop.permute.xlu0 %89
  %93 = vset.pattern.permute.xlu0 0
  %94 = vperm.xlu0 %93, %v60
  %v95 = vpop.permute.xlu0 %94
  %98 = vset.pattern.permute.xlu0 0
  %99 = vperm.xlu0 %98, %v61
  %v100 = vpop.permute.xlu0 %99
  %103 = vset.pattern.permute.xlu0 0
  %104 = vperm.xlu0 %103, %v62
  %v105 = vpop.permute.xlu0 %104
  %108 = vset.pattern.permute.xlu0 0
  %109 = vperm.xlu0 %108, %v63
  %v110 = vpop.permute.xlu0 %109
  %113 = vset.pattern.permute.xlu0 0
  %114 = vperm.xlu0 %113, %v64
  %v115 = vpop.permute.xlu0 %114
  %118 = vset.pattern.permute.xlu0 0
  %119 = vperm.xlu0 %118, %v65
  %v120 = vpop.permute.xlu0 %119
  %123 = vset.pattern.permute.xlu0 0
  %124 = vperm.xlu0 %123, %v66
  %v125 = vpop.permute.xlu0 %124
  %v127 = vld [vmem:[%s4] sm:$0xff]
  %v128 = vld [vmem:[%s4 + $0x8] sm:$0xff]
  %v129 = vld [vmem:[%s4 + $0x10] sm:$0xff]
  %v130 = vld [vmem:[%s4 + $0x18] sm:$0xff]
  %132 = vset.pattern.permute.xlu0 0
  %133 = vperm.xlu0 %132, %v127
  %v134 = vpop.permute.xlu0 %133
  %137 = vset.pattern.permute.xlu0 0
  %138 = vperm.xlu0 %137, %v128
  %v139 = vpop.permute.xlu0 %138
  %142 = vset.pattern.permute.xlu0 0
  %143 = vperm.xlu0 %142, %v129
  %v144 = vpop.permute.xlu0 %143
  %147 = vset.pattern.permute.xlu0 0
  %148 = vperm.xlu0 %147, %v130
  %v149 = vpop.permute.xlu0 %148
  %v151 = vld [vmem:[%s5] sm:$0xff]
  %v152 = vld [vmem:[%s5 + $0x8] sm:$0xff]
  %v153 = vld [vmem:[%s5 + $0x10] sm:$0xff]
  %v154 = vld [vmem:[%s5 + $0x18] sm:$0xff]
  %156 = vset.pattern.permute.xlu0 0
  %157 = vperm.xlu0 %156, %v151
  %v158 = vpop.permute.xlu0 %157
  %161 = vset.pattern.permute.xlu0 0
  %162 = vperm.xlu0 %161, %v152
  %v163 = vpop.permute.xlu0 %162
  %166 = vset.pattern.permute.xlu0 0
  %167 = vperm.xlu0 %166, %v153
  %v168 = vpop.permute.xlu0 %167
  %171 = vset.pattern.permute.xlu0 0
  %172 = vperm.xlu0 %171, %v154
  %v173 = vpop.permute.xlu0 %172
  %v175 = vld [vmem:[#allocation2] sm:$0xff]
  %v176 = vld [vmem:[#allocation2 + $0x8] sm:$0xff]
  %v177 = vld [vmem:[#allocation2 + $0x10] sm:$0xff]
  %v178 = vld [vmem:[#allocation2 + $0x18] sm:$0xff]
  %v179 = vld [vmem:[%s0] sm:$0xf]
  %vm180 = vcmask 31744
  %v182 = vsel %vm180, %v31, 0
  %v185 = vsel %vm180, %v32, 0
  %v188 = vsel %vm180, %v33, 0
  %v191 = vsel %vm180, %v34, 0
  %v194 = vsel %vm180, %v35, 0
  %v197 = vsel %vm180, %v36, 0
  %v200 = vsel %vm180, %v37, 0
  %v203 = vsel %vm180, %v38, 0
  %v206 = vsel %vm180, %v39, 0
  %v209 = vsel %vm180, %v40, 0
  %v212 = vsel %vm180, %v41, 0
  %v215 = vsel %vm180, %v42, 0
  %vm217 = vcmask 1043456
  %v219 = vsel %vm217, %v179, 0
  %221 = vmatpush.msra.mxu0 0.0
  %222 = vmatpush.msra.mxu0 0.0
  %223 = vmatpush.msra.mxu0 0.0
  %224 = vmatpush.msra.mxu0 0.0
  %225 = vmatpush.msra.mxu0 0.0
  %226 = vmatpush.msra.mxu0 0.0
  %227 = vmatpush.msra.mxu0 0.0
  %228 = vmatpush.msra.mxu0 0.0
  %229 = vmatpush.msra.mxu0 0.0
  %230 = vmatpush.msra.mxu0 0.0
  %231 = vmatpush.msra.mxu0 0.0
  %232 = vmatpush.msra.mxu0 0.0
  %233 = vmatpush.msra.mxu0 0.0
  %234 = vmatpush.msra.mxu0 0.0
  %235 = vmatpush.msra.mxu0 0.0
  %236 = vmatpush.msra.mxu0 %v219
  %237 = vmatmul.f32.gmra.mxu0 %v182
  %v238 = vpop.f32.mrf.mxu0
  %v239 = vadd.f32 %v70, %v238
  %240 = vmatmul.f32.gmra.mxu0 %v185
  %v241 = vpop.f32.mrf.mxu0
  %v242 = vadd.f32 %v75, %v241
  %243 = vmatmul.f32.gmra.mxu0 %v188
  %v244 = vpop.f32.mrf.mxu0
  %v245 = vadd.f32 %v80, %v244
  %246 = vmatmul.f32.gmra.mxu0 %v191
  %v247 = vpop.f32.mrf.mxu0
  %v248 = vadd.f32 %v85, %v247
  %249 = vmatmul.f32.gmra.mxu0 %v194
  %v250 = vpop.f32.mrf.mxu0
  %v251 = vadd.f32 %v90, %v250
  %252 = vmatmul.f32.gmra.mxu0 %v197
  %v253 = vpop.f32.mrf.mxu0
  %v254 = vadd.f32 %v95, %v253
  %255 = vmatmul.f32.gmra.mxu0 %v200
  %v256 = vpop.f32.mrf.mxu0
  %v257 = vadd.f32 %v100, %v256
  %258 = vmatmul.f32.gmra.mxu0 %v203
  %v259 = vpop.f32.mrf.mxu0
  %v260 = vadd.f32 %v105, %v259
  %261 = vmatmul.f32.gmra.mxu0 %v206
  %v262 = vpop.f32.mrf.mxu0
  %v263 = vadd.f32 %v110, %v262
  %264 = vmatmul.f32.gmra.mxu0 %v209
  %v265 = vpop.f32.mrf.mxu0
  %v266 = vadd.f32 %v115, %v265
  %267 = vmatmul.f32.gmra.mxu0 %v212
  %v268 = vpop.f32.mrf.mxu0
  %v269 = vadd.f32 %v120, %v268
  %270 = vmatmul.f32.gmra.mxu0 %v215
  %v271 = vpop.f32.mrf.mxu0
  %v272 = vadd.f32 %v125, %v271
  %273 = vdwg.mxu0
  %vm274 = vcmask 261120
  %v276 = vsel %vm274, %v43, 0
  %v279 = vsel %vm274, %v44, 0
  %v282 = vsel %vm274, %v45, 0
  %v285 = vsel %vm274, %v46, 0
  %v288 = vsel %vm274, %v47, 0
  %v291 = vsel %vm274, %v48, 0
  %v294 = vsel %vm274, %v49, 0
  %v297 = vsel %vm274, %v50, 0
  %v300 = vsel %vm274, %v51, 0
  %v303 = vsel %vm274, %v52, 0
  %v306 = vsel %vm274, %v53, 0
  %v309 = vsel %vm274, %v54, 0
  %311 = vmatpush.msra.mxu0 0.0
  %312 = vmatpush.msra.mxu0 0.0
  %313 = vmatpush.msra.mxu0 0.0
  %314 = vmatpush.msra.mxu0 0.0
  %315 = vmatpush.msra.mxu0 0.0
  %316 = vmatpush.msra.mxu0 0.0
  %317 = vmatpush.msra.mxu0 0.0
  %318 = vmatpush.msra.mxu0 0.0
  %319 = vmatpush.msra.mxu0 0.0
  %320 = vmatpush.msra.mxu0 0.0
  %321 = vmatpush.msra.mxu0 0.0
  %322 = vmatpush.msra.mxu0 0.0
  %323 = vmatpush.msra.mxu0 %v178
  %324 = vmatpush.msra.mxu0 %v177
  %325 = vmatpush.msra.mxu0 %v176
  %326 = vmatpush.msra.mxu0 %v175
  %327 = vmatmul.f32.gmra.mxu0 %v276
  %v328 = vpop.f32.mrf.mxu0
  %v329 = vadd.f32 0.0, %v328
  %330 = vmatmul.f32.gmra.mxu0 %v279
  %v331 = vpop.f32.mrf.mxu0
  %v332 = vadd.f32 0.0, %v331
  %333 = vmatmul.f32.gmra.mxu0 %v282
  %v334 = vpop.f32.mrf.mxu0
  %v335 = vadd.f32 0.0, %v334
  %336 = vmatmul.f32.gmra.mxu0 %v285
  %v337 = vpop.f32.mrf.mxu0
  %v338 = vadd.f32 0.0, %v337
  %339 = vmatmul.f32.gmra.mxu0 %v288
  %v340 = vpop.f32.mrf.mxu0
  %v341 = vadd.f32 0.0, %v340
  %342 = vmatmul.f32.gmra.mxu0 %v291
  %v343 = vpop.f32.mrf.mxu0
  %v344 = vadd.f32 0.0, %v343
  %345 = vmatmul.f32.gmra.mxu0 %v294
  %v346 = vpop.f32.mrf.mxu0
  %v347 = vadd.f32 0.0, %v346
  %348 = vmatmul.f32.gmra.mxu0 %v297
  %v349 = vpop.f32.mrf.mxu0
  %v350 = vadd.f32 0.0, %v349
  %351 = vmatmul.f32.gmra.mxu0 %v300
  %v352 = vpop.f32.mrf.mxu0
  %v353 = vadd.f32 0.0, %v352
  %354 = vmatmul.f32.gmra.mxu0 %v303
  %v355 = vpop.f32.mrf.mxu0
  %v356 = vadd.f32 0.0, %v355
  %357 = vmatmul.f32.gmra.mxu0 %v306
  %v358 = vpop.f32.mrf.mxu0
  %v359 = vadd.f32 0.0, %v358
  %360 = vmatmul.f32.gmra.mxu0 %v309
  %v361 = vpop.f32.mrf.mxu0
  %v362 = vadd.f32 0.0, %v361
  %363 = vdwg.mxu0
  %v364 = vadd.f32 %v239, %v329
  %v365 = vadd.f32 %v242, %v332
  %v366 = vadd.f32 %v245, %v335
  %v367 = vadd.f32 %v248, %v338
  %v368 = vxor.u32 %v364, 2147483648
  %v369 = vxor.u32 %v365, 2147483648
  %v370 = vxor.u32 %v366, 2147483648
  %v371 = vxor.u32 %v367, 2147483648
  %v372 = vmul.f32 %v368, 1.442695
  %v373 = vpow.pop %v372
  %v374 = vmul.f32 %v369, 1.442695
  %v375 = vpow.pop %v374
  %v376 = vmul.f32 %v370, 1.442695
  %v377 = vpow.pop %v376
  %v378 = vmul.f32 %v371, 1.442695
  %v379 = vpow.pop %v378
  %v380 = vadd.f32 %v373, 1.0
  %v381 = vadd.f32 %v375, 1.0
  %v382 = vadd.f32 %v377, 1.0
  %v383 = vadd.f32 %v379, 1.0
  %v384 = vrcp.pop %v380
  %v385 = vmul.f32 %v380, %v384
  %v386 = vsub.f32 1.0, %v385
  %v387 = vmul.f32 %v384, %v386
  %v388 = vadd.f32 %v384, %v387
  %vm389 = vweird.f32 %v380
  %vm390 = vweird.f32 %v384
  %vm391 = vmor %vm389, %vm390
  %v392 = vsel %vm391, %v384, %v388
  %v393 = vand.u32 2147483647, %v380
  %vm394 = vcmp.eq.f32.partialorder %v393, 8.507059e+37
  %v395 = vand.u32 %v380, 2147483648
  %v396 = vor.u32 1.1754944e-38, %v395
  %v397 = vsel %vm394, %v396, %v392
  %v398 = vmul.f32 1.0, %v397
  %v399 = vrcp.pop %v381
  %v400 = vmul.f32 %v381, %v399
  %v401 = vsub.f32 1.0, %v400
  %v402 = vmul.f32 %v399, %v401
  %v403 = vadd.f32 %v399, %v402
  %vm404 = vweird.f32 %v381
  %vm405 = vweird.f32 %v399
  %vm406 = vmor %vm404, %vm405
  %v407 = vsel %vm406, %v399, %v403
  %v408 = vand.u32 2147483647, %v381
  %vm409 = vcmp.eq.f32.partialorder %v408, 8.507059e+37
  %v410 = vand.u32 %v381, 2147483648
  %v411 = vor.u32 1.1754944e-38, %v410
  %v412 = vsel %vm409, %v411, %v407
  %v413 = vmul.f32 1.0, %v412
  %v414 = vrcp.pop %v382
  %v415 = vmul.f32 %v382, %v414
  %v416 = vsub.f32 1.0, %v415
  %v417 = vmul.f32 %v414, %v416
  %v418 = vadd.f32 %v414, %v417
  %vm419 = vweird.f32 %v382
  %vm420 = vweird.f32 %v414
  %vm421 = vmor %vm419, %vm420
  %v422 = vsel %vm421, %v414, %v418
  %v423 = vand.u32 2147483647, %v382
  %vm424 = vcmp.eq.f32.partialorder %v423, 8.507059e+37
  %v425 = vand.u32 %v382, 2147483648
  %v426 = vor.u32 1.1754944e-38, %v425
  %v427 = vsel %vm424, %v426, %v422
  %v428 = vmul.f32 1.0, %v427
  %v429 = vrcp.pop %v383
  %v430 = vmul.f32 %v383, %v429
  %v431 = vsub.f32 1.0, %v430
  %v432 = vmul.f32 %v429, %v431
  %v433 = vadd.f32 %v429, %v432
  %vm434 = vweird.f32 %v383
  %vm435 = vweird.f32 %v429
  %vm436 = vmor %vm434, %vm435
  %v437 = vsel %vm436, %v429, %v433
  %v438 = vand.u32 2147483647, %v383
  %vm439 = vcmp.eq.f32.partialorder %v438, 8.507059e+37
  %v440 = vand.u32 %v383, 2147483648
  %v441 = vor.u32 1.1754944e-38, %v440
  %v442 = vsel %vm439, %v441, %v437
  %v443 = vmul.f32 1.0, %v442
  %v444 = vadd.f32 %v251, %v341
  %v445 = vadd.f32 %v254, %v344
  %v446 = vadd.f32 %v257, %v347
  %v447 = vadd.f32 %v260, %v350
  %v448 = vxor.u32 %v444, 2147483648
  %v449 = vxor.u32 %v445, 2147483648
  %v450 = vxor.u32 %v446, 2147483648
  %v451 = vxor.u32 %v447, 2147483648
  %v452 = vmul.f32 %v448, 1.442695
  %v453 = vpow.pop %v452
  %v454 = vmul.f32 %v449, 1.442695
  %v455 = vpow.pop %v454
  %v456 = vmul.f32 %v450, 1.442695
  %v457 = vpow.pop %v456
  %v458 = vmul.f32 %v451, 1.442695
  %v459 = vpow.pop %v458
  %v460 = vadd.f32 %v453, 1.0
  %v461 = vadd.f32 %v455, 1.0
  %v462 = vadd.f32 %v457, 1.0
  %v463 = vadd.f32 %v459, 1.0
  %v464 = vrcp.pop %v460
  %v465 = vmul.f32 %v460, %v464
  %v466 = vsub.f32 1.0, %v465
  %v467 = vmul.f32 %v464, %v466
  %v468 = vadd.f32 %v464, %v467
  %vm469 = vweird.f32 %v460
  %vm470 = vweird.f32 %v464
  %vm471 = vmor %vm469, %vm470
  %v472 = vsel %vm471, %v464, %v468
  %v473 = vand.u32 2147483647, %v460
  %vm474 = vcmp.eq.f32.partialorder %v473, 8.507059e+37
  %v475 = vand.u32 %v460, 2147483648
  %v476 = vor.u32 1.1754944e-38, %v475
  %v477 = vsel %vm474, %v476, %v472
  %v478 = vmul.f32 1.0, %v477
  %v479 = vrcp.pop %v461
  %v480 = vmul.f32 %v461, %v479
  %v481 = vsub.f32 1.0, %v480
  %v482 = vmul.f32 %v479, %v481
  %v483 = vadd.f32 %v479, %v482
  %vm484 = vweird.f32 %v461
  %vm485 = vweird.f32 %v479
  %vm486 = vmor %vm484, %vm485
  %v487 = vsel %vm486, %v479, %v483
  %v488 = vand.u32 2147483647, %v461
  %vm489 = vcmp.eq.f32.partialorder %v488, 8.507059e+37
  %v490 = vand.u32 %v461, 2147483648
  %v491 = vor.u32 1.1754944e-38, %v490
  %v492 = vsel %vm489, %v491, %v487
  %v493 = vmul.f32 1.0, %v492
  %v494 = vrcp.pop %v462
  %v495 = vmul.f32 %v462, %v494
  %v496 = vsub.f32 1.0, %v495
  %v497 = vmul.f32 %v494, %v496
  %v498 = vadd.f32 %v494, %v497
  %vm499 = vweird.f32 %v462
  %vm500 = vweird.f32 %v494
  %vm501 = vmor %vm499, %vm500
  %v502 = vsel %vm501, %v494, %v498
  %v503 = vand.u32 2147483647, %v462
  %vm504 = vcmp.eq.f32.partialorder %v503, 8.507059e+37
  %v505 = vand.u32 %v462, 2147483648
  %v506 = vor.u32 1.1754944e-38, %v505
  %v507 = vsel %vm504, %v506, %v502
  %v508 = vmul.f32 1.0, %v507
  %v509 = vrcp.pop %v463
  %v510 = vmul.f32 %v463, %v509
  %v511 = vsub.f32 1.0, %v510
  %v512 = vmul.f32 %v509, %v511
  %v513 = vadd.f32 %v509, %v512
  %vm514 = vweird.f32 %v463
  %vm515 = vweird.f32 %v509
  %vm516 = vmor %vm514, %vm515
  %v517 = vsel %vm516, %v509, %v513
  %v518 = vand.u32 2147483647, %v463
  %vm519 = vcmp.eq.f32.partialorder %v518, 8.507059e+37
  %v520 = vand.u32 %v463, 2147483648
  %v521 = vor.u32 1.1754944e-38, %v520
  %v522 = vsel %vm519, %v521, %v517
  %v523 = vmul.f32 1.0, %v522
  %v524 = vadd.f32 %v353, %v134
  %v525 = vadd.f32 %v356, %v139
  %v526 = vadd.f32 %v359, %v144
  %v527 = vadd.f32 %v362, %v149
  %v528 = vmul.f32 %v398, %v524
  %v529 = vmul.f32 %v413, %v525
  %v530 = vmul.f32 %v428, %v526
  %v531 = vmul.f32 %v443, %v527
  %v532 = vadd.f32 %v263, %v528
  %v533 = vadd.f32 %v266, %v529
  %v534 = vadd.f32 %v269, %v530
  %v535 = vadd.f32 %v272, %v531
  %v536 = vtanh.pop %v532
  %v537 = vtanh.pop %v533
  %v538 = vtanh.pop %v534
  %v539 = vtanh.pop %v535
  %v540 = vsub.f32 %v175, %v536
  %v541 = vsub.f32 %v176, %v537
  %v542 = vsub.f32 %v177, %v538
  %v543 = vsub.f32 %v178, %v539
  %v544 = vmul.f32 %v478, %v540
  %v545 = vmul.f32 %v493, %v541
  %v546 = vmul.f32 %v508, %v542
  %v547 = vmul.f32 %v523, %v543
  %v548 = vadd.f32 %v536, %v544
  %v549 = vadd.f32 %v537, %v545
  %v550 = vadd.f32 %v538, %v546
  %v551 = vadd.f32 %v539, %v547
  %v552 = vmul.f32 %v548, %v158
  %v553 = vmul.f32 %v549, %v163
  %v554 = vmul.f32 %v550, %v168
  %v555 = vmul.f32 %v551, %v173
  %v556 = vadd.f32 %v552, %v553
  %v557 = vadd.f32 %v556, %v554
  %v558 = vadd.f32 %v557, %v555
  %v559 = vrot.slane %v558, 4
  %v560 = vadd.f32 %v558, %v559
  %v561 = vrot.slane %v560, 2
  %v562 = vadd.f32 %v560, %v561
  %v563 = vrot.slane %v562, 1
  %v564 = vadd.f32 %v562, %v563
  %565 = vst [vmem:[%s6] sm:$0x1] %v564
  %s566 = scalar_lea.vmem %s0, 4
  %v567 = vld [vmem:[%s566] sm:$0xf]
  %v569 = vsel %vm217, %v567, 0
  %571 = vmatpush.msra.mxu0 0.0
  %572 = vmatpush.msra.mxu0 0.0
  %573 = vmatpush.msra.mxu0 0.0
  %574 = vmatpush.msra.mxu0 0.0
  %575 = vmatpush.msra.mxu0 0.0
  %576 = vmatpush.msra.mxu0 0.0
  %577 = vmatpush.msra.mxu0 0.0
  %578 = vmatpush.msra.mxu0 0.0
  %579 = vmatpush.msra.mxu0 0.0
  %580 = vmatpush.msra.mxu0 0.0
  %581 = vmatpush.msra.mxu0 0.0
  %582 = vmatpush.msra.mxu0 0.0
  %583 = vmatpush.msra.mxu0 0.0
  %584 = vmatpush.msra.mxu0 0.0
  %585 = vmatpush.msra.mxu0 0.0
  %586 = vmatpush.msra.mxu0 %v569
  %587 = vmatmul.f32.gmra.mxu0 %v182
  %v588 = vpop.f32.mrf.mxu0
  %v589 = vadd.f32 %v70, %v588
  %590 = vmatmul.f32.gmra.mxu0 %v185
  %v591 = vpop.f32.mrf.mxu0
  %v592 = vadd.f32 %v75, %v591
  %593 = vmatmul.f32.gmra.mxu0 %v188
  %v594 = vpop.f32.mrf.mxu0
  %v595 = vadd.f32 %v80, %v594
  %596 = vmatmul.f32.gmra.mxu0 %v191
  %v597 = vpop.f32.mrf.mxu0
  %v598 = vadd.f32 %v85, %v597
  %599 = vmatmul.f32.gmra.mxu0 %v194
  %v600 = vpop.f32.mrf.mxu0
  %v601 = vadd.f32 %v90, %v600
  %602 = vmatmul.f32.gmra.mxu0 %v197
  %v603 = vpop.f32.mrf.mxu0
  %v604 = vadd.f32 %v95, %v603
  %605 = vmatmul.f32.gmra.mxu0 %v200
  %v606 = vpop.f32.mrf.mxu0
  %v607 = vadd.f32 %v100, %v606
  %608 = vmatmul.f32.gmra.mxu0 %v203
  %v609 = vpop.f32.mrf.mxu0
  %v610 = vadd.f32 %v105, %v609
  %611 = vmatmul.f32.gmra.mxu0 %v206
  %v612 = vpop.f32.mrf.mxu0
  %v613 = vadd.f32 %v110, %v612
  %614 = vmatmul.f32.gmra.mxu0 %v209
  %v615 = vpop.f32.mrf.mxu0
  %v616 = vadd.f32 %v115, %v615
  %617 = vmatmul.f32.gmra.mxu0 %v212
  %v618 = vpop.f32.mrf.mxu0
  %v619 = vadd.f32 %v120, %v618
  %620 = vmatmul.f32.gmra.mxu0 %v215
  %v621 = vpop.f32.mrf.mxu0
  %v622 = vadd.f32 %v125, %v621
  %623 = vdwg.mxu0
  %624 = vmatpush.msra.mxu0 0.0
  %625 = vmatpush.msra.mxu0 0.0
  %626 = vmatpush.msra.mxu0 0.0
  %627 = vmatpush.msra.mxu0 0.0
  %628 = vmatpush.msra.mxu0 0.0
  %629 = vmatpush.msra.mxu0 0.0
  %630 = vmatpush.msra.mxu0 0.0
  %631 = vmatpush.msra.mxu0 0.0
  %632 = vmatpush.msra.mxu0 0.0
  %633 = vmatpush.msra.mxu0 0.0
  %634 = vmatpush.msra.mxu0 0.0
  %635 = vmatpush.msra.mxu0 0.0
  %636 = vmatpush.msra.mxu0 %v551
  %637 = vmatpush.msra.mxu0 %v550
  %638 = vmatpush.msra.mxu0 %v549
  %639 = vmatpush.msra.mxu0 %v548
  %640 = vmatmul.f32.gmra.mxu0 %v276
  %v641 = vpop.f32.mrf.mxu0
  %v642 = vadd.f32 0.0, %v641
  %643 = vmatmul.f32.gmra.mxu0 %v279
  %v644 = vpop.f32.mrf.mxu0
  %v645 = vadd.f32 0.0, %v644
  %646 = vmatmul.f32.gmra.mxu0 %v282
  %v647 = vpop.f32.mrf.mxu0
  %v648 = vadd.f32 0.0, %v647
  %649 = vmatmul.f32.gmra.mxu0 %v285
  %v650 = vpop.f32.mrf.mxu0
  %v651 = vadd.f32 0.0, %v650
  %652 = vmatmul.f32.gmra.mxu0 %v288
  %v653 = vpop.f32.mrf.mxu0
  %v654 = vadd.f32 0.0, %v653
  %655 = vmatmul.f32.gmra.mxu0 %v291
  %v656 = vpop.f32.mrf.mxu0
  %v657 = vadd.f32 0.0, %v656
  %658 = vmatmul.f32.gmra.mxu0 %v294
  %v659 = vpop.f32.mrf.mxu0
  %v660 = vadd.f32 0.0, %v659
  %661 = vmatmul.f32.gmra.mxu0 %v297
  %v662 = vpop.f32.mrf.mxu0
  %v663 = vadd.f32 0.0, %v662
  %664 = vmatmul.f32.gmra.mxu0 %v300
  %v665 = vpop.f32.mrf.mxu0
  %v666 = vadd.f32 0.0, %v665
  %667 = vmatmul.f32.gmra.mxu0 %v303
  %v668 = vpop.f32.mrf.mxu0
  %v669 = vadd.f32 0.0, %v668
  %670 = vmatmul.f32.gmra.mxu0 %v306
  %v671 = vpop.f32.mrf.mxu0
  %v672 = vadd.f32 0.0, %v671
  %673 = vmatmul.f32.gmra.mxu0 %v309
  %v674 = vpop.f32.mrf.mxu0
  %v675 = vadd.f32 0.0, %v674
  %676 = vdwg.mxu0
  %v677 = vadd.f32 %v589, %v642
  %v678 = vadd.f32 %v592, %v645
  %v679 = vadd.f32 %v595, %v648
  %v680 = vadd.f32 %v598, %v651
  %v681 = vxor.u32 %v677, 2147483648
  %v682 = vxor.u32 %v678, 2147483648
  %v683 = vxor.u32 %v679, 2147483648
  %v684 = vxor.u32 %v680, 2147483648
  %v685 = vmul.f32 %v681, 1.442695
  %v686 = vpow.pop %v685
  %v687 = vmul.f32 %v682, 1.442695
  %v688 = vpow.pop %v687
  %v689 = vmul.f32 %v683, 1.442695
  %v690 = vpow.pop %v689
  %v691 = vmul.f32 %v684, 1.442695
  %v692 = vpow.pop %v691
  %v693 = vadd.f32 %v686, 1.0
  %v694 = vadd.f32 %v688, 1.0
  %v695 = vadd.f32 %v690, 1.0
  %v696 = vadd.f32 %v692, 1.0
  %v697 = vrcp.pop %v693
  %v698 = vmul.f32 %v693, %v697
  %v699 = vsub.f32 1.0, %v698
  %v700 = vmul.f32 %v697, %v699
  %v701 = vadd.f32 %v697, %v700
  %vm702 = vweird.f32 %v693
  %vm703 = vweird.f32 %v697
  %vm704 = vmor %vm702, %vm703
  %v705 = vsel %vm704, %v697, %v701
  %v706 = vand.u32 2147483647, %v693
  %vm707 = vcmp.eq.f32.partialorder %v706, 8.507059e+37
  %v708 = vand.u32 %v693, 2147483648
  %v709 = vor.u32 1.1754944e-38, %v708
  %v710 = vsel %vm707, %v709, %v705
  %v711 = vmul.f32 1.0, %v710
  %v712 = vrcp.pop %v694
  %v713 = vmul.f32 %v694, %v712
  %v714 = vsub.f32 1.0, %v713
  %v715 = vmul.f32 %v712, %v714
  %v716 = vadd.f32 %v712, %v715
  %vm717 = vweird.f32 %v694
  %vm718 = vweird.f32 %v712
  %vm719 = vmor %vm717, %vm718
  %v720 = vsel %vm719, %v712, %v716
  %v721 = vand.u32 2147483647, %v694
  %vm722 = vcmp.eq.f32.partialorder %v721, 8.507059e+37
  %v723 = vand.u32 %v694, 2147483648
  %v724 = vor.u32 1.1754944e-38, %v723
  %v725 = vsel %vm722, %v724, %v720
  %v726 = vmul.f32 1.0, %v725
  %v727 = vrcp.pop %v695
  %v728 = vmul.f32 %v695, %v727
  %v729 = vsub.f32 1.0, %v728
  %v730 = vmul.f32 %v727, %v729
  %v731 = vadd.f32 %v727, %v730
  %vm732 = vweird.f32 %v695
  %vm733 = vweird.f32 %v727
  %vm734 = vmor %vm732, %vm733
  %v735 = vsel %vm734, %v727, %v731
  %v736 = vand.u32 2147483647, %v695
  %vm737 = vcmp.eq.f32.partialorder %v736, 8.507059e+37
  %v738 = vand.u32 %v695, 2147483648
  %v739 = vor.u32 1.1754944e-38, %v738
  %v740 = vsel %vm737, %v739, %v735
  %v741 = vmul.f32 1.0, %v740
  %v742 = vrcp.pop %v696
  %v743 = vmul.f32 %v696, %v742
  %v744 = vsub.f32 1.0, %v743
  %v745 = vmul.f32 %v742, %v744
  %v746 = vadd.f32 %v742, %v745
  %vm747 = vweird.f32 %v696
  %vm748 = vweird.f32 %v742
  %vm749 = vmor %vm747, %vm748
  %v750 = vsel %vm749, %v742, %v746
  %v751 = vand.u32 2147483647, %v696
  %vm752 = vcmp.eq.f32.partialorder %v751, 8.507059e+37
  %v753 = vand.u32 %v696, 2147483648
  %v754 = vor.u32 1.1754944e-38, %v753
  %v755 = vsel %vm752, %v754, %v750
  %v756 = vmul.f32 1.0, %v755
  %v757 = vadd.f32 %v601, %v654
  %v758 = vadd.f32 %v604, %v657
  %v759 = vadd.f32 %v607, %v660
  %v760 = vadd.f32 %v610, %v663
  %v761 = vxor.u32 %v757, 2147483648
  %v762 = vxor.u32 %v758, 2147483648
  %v763 = vxor.u32 %v759, 2147483648
  %v764 = vxor.u32 %v760, 2147483648
  %v765 = vmul.f32 %v761, 1.442695
  %v766 = vpow.pop %v765
  %v767 = vmul.f32 %v762, 1.442695
  %v768 = vpow.pop %v767
  %v769 = vmul.f32 %v763, 1.442695
  %v770 = vpow.pop %v769
  %v771 = vmul.f32 %v764, 1.442695
  %v772 = vpow.pop %v771
  %v773 = vadd.f32 %v766, 1.0
  %v774 = vadd.f32 %v768, 1.0
  %v775 = vadd.f32 %v770, 1.0
  %v776 = vadd.f32 %v772, 1.0
  %v777 = vrcp.pop %v773
  %v778 = vmul.f32 %v773, %v777
  %v779 = vsub.f32 1.0, %v778
  %v780 = vmul.f32 %v777, %v779
  %v781 = vadd.f32 %v777, %v780
  %vm782 = vweird.f32 %v773
  %vm783 = vweird.f32 %v777
  %vm784 = vmor %vm782, %vm783
  %v785 = vsel %vm784, %v777, %v781
  %v786 = vand.u32 2147483647, %v773
  %vm787 = vcmp.eq.f32.partialorder %v786, 8.507059e+37
  %v788 = vand.u32 %v773, 2147483648
  %v789 = vor.u32 1.1754944e-38, %v788
  %v790 = vsel %vm787, %v789, %v785
  %v791 = vmul.f32 1.0, %v790
  %v792 = vrcp.pop %v774
  %v793 = vmul.f32 %v774, %v792
  %v794 = vsub.f32 1.0, %v793
  %v795 = vmul.f32 %v792, %v794
  %v796 = vadd.f32 %v792, %v795
  %vm797 = vweird.f32 %v774
  %vm798 = vweird.f32 %v792
  %vm799 = vmor %vm797, %vm798
  %v800 = vsel %vm799, %v792, %v796
  %v801 = vand.u32 2147483647, %v774
  %vm802 = vcmp.eq.f32.partialorder %v801, 8.507059e+37
  %v803 = vand.u32 %v774, 2147483648
  %v804 = vor.u32 1.1754944e-38, %v803
  %v805 = vsel %vm802, %v804, %v800
  %v806 = vmul.f32 1.0, %v805
  %v807 = vrcp.pop %v775
  %v808 = vmul.f32 %v775, %v807
  %v809 = vsub.f32 1.0, %v808
  %v810 = vmul.f32 %v807, %v809
  %v811 = vadd.f32 %v807, %v810
  %vm812 = vweird.f32 %v775
  %vm813 = vweird.f32 %v807
  %vm814 = vmor %vm812, %vm813
  %v815 = vsel %vm814, %v807, %v811
  %v816 = vand.u32 2147483647, %v775
  %vm817 = vcmp.eq.f32.partialorder %v816, 8.507059e+37
  %v818 = vand.u32 %v775, 2147483648
  %v819 = vor.u32 1.1754944e-38, %v818
  %v820 = vsel %vm817, %v819, %v815
  %v821 = vmul.f32 1.0, %v820
  %v822 = vrcp.pop %v776
  %v823 = vmul.f32 %v776, %v822
  %v824 = vsub.f32 1.0, %v823
  %v825 = vmul.f32 %v822, %v824
  %v826 = vadd.f32 %v822, %v825
  %vm827 = vweird.f32 %v776
  %vm828 = vweird.f32 %v822
  %vm829 = vmor %vm827, %vm828
  %v830 = vsel %vm829, %v822, %v826
  %v831 = vand.u32 2147483647, %v776
  %vm832 = vcmp.eq.f32.partialorder %v831, 8.507059e+37
  %v833 = vand.u32 %v776, 2147483648
  %v834 = vor.u32 1.1754944e-38, %v833
  %v835 = vsel %vm832, %v834, %v830
  %v836 = vmul.f32 1.0, %v835
  %v837 = vadd.f32 %v666, %v134
  %v838 = vadd.f32 %v669, %v139
  %v839 = vadd.f32 %v672, %v144
  %v840 = vadd.f32 %v675, %v149
  %v841 = vmul.f32 %v711, %v837
  %v842 = vmul.f32 %v726, %v838
  %v843 = vmul.f32 %v741, %v839
  %v844 = vmul.f32 %v756, %v840
  %v845 = vadd.f32 %v613, %v841
  %v846 = vadd.f32 %v616, %v842
  %v847 = vadd.f32 %v619, %v843
  %v848 = vadd.f32 %v622, %v844
  %v849 = vtanh.pop %v845
  %v850 = vtanh.pop %v846
  %v851 = vtanh.pop %v847
  %v852 = vtanh.pop %v848
  %v853 = vsub.f32 %v548, %v849
  %v854 = vsub.f32 %v549, %v850
  %v855 = vsub.f32 %v550, %v851
  %v856 = vsub.f32 %v551, %v852
  %v857 = vmul.f32 %v791, %v853
  %v858 = vmul.f32 %v806, %v854
  %v859 = vmul.f32 %v821, %v855
  %v860 = vmul.f32 %v836, %v856
  %v861 = vadd.f32 %v849, %v857
  %v862 = vadd.f32 %v850, %v858
  %v863 = vadd.f32 %v851, %v859
  %v864 = vadd.f32 %v852, %v860
  %v865 = vmul.f32 %v861, %v158
  %v866 = vmul.f32 %v862, %v163
  %v867 = vmul.f32 %v863, %v168
  %v868 = vmul.f32 %v864, %v173
  %v869 = vadd.f32 %v865, %v866
  %v870 = vadd.f32 %v869, %v867
  %v871 = vadd.f32 %v870, %v868
  %v872 = vrot.slane %v871, 4
  %v873 = vadd.f32 %v871, %v872
  %v874 = vrot.slane %v873, 2
  %v875 = vadd.f32 %v873, %v874
  %v876 = vrot.slane %v875, 1
  %v877 = vadd.f32 %v875, %v876
  %878 = vst [vmem:[%s6 + $0x1] sm:$0x1] %v877
  %s879 = scalar_lea.vmem %s0, 8
  %v880 = vld [vmem:[%s879] sm:$0xf]
  %v882 = vsel %vm217, %v880, 0
  %884 = vmatpush.msra.mxu0 0.0
  %885 = vmatpush.msra.mxu0 0.0
  %886 = vmatpush.msra.mxu0 0.0
  %887 = vmatpush.msra.mxu0 0.0
  %888 = vmatpush.msra.mxu0 0.0
  %889 = vmatpush.msra.mxu0 0.0
  %890 = vmatpush.msra.mxu0 0.0
  %891 = vmatpush.msra.mxu0 0.0
  %892 = vmatpush.msra.mxu0 0.0
  %893 = vmatpush.msra.mxu0 0.0
  %894 = vmatpush.msra.mxu0 0.0
  %895 = vmatpush.msra.mxu0 0.0
  %896 = vmatpush.msra.mxu0 0.0
  %897 = vmatpush.msra.mxu0 0.0
  %898 = vmatpush.msra.mxu0 0.0
  %899 = vmatpush.msra.mxu0 %v882
  %900 = vmatmul.f32.gmra.mxu0 %v182
  %v901 = vpop.f32.mrf.mxu0
  %v902 = vadd.f32 %v70, %v901
  %903 = vmatmul.f32.gmra.mxu0 %v185
  %v904 = vpop.f32.mrf.mxu0
  %v905 = vadd.f32 %v75, %v904
  %906 = vmatmul.f32.gmra.mxu0 %v188
  %v907 = vpop.f32.mrf.mxu0
  %v908 = vadd.f32 %v80, %v907
  %909 = vmatmul.f32.gmra.mxu0 %v191
  %v910 = vpop.f32.mrf.mxu0
  %v911 = vadd.f32 %v85, %v910
  %912 = vmatmul.f32.gmra.mxu0 %v194
  %v913 = vpop.f32.mrf.mxu0
  %v914 = vadd.f32 %v90, %v913
  %915 = vmatmul.f32.gmra.mxu0 %v197
  %v916 = vpop.f32.mrf.mxu0
  %v917 = vadd.f32 %v95, %v916
  %918 = vmatmul.f32.gmra.mxu0 %v200
  %v919 = vpop.f32.mrf.mxu0
  %v920 = vadd.f32 %v100, %v919
  %921 = vmatmul.f32.gmra.mxu0 %v203
  %v922 = vpop.f32.mrf.mxu0
  %v923 = vadd.f32 %v105, %v922
  %924 = vmatmul.f32.gmra.mxu0 %v206
  %v925 = vpop.f32.mrf.mxu0
  %v926 = vadd.f32 %v110, %v925
  %927 = vmatmul.f32.gmra.mxu0 %v209
  %v928 = vpop.f32.mrf.mxu0
  %v929 = vadd.f32 %v115, %v928
  %930 = vmatmul.f32.gmra.mxu0 %v212
  %v931 = vpop.f32.mrf.mxu0
  %v932 = vadd.f32 %v120, %v931
  %933 = vmatmul.f32.gmra.mxu0 %v215
  %v934 = vpop.f32.mrf.mxu0
  %v935 = vadd.f32 %v125, %v934
  %936 = vdwg.mxu0
  %937 = vmatpush.msra.mxu0 0.0
  %938 = vmatpush.msra.mxu0 0.0
  %939 = vmatpush.msra.mxu0 0.0
  %940 = vmatpush.msra.mxu0 0.0
  %941 = vmatpush.msra.mxu0 0.0
  %942 = vmatpush.msra.mxu0 0.0
  %943 = vmatpush.msra.mxu0 0.0
  %944 = vmatpush.msra.mxu0 0.0
  %945 = vmatpush.msra.mxu0 0.0
  %946 = vmatpush.msra.mxu0 0.0
  %947 = vmatpush.msra.mxu0 0.0
  %948 = vmatpush.msra.mxu0 0.0
  %949 = vmatpush.msra.mxu0 %v864
  %950 = vmatpush.msra.mxu0 %v863
  %951 = vmatpush.msra.mxu0 %v862
  %952 = vmatpush.msra.mxu0 %v861
  %953 = vmatmul.f32.gmra.mxu0 %v276
  %v954 = vpop.f32.mrf.mxu0
  %v955 = vadd.f32 0.0, %v954
  %956 = vmatmul.f32.gmra.mxu0 %v279
  %v957 = vpop.f32.mrf.mxu0
  %v958 = vadd.f32 0.0, %v957
  %959 = vmatmul.f32.gmra.mxu0 %v282
  %v960 = vpop.f32.mrf.mxu0
  %v961 = vadd.f32 0.0, %v960
  %962 = vmatmul.f32.gmra.mxu0 %v285
  %v963 = vpop.f32.mrf.mxu0
  %v964 = vadd.f32 0.0, %v963
  %965 = vmatmul.f32.gmra.mxu0 %v288
  %v966 = vpop.f32.mrf.mxu0
  %v967 = vadd.f32 0.0, %v966
  %968 = vmatmul.f32.gmra.mxu0 %v291
  %v969 = vpop.f32.mrf.mxu0
  %v970 = vadd.f32 0.0, %v969
  %971 = vmatmul.f32.gmra.mxu0 %v294
  %v972 = vpop.f32.mrf.mxu0
  %v973 = vadd.f32 0.0, %v972
  %974 = vmatmul.f32.gmra.mxu0 %v297
  %v975 = vpop.f32.mrf.mxu0
  %v976 = vadd.f32 0.0, %v975
  %977 = vmatmul.f32.gmra.mxu0 %v300
  %v978 = vpop.f32.mrf.mxu0
  %v979 = vadd.f32 0.0, %v978
  %980 = vmatmul.f32.gmra.mxu0 %v303
  %v981 = vpop.f32.mrf.mxu0
  %v982 = vadd.f32 0.0, %v981
  %983 = vmatmul.f32.gmra.mxu0 %v306
  %v984 = vpop.f32.mrf.mxu0
  %v985 = vadd.f32 0.0, %v984
  %986 = vmatmul.f32.gmra.mxu0 %v309
  %v987 = vpop.f32.mrf.mxu0
  %v988 = vadd.f32 0.0, %v987
  %989 = vdwg.mxu0
  %v990 = vadd.f32 %v902, %v955
  %v991 = vadd.f32 %v905, %v958
  %v992 = vadd.f32 %v908, %v961
  %v993 = vadd.f32 %v911, %v964
  %v994 = vxor.u32 %v990, 2147483648
  %v995 = vxor.u32 %v991, 2147483648
  %v996 = vxor.u32 %v992, 2147483648
  %v997 = vxor.u32 %v993, 2147483648
  %v998 = vmul.f32 %v994, 1.442695
  %v999 = vpow.pop %v998
  %v1000 = vmul.f32 %v995, 1.442695
  %v1001 = vpow.pop %v1000
  %v1002 = vmul.f32 %v996, 1.442695
  %v1003 = vpow.pop %v1002
  %v1004 = vmul.f32 %v997, 1.442695
  %v1005 = vpow.pop %v1004
  %v1006 = vadd.f32 %v999, 1.0
  %v1007 = vadd.f32 %v1001, 1.0
  %v1008 = vadd.f32 %v1003, 1.0
  %v1009 = vadd.f32 %v1005, 1.0
  %v1010 = vrcp.pop %v1006
  %v1011 = vmul.f32 %v1006, %v1010
  %v1012 = vsub.f32 1.0, %v1011
  %v1013 = vmul.f32 %v1010, %v1012
  %v1014 = vadd.f32 %v1010, %v1013
  %vm1015 = vweird.f32 %v1006
  %vm1016 = vweird.f32 %v1010
  %vm1017 = vmor %vm1015, %vm1016
  %v1018 = vsel %vm1017, %v1010, %v1014
  %v1019 = vand.u32 2147483647, %v1006
  %vm1020 = vcmp.eq.f32.partialorder %v1019, 8.507059e+37
  %v1021 = vand.u32 %v1006, 2147483648
  %v1022 = vor.u32 1.1754944e-38, %v1021
  %v1023 = vsel %vm1020, %v1022, %v1018
  %v1024 = vmul.f32 1.0, %v1023
  %v1025 = vrcp.pop %v1007
  %v1026 = vmul.f32 %v1007, %v1025
  %v1027 = vsub.f32 1.0, %v1026
  %v1028 = vmul.f32 %v1025, %v1027
  %v1029 = vadd.f32 %v1025, %v1028
  %vm1030 = vweird.f32 %v1007
  %vm1031 = vweird.f32 %v1025
  %vm1032 = vmor %vm1030, %vm1031
  %v1033 = vsel %vm1032, %v1025, %v1029
  %v1034 = vand.u32 2147483647, %v1007
  %vm1035 = vcmp.eq.f32.partialorder %v1034, 8.507059e+37
  %v1036 = vand.u32 %v1007, 2147483648
  %v1037 = vor.u32 1.1754944e-38, %v1036
  %v1038 = vsel %vm1035, %v1037, %v1033
  %v1039 = vmul.f32 1.0, %v1038
  %v1040 = vrcp.pop %v1008
  %v1041 = vmul.f32 %v1008, %v1040
  %v1042 = vsub.f32 1.0, %v1041
  %v1043 = vmul.f32 %v1040, %v1042
  %v1044 = vadd.f32 %v1040, %v1043
  %vm1045 = vweird.f32 %v1008
  %vm1046 = vweird.f32 %v1040
  %vm1047 = vmor %vm1045, %vm1046
  %v1048 = vsel %vm1047, %v1040, %v1044
  %v1049 = vand.u32 2147483647, %v1008
  %vm1050 = vcmp.eq.f32.partialorder %v1049, 8.507059e+37
  %v1051 = vand.u32 %v1008, 2147483648
  %v1052 = vor.u32 1.1754944e-38, %v1051
  %v1053 = vsel %vm1050, %v1052, %v1048
  %v1054 = vmul.f32 1.0, %v1053
  %v1055 = vrcp.pop %v1009
  %v1056 = vmul.f32 %v1009, %v1055
  %v1057 = vsub.f32 1.0, %v1056
  %v1058 = vmul.f32 %v1055, %v1057
  %v1059 = vadd.f32 %v1055, %v1058
  %vm1060 = vweird.f32 %v1009
  %vm1061 = vweird.f32 %v1055
  %vm1062 = vmor %vm1060, %vm1061
  %v1063 = vsel %vm1062, %v1055, %v1059
  %v1064 = vand.u32 2147483647, %v1009
  %vm1065 = vcmp.eq.f32.partialorder %v1064, 8.507059e+37
  %v1066 = vand.u32 %v1009, 2147483648
  %v1067 = vor.u32 1.1754944e-38, %v1066
  %v1068 = vsel %vm1065, %v1067, %v1063
  %v1069 = vmul.f32 1.0, %v1068
  %v1070 = vadd.f32 %v914, %v967
  %v1071 = vadd.f32 %v917, %v970
  %v1072 = vadd.f32 %v920, %v973
  %v1073 = vadd.f32 %v923, %v976
  %v1074 = vxor.u32 %v1070, 2147483648
  %v1075 = vxor.u32 %v1071, 2147483648
  %v1076 = vxor.u32 %v1072, 2147483648
  %v1077 = vxor.u32 %v1073, 2147483648
  %v1078 = vmul.f32 %v1074, 1.442695
  %v1079 = vpow.pop %v1078
  %v1080 = vmul.f32 %v1075, 1.442695
  %v1081 = vpow.pop %v1080
  %v1082 = vmul.f32 %v1076, 1.442695
  %v1083 = vpow.pop %v1082
  %v1084 = vmul.f32 %v1077, 1.442695
  %v1085 = vpow.pop %v1084
  %v1086 = vadd.f32 %v1079, 1.0
  %v1087 = vadd.f32 %v1081, 1.0
  %v1088 = vadd.f32 %v1083, 1.0
  %v1089 = vadd.f32 %v1085, 1.0
  %v1090 = vrcp.pop %v1086
  %v1091 = vmul.f32 %v1086, %v1090
  %v1092 = vsub.f32 1.0, %v1091
  %v1093 = vmul.f32 %v1090, %v1092
  %v1094 = vadd.f32 %v1090, %v1093
  %vm1095 = vweird.f32 %v1086
  %vm1096 = vweird.f32 %v1090
  %vm1097 = vmor %vm1095, %vm1096
  %v1098 = vsel %vm1097, %v1090, %v1094
  %v1099 = vand.u32 2147483647, %v1086
  %vm1100 = vcmp.eq.f32.partialorder %v1099, 8.507059e+37
  %v1101 = vand.u32 %v1086, 2147483648
  %v1102 = vor.u32 1.1754944e-38, %v1101
  %v1103 = vsel %vm1100, %v1102, %v1098
  %v1104 = vmul.f32 1.0, %v1103
  %v1105 = vrcp.pop %v1087
  %v1106 = vmul.f32 %v1087, %v1105
  %v1107 = vsub.f32 1.0, %v1106
  %v1108 = vmul.f32 %v1105, %v1107
  %v1109 = vadd.f32 %v1105, %v1108
  %vm1110 = vweird.f32 %v1087
  %vm1111 = vweird.f32 %v1105
  %vm1112 = vmor %vm1110, %vm1111
  %v1113 = vsel %vm1112, %v1105, %v1109
  %v1114 = vand.u32 2147483647, %v1087
  %vm1115 = vcmp.eq.f32.partialorder %v1114, 8.507059e+37
  %v1116 = vand.u32 %v1087, 2147483648
  %v1117 = vor.u32 1.1754944e-38, %v1116
  %v1118 = vsel %vm1115, %v1117, %v1113
  %v1119 = vmul.f32 1.0, %v1118
  %v1120 = vrcp.pop %v1088
  %v1121 = vmul.f32 %v1088, %v1120
  %v1122 = vsub.f32 1.0, %v1121
  %v1123 = vmul.f32 %v1120, %v1122
  %v1124 = vadd.f32 %v1120, %v1123
  %vm1125 = vweird.f32 %v1088
  %vm1126 = vweird.f32 %v1120
  %vm1127 = vmor %vm1125, %vm1126
  %v1128 = vsel %vm1127, %v1120, %v1124
  %v1129 = vand.u32 2147483647, %v1088
  %vm1130 = vcmp.eq.f32.partialorder %v1129, 8.507059e+37
  %v1131 = vand.u32 %v1088, 2147483648
  %v1132 = vor.u32 1.1754944e-38, %v1131
  %v1133 = vsel %vm1130, %v1132, %v1128
  %v1134 = vmul.f32 1.0, %v1133
  %v1135 = vrcp.pop %v1089
  %v1136 = vmul.f32 %v1089, %v1135
  %v1137 = vsub.f32 1.0, %v1136
  %v1138 = vmul.f32 %v1135, %v1137
  %v1139 = vadd.f32 %v1135, %v1138
  %vm1140 = vweird.f32 %v1089
  %vm1141 = vweird.f32 %v1135
  %vm1142 = vmor %vm1140, %vm1141
  %v1143 = vsel %vm1142, %v1135, %v1139
  %v1144 = vand.u32 2147483647, %v1089
  %vm1145 = vcmp.eq.f32.partialorder %v1144, 8.507059e+37
  %v1146 = vand.u32 %v1089, 2147483648
  %v1147 = vor.u32 1.1754944e-38, %v1146
  %v1148 = vsel %vm1145, %v1147, %v1143
  %v1149 = vmul.f32 1.0, %v1148
  %v1150 = vadd.f32 %v979, %v134
  %v1151 = vadd.f32 %v982, %v139
  %v1152 = vadd.f32 %v985, %v144
  %v1153 = vadd.f32 %v988, %v149
  %v1154 = vmul.f32 %v1024, %v1150
  %v1155 = vmul.f32 %v1039, %v1151
  %v1156 = vmul.f32 %v1054, %v1152
  %v1157 = vmul.f32 %v1069, %v1153
  %v1158 = vadd.f32 %v926, %v1154
  %v1159 = vadd.f32 %v929, %v1155
  %v1160 = vadd.f32 %v932, %v1156
  %v1161 = vadd.f32 %v935, %v1157
  %v1162 = vtanh.pop %v1158
  %v1163 = vtanh.pop %v1159
  %v1164 = vtanh.pop %v1160
  %v1165 = vtanh.pop %v1161
  %v1166 = vsub.f32 %v861, %v1162
  %v1167 = vsub.f32 %v862, %v1163
  %v1168 = vsub.f32 %v863, %v1164
  %v1169 = vsub.f32 %v864, %v1165
  %v1170 = vmul.f32 %v1104, %v1166
  %v1171 = vmul.f32 %v1119, %v1167
  %v1172 = vmul.f32 %v1134, %v1168
  %v1173 = vmul.f32 %v1149, %v1169
  %v1174 = vadd.f32 %v1162, %v1170
  %v1175 = vadd.f32 %v1163, %v1171
  %v1176 = vadd.f32 %v1164, %v1172
  %v1177 = vadd.f32 %v1165, %v1173
  %v1178 = vmul.f32 %v1174, %v158
  %v1179 = vmul.f32 %v1175, %v163
  %v1180 = vmul.f32 %v1176, %v168
  %v1181 = vmul.f32 %v1177, %v173
  %v1182 = vadd.f32 %v1178, %v1179
  %v1183 = vadd.f32 %v1182, %v1180
  %v1184 = vadd.f32 %v1183, %v1181
  %v1185 = vrot.slane %v1184, 4
  %v1186 = vadd.f32 %v1184, %v1185
  %v1187 = vrot.slane %v1186, 2
  %v1188 = vadd.f32 %v1186, %v1187
  %v1189 = vrot.slane %v1188, 1
  %v1190 = vadd.f32 %v1188, %v1189
  %1191 = vst [vmem:[%s6 + $0x2] sm:$0x1] %v1190
  %s1192 = scalar_lea.vmem %s0, 12
  %v1193 = vld [vmem:[%s1192] sm:$0xf]
  %v1195 = vsel %vm217, %v1193, 0
  %1197 = vmatpush.msra.mxu0 0.0
  %1198 = vmatpush.msra.mxu0 0.0
  %1199 = vmatpush.msra.mxu0 0.0
  %1200 = vmatpush.msra.mxu0 0.0
  %1201 = vmatpush.msra.mxu0 0.0
  %1202 = vmatpush.msra.mxu0 0.0
  %1203 = vmatpush.msra.mxu0 0.0
  %1204 = vmatpush.msra.mxu0 0.0
  %1205 = vmatpush.msra.mxu0 0.0
  %1206 = vmatpush.msra.mxu0 0.0
  %1207 = vmatpush.msra.mxu0 0.0
  %1208 = vmatpush.msra.mxu0 0.0
  %1209 = vmatpush.msra.mxu0 0.0
  %1210 = vmatpush.msra.mxu0 0.0
  %1211 = vmatpush.msra.mxu0 0.0
  %1212 = vmatpush.msra.mxu0 %v1195
  %1213 = vmatmul.f32.gmra.mxu0 %v182
  %v1214 = vpop.f32.mrf.mxu0
  %v1215 = vadd.f32 %v70, %v1214
  %1216 = vmatmul.f32.gmra.mxu0 %v185
  %v1217 = vpop.f32.mrf.mxu0
  %v1218 = vadd.f32 %v75, %v1217
  %1219 = vmatmul.f32.gmra.mxu0 %v188
  %v1220 = vpop.f32.mrf.mxu0
  %v1221 = vadd.f32 %v80, %v1220
  %1222 = vmatmul.f32.gmra.mxu0 %v191
  %v1223 = vpop.f32.mrf.mxu0
  %v1224 = vadd.f32 %v85, %v1223
  %1225 = vmatmul.f32.gmra.mxu0 %v194
  %v1226 = vpop.f32.mrf.mxu0
  %v1227 = vadd.f32 %v90, %v1226
  %1228 = vmatmul.f32.gmra.mxu0 %v197
  %v1229 = vpop.f32.mrf.mxu0
  %v1230 = vadd.f32 %v95, %v1229
  %1231 = vmatmul.f32.gmra.mxu0 %v200
  %v1232 = vpop.f32.mrf.mxu0
  %v1233 = vadd.f32 %v100, %v1232
  %1234 = vmatmul.f32.gmra.mxu0 %v203
  %v1235 = vpop.f32.mrf.mxu0
  %v1236 = vadd.f32 %v105, %v1235
  %1237 = vmatmul.f32.gmra.mxu0 %v206
  %v1238 = vpop.f32.mrf.mxu0
  %v1239 = vadd.f32 %v110, %v1238
  %1240 = vmatmul.f32.gmra.mxu0 %v209
  %v1241 = vpop.f32.mrf.mxu0
  %v1242 = vadd.f32 %v115, %v1241
  %1243 = vmatmul.f32.gmra.mxu0 %v212
  %v1244 = vpop.f32.mrf.mxu0
  %v1245 = vadd.f32 %v120, %v1244
  %1246 = vmatmul.f32.gmra.mxu0 %v215
  %v1247 = vpop.f32.mrf.mxu0
  %v1248 = vadd.f32 %v125, %v1247
  %1249 = vdwg.mxu0
  %1250 = vmatpush.msra.mxu0 0.0
  %1251 = vmatpush.msra.mxu0 0.0
  %1252 = vmatpush.msra.mxu0 0.0
  %1253 = vmatpush.msra.mxu0 0.0
  %1254 = vmatpush.msra.mxu0 0.0
  %1255 = vmatpush.msra.mxu0 0.0
  %1256 = vmatpush.msra.mxu0 0.0
  %1257 = vmatpush.msra.mxu0 0.0
  %1258 = vmatpush.msra.mxu0 0.0
  %1259 = vmatpush.msra.mxu0 0.0
  %1260 = vmatpush.msra.mxu0 0.0
  %1261 = vmatpush.msra.mxu0 0.0
  %1262 = vmatpush.msra.mxu0 %v1177
  %1263 = vmatpush.msra.mxu0 %v1176
  %1264 = vmatpush.msra.mxu0 %v1175
  %1265 = vmatpush.msra.mxu0 %v1174
  %1266 = vmatmul.f32.gmra.mxu0 %v276
  %v1267 = vpop.f32.mrf.mxu0
  %v1268 = vadd.f32 0.0, %v1267
  %1269 = vmatmul.f32.gmra.mxu0 %v279
  %v1270 = vpop.f32.mrf.mxu0
  %v1271 = vadd.f32 0.0, %v1270
  %1272 = vmatmul.f32.gmra.mxu0 %v282
  %v1273 = vpop.f32.mrf.mxu0
  %v1274 = vadd.f32 0.0, %v1273
  %1275 = vmatmul.f32.gmra.mxu0 %v285
  %v1276 = vpop.f32.mrf.mxu0
  %v1277 = vadd.f32 0.0, %v1276
  %1278 = vmatmul.f32.gmra.mxu0 %v288
  %v1279 = vpop.f32.mrf.mxu0
  %v1280 = vadd.f32 0.0, %v1279
  %1281 = vmatmul.f32.gmra.mxu0 %v291
  %v1282 = vpop.f32.mrf.mxu0
  %v1283 = vadd.f32 0.0, %v1282
  %1284 = vmatmul.f32.gmra.mxu0 %v294
  %v1285 = vpop.f32.mrf.mxu0
  %v1286 = vadd.f32 0.0, %v1285
  %1287 = vmatmul.f32.gmra.mxu0 %v297
  %v1288 = vpop.f32.mrf.mxu0
  %v1289 = vadd.f32 0.0, %v1288
  %1290 = vmatmul.f32.gmra.mxu0 %v300
  %v1291 = vpop.f32.mrf.mxu0
  %v1292 = vadd.f32 0.0, %v1291
  %1293 = vmatmul.f32.gmra.mxu0 %v303
  %v1294 = vpop.f32.mrf.mxu0
  %v1295 = vadd.f32 0.0, %v1294
  %1296 = vmatmul.f32.gmra.mxu0 %v306
  %v1297 = vpop.f32.mrf.mxu0
  %v1298 = vadd.f32 0.0, %v1297
  %1299 = vmatmul.f32.gmra.mxu0 %v309
  %v1300 = vpop.f32.mrf.mxu0
  %v1301 = vadd.f32 0.0, %v1300
  %1302 = vdwg.mxu0
  %v1303 = vadd.f32 %v1215, %v1268
  %v1304 = vadd.f32 %v1218, %v1271
  %v1305 = vadd.f32 %v1221, %v1274
  %v1306 = vadd.f32 %v1224, %v1277
  %v1307 = vxor.u32 %v1303, 2147483648
  %v1308 = vxor.u32 %v1304, 2147483648
  %v1309 = vxor.u32 %v1305, 2147483648
  %v1310 = vxor.u32 %v1306, 2147483648
  %v1311 = vmul.f32 %v1307, 1.442695
  %v1312 = vpow.pop %v1311
  %v1313 = vmul.f32 %v1308, 1.442695
  %v1314 = vpow.pop %v1313
  %v1315 = vmul.f32 %v1309, 1.442695
  %v1316 = vpow.pop %v1315
  %v1317 = vmul.f32 %v1310, 1.442695
  %v1318 = vpow.pop %v1317
  %v1319 = vadd.f32 %v1312, 1.0
  %v1320 = vadd.f32 %v1314, 1.0
  %v1321 = vadd.f32 %v1316, 1.0
  %v1322 = vadd.f32 %v1318, 1.0
  %v1323 = vrcp.pop %v1319
  %v1324 = vmul.f32 %v1319, %v1323
  %v1325 = vsub.f32 1.0, %v1324
  %v1326 = vmul.f32 %v1323, %v1325
  %v1327 = vadd.f32 %v1323, %v1326
  %vm1328 = vweird.f32 %v1319
  %vm1329 = vweird.f32 %v1323
  %vm1330 = vmor %vm1328, %vm1329
  %v1331 = vsel %vm1330, %v1323, %v1327
  %v1332 = vand.u32 2147483647, %v1319
  %vm1333 = vcmp.eq.f32.partialorder %v1332, 8.507059e+37
  %v1334 = vand.u32 %v1319, 2147483648
  %v1335 = vor.u32 1.1754944e-38, %v1334
  %v1336 = vsel %vm1333, %v1335, %v1331
  %v1337 = vmul.f32 1.0, %v1336
  %v1338 = vrcp.pop %v1320
  %v1339 = vmul.f32 %v1320, %v1338
  %v1340 = vsub.f32 1.0, %v1339
  %v1341 = vmul.f32 %v1338, %v1340
  %v1342 = vadd.f32 %v1338, %v1341
  %vm1343 = vweird.f32 %v1320
  %vm1344 = vweird.f32 %v1338
  %vm1345 = vmor %vm1343, %vm1344
  %v1346 = vsel %vm1345, %v1338, %v1342
  %v1347 = vand.u32 2147483647, %v1320
  %vm1348 = vcmp.eq.f32.partialorder %v1347, 8.507059e+37
  %v1349 = vand.u32 %v1320, 2147483648
  %v1350 = vor.u32 1.1754944e-38, %v1349
  %v1351 = vsel %vm1348, %v1350, %v1346
  %v1352 = vmul.f32 1.0, %v1351
  %v1353 = vrcp.pop %v1321
  %v1354 = vmul.f32 %v1321, %v1353
  %v1355 = vsub.f32 1.0, %v1354
  %v1356 = vmul.f32 %v1353, %v1355
  %v1357 = vadd.f32 %v1353, %v1356
  %vm1358 = vweird.f32 %v1321
  %vm1359 = vweird.f32 %v1353
  %vm1360 = vmor %vm1358, %vm1359
  %v1361 = vsel %vm1360, %v1353, %v1357
  %v1362 = vand.u32 2147483647, %v1321
  %vm1363 = vcmp.eq.f32.partialorder %v1362, 8.507059e+37
  %v1364 = vand.u32 %v1321, 2147483648
  %v1365 = vor.u32 1.1754944e-38, %v1364
  %v1366 = vsel %vm1363, %v1365, %v1361
  %v1367 = vmul.f32 1.0, %v1366
  %v1368 = vrcp.pop %v1322
  %v1369 = vmul.f32 %v1322, %v1368
  %v1370 = vsub.f32 1.0, %v1369
  %v1371 = vmul.f32 %v1368, %v1370
  %v1372 = vadd.f32 %v1368, %v1371
  %vm1373 = vweird.f32 %v1322
  %vm1374 = vweird.f32 %v1368
  %vm1375 = vmor %vm1373, %vm1374
  %v1376 = vsel %vm1375, %v1368, %v1372
  %v1377 = vand.u32 2147483647, %v1322
  %vm1378 = vcmp.eq.f32.partialorder %v1377, 8.507059e+37
  %v1379 = vand.u32 %v1322, 2147483648
  %v1380 = vor.u32 1.1754944e-38, %v1379
  %v1381 = vsel %vm1378, %v1380, %v1376
  %v1382 = vmul.f32 1.0, %v1381
  %v1383 = vadd.f32 %v1227, %v1280
  %v1384 = vadd.f32 %v1230, %v1283
  %v1385 = vadd.f32 %v1233, %v1286
  %v1386 = vadd.f32 %v1236, %v1289
  %v1387 = vxor.u32 %v1383, 2147483648
  %v1388 = vxor.u32 %v1384, 2147483648
  %v1389 = vxor.u32 %v1385, 2147483648
  %v1390 = vxor.u32 %v1386, 2147483648
  %v1391 = vmul.f32 %v1387, 1.442695
  %v1392 = vpow.pop %v1391
  %v1393 = vmul.f32 %v1388, 1.442695
  %v1394 = vpow.pop %v1393
  %v1395 = vmul.f32 %v1389, 1.442695
  %v1396 = vpow.pop %v1395
  %v1397 = vmul.f32 %v1390, 1.442695
  %v1398 = vpow.pop %v1397
  %v1399 = vadd.f32 %v1392, 1.0
  %v1400 = vadd.f32 %v1394, 1.0
  %v1401 = vadd.f32 %v1396, 1.0
  %v1402 = vadd.f32 %v1398, 1.0
  %v1403 = vrcp.pop %v1399
  %v1404 = vmul.f32 %v1399, %v1403
  %v1405 = vsub.f32 1.0, %v1404
  %v1406 = vmul.f32 %v1403, %v1405
  %v1407 = vadd.f32 %v1403, %v1406
  %vm1408 = vweird.f32 %v1399
  %vm1409 = vweird.f32 %v1403
  %vm1410 = vmor %vm1408, %vm1409
  %v1411 = vsel %vm1410, %v1403, %v1407
  %v1412 = vand.u32 2147483647, %v1399
  %vm1413 = vcmp.eq.f32.partialorder %v1412, 8.507059e+37
  %v1414 = vand.u32 %v1399, 2147483648
  %v1415 = vor.u32 1.1754944e-38, %v1414
  %v1416 = vsel %vm1413, %v1415, %v1411
  %v1417 = vmul.f32 1.0, %v1416
  %v1418 = vrcp.pop %v1400
  %v1419 = vmul.f32 %v1400, %v1418
  %v1420 = vsub.f32 1.0, %v1419
  %v1421 = vmul.f32 %v1418, %v1420
  %v1422 = vadd.f32 %v1418, %v1421
  %vm1423 = vweird.f32 %v1400
  %vm1424 = vweird.f32 %v1418
  %vm1425 = vmor %vm1423, %vm1424
  %v1426 = vsel %vm1425, %v1418, %v1422
  %v1427 = vand.u32 2147483647, %v1400
  %vm1428 = vcmp.eq.f32.partialorder %v1427, 8.507059e+37
  %v1429 = vand.u32 %v1400, 2147483648
  %v1430 = vor.u32 1.1754944e-38, %v1429
  %v1431 = vsel %vm1428, %v1430, %v1426
  %v1432 = vmul.f32 1.0, %v1431
  %v1433 = vrcp.pop %v1401
  %v1434 = vmul.f32 %v1401, %v1433
  %v1435 = vsub.f32 1.0, %v1434
  %v1436 = vmul.f32 %v1433, %v1435
  %v1437 = vadd.f32 %v1433, %v1436
  %vm1438 = vweird.f32 %v1401
  %vm1439 = vweird.f32 %v1433
  %vm1440 = vmor %vm1438, %vm1439
  %v1441 = vsel %vm1440, %v1433, %v1437
  %v1442 = vand.u32 2147483647, %v1401
  %vm1443 = vcmp.eq.f32.partialorder %v1442, 8.507059e+37
  %v1444 = vand.u32 %v1401, 2147483648
  %v1445 = vor.u32 1.1754944e-38, %v1444
  %v1446 = vsel %vm1443, %v1445, %v1441
  %v1447 = vmul.f32 1.0, %v1446
  %v1448 = vrcp.pop %v1402
  %v1449 = vmul.f32 %v1402, %v1448
  %v1450 = vsub.f32 1.0, %v1449
  %v1451 = vmul.f32 %v1448, %v1450
  %v1452 = vadd.f32 %v1448, %v1451
  %vm1453 = vweird.f32 %v1402
  %vm1454 = vweird.f32 %v1448
  %vm1455 = vmor %vm1453, %vm1454
  %v1456 = vsel %vm1455, %v1448, %v1452
  %v1457 = vand.u32 2147483647, %v1402
  %vm1458 = vcmp.eq.f32.partialorder %v1457, 8.507059e+37
  %v1459 = vand.u32 %v1402, 2147483648
  %v1460 = vor.u32 1.1754944e-38, %v1459
  %v1461 = vsel %vm1458, %v1460, %v1456
  %v1462 = vmul.f32 1.0, %v1461
  %v1463 = vadd.f32 %v1292, %v134
  %v1464 = vadd.f32 %v1295, %v139
  %v1465 = vadd.f32 %v1298, %v144
  %v1466 = vadd.f32 %v1301, %v149
  %v1467 = vmul.f32 %v1337, %v1463
  %v1468 = vmul.f32 %v1352, %v1464
  %v1469 = vmul.f32 %v1367, %v1465
  %v1470 = vmul.f32 %v1382, %v1466
  %v1471 = vadd.f32 %v1239, %v1467
  %v1472 = vadd.f32 %v1242, %v1468
  %v1473 = vadd.f32 %v1245, %v1469
  %v1474 = vadd.f32 %v1248, %v1470
  %v1475 = vtanh.pop %v1471
  %v1476 = vtanh.pop %v1472
  %v1477 = vtanh.pop %v1473
  %v1478 = vtanh.pop %v1474
  %v1479 = vsub.f32 %v1174, %v1475
  %v1480 = vsub.f32 %v1175, %v1476
  %v1481 = vsub.f32 %v1176, %v1477
  %v1482 = vsub.f32 %v1177, %v1478
  %v1483 = vmul.f32 %v1417, %v1479
  %v1484 = vmul.f32 %v1432, %v1480
  %v1485 = vmul.f32 %v1447, %v1481
  %v1486 = vmul.f32 %v1462, %v1482
  %v1487 = vadd.f32 %v1475, %v1483
  %v1488 = vadd.f32 %v1476, %v1484
  %v1489 = vadd.f32 %v1477, %v1485
  %v1490 = vadd.f32 %v1478, %v1486
  %v1491 = vmul.f32 %v1487, %v158
  %v1492 = vmul.f32 %v1488, %v163
  %v1493 = vmul.f32 %v1489, %v168
  %v1494 = vmul.f32 %v1490, %v173
  %v1495 = vadd.f32 %v1491, %v1492
  %v1496 = vadd.f32 %v1495, %v1493
  %v1497 = vadd.f32 %v1496, %v1494
  %v1498 = vrot.slane %v1497, 4
  %v1499 = vadd.f32 %v1497, %v1498
  %v1500 = vrot.slane %v1499, 2
  %v1501 = vadd.f32 %v1499, %v1500
  %v1502 = vrot.slane %v1501, 1
  %v1503 = vadd.f32 %v1501, %v1502
  %1504 = vst [vmem:[%s6 + $0x3] sm:$0x1] %v1503
  %s1505 = scalar_lea.vmem %s0, 16
  %v1506 = vld [vmem:[%s1505] sm:$0xf]
  %v1508 = vsel %vm217, %v1506, 0
  %1510 = vmatpush.msra.mxu0 0.0
  %1511 = vmatpush.msra.mxu0 0.0
  %1512 = vmatpush.msra.mxu0 0.0
  %1513 = vmatpush.msra.mxu0 0.0
  %1514 = vmatpush.msra.mxu0 0.0
  %1515 = vmatpush.msra.mxu0 0.0
  %1516 = vmatpush.msra.mxu0 0.0
  %1517 = vmatpush.msra.mxu0 0.0
  %1518 = vmatpush.msra.mxu0 0.0
  %1519 = vmatpush.msra.mxu0 0.0
  %1520 = vmatpush.msra.mxu0 0.0
  %1521 = vmatpush.msra.mxu0 0.0
  %1522 = vmatpush.msra.mxu0 0.0
  %1523 = vmatpush.msra.mxu0 0.0
  %1524 = vmatpush.msra.mxu0 0.0
  %1525 = vmatpush.msra.mxu0 %v1508
  %1526 = vmatmul.f32.gmra.mxu0 %v182
  %v1527 = vpop.f32.mrf.mxu0
  %v1528 = vadd.f32 %v70, %v1527
  %1529 = vmatmul.f32.gmra.mxu0 %v185
  %v1530 = vpop.f32.mrf.mxu0
  %v1531 = vadd.f32 %v75, %v1530
  %1532 = vmatmul.f32.gmra.mxu0 %v188
  %v1533 = vpop.f32.mrf.mxu0
  %v1534 = vadd.f32 %v80, %v1533
  %1535 = vmatmul.f32.gmra.mxu0 %v191
  %v1536 = vpop.f32.mrf.mxu0
  %v1537 = vadd.f32 %v85, %v1536
  %1538 = vmatmul.f32.gmra.mxu0 %v194
  %v1539 = vpop.f32.mrf.mxu0
  %v1540 = vadd.f32 %v90, %v1539
  %1541 = vmatmul.f32.gmra.mxu0 %v197
  %v1542 = vpop.f32.mrf.mxu0
  %v1543 = vadd.f32 %v95, %v1542
  %1544 = vmatmul.f32.gmra.mxu0 %v200
  %v1545 = vpop.f32.mrf.mxu0
  %v1546 = vadd.f32 %v100, %v1545
  %1547 = vmatmul.f32.gmra.mxu0 %v203
  %v1548 = vpop.f32.mrf.mxu0
  %v1549 = vadd.f32 %v105, %v1548
  %1550 = vmatmul.f32.gmra.mxu0 %v206
  %v1551 = vpop.f32.mrf.mxu0
  %v1552 = vadd.f32 %v110, %v1551
  %1553 = vmatmul.f32.gmra.mxu0 %v209
  %v1554 = vpop.f32.mrf.mxu0
  %v1555 = vadd.f32 %v115, %v1554
  %1556 = vmatmul.f32.gmra.mxu0 %v212
  %v1557 = vpop.f32.mrf.mxu0
  %v1558 = vadd.f32 %v120, %v1557
  %1559 = vmatmul.f32.gmra.mxu0 %v215
  %v1560 = vpop.f32.mrf.mxu0
  %v1561 = vadd.f32 %v125, %v1560
  %1562 = vdwg.mxu0
  %1563 = vmatpush.msra.mxu0 0.0
  %1564 = vmatpush.msra.mxu0 0.0
  %1565 = vmatpush.msra.mxu0 0.0
  %1566 = vmatpush.msra.mxu0 0.0
  %1567 = vmatpush.msra.mxu0 0.0
  %1568 = vmatpush.msra.mxu0 0.0
  %1569 = vmatpush.msra.mxu0 0.0
  %1570 = vmatpush.msra.mxu0 0.0
  %1571 = vmatpush.msra.mxu0 0.0
  %1572 = vmatpush.msra.mxu0 0.0
  %1573 = vmatpush.msra.mxu0 0.0
  %1574 = vmatpush.msra.mxu0 0.0
  %1575 = vmatpush.msra.mxu0 %v1490
  %1576 = vmatpush.msra.mxu0 %v1489
  %1577 = vmatpush.msra.mxu0 %v1488
  %1578 = vmatpush.msra.mxu0 %v1487
  %1579 = vmatmul.f32.gmra.mxu0 %v276
  %v1580 = vpop.f32.mrf.mxu0
  %v1581 = vadd.f32 0.0, %v1580
  %1582 = vmatmul.f32.gmra.mxu0 %v279
  %v1583 = vpop.f32.mrf.mxu0
  %v1584 = vadd.f32 0.0, %v1583
  %1585 = vmatmul.f32.gmra.mxu0 %v282
  %v1586 = vpop.f32.mrf.mxu0
  %v1587 = vadd.f32 0.0, %v1586
  %1588 = vmatmul.f32.gmra.mxu0 %v285
  %v1589 = vpop.f32.mrf.mxu0
  %v1590 = vadd.f32 0.0, %v1589
  %1591 = vmatmul.f32.gmra.mxu0 %v288
  %v1592 = vpop.f32.mrf.mxu0
  %v1593 = vadd.f32 0.0, %v1592
  %1594 = vmatmul.f32.gmra.mxu0 %v291
  %v1595 = vpop.f32.mrf.mxu0
  %v1596 = vadd.f32 0.0, %v1595
  %1597 = vmatmul.f32.gmra.mxu0 %v294
  %v1598 = vpop.f32.mrf.mxu0
  %v1599 = vadd.f32 0.0, %v1598
  %1600 = vmatmul.f32.gmra.mxu0 %v297
  %v1601 = vpop.f32.mrf.mxu0
  %v1602 = vadd.f32 0.0, %v1601
  %1603 = vmatmul.f32.gmra.mxu0 %v300
  %v1604 = vpop.f32.mrf.mxu0
  %v1605 = vadd.f32 0.0, %v1604
  %1606 = vmatmul.f32.gmra.mxu0 %v303
  %v1607 = vpop.f32.mrf.mxu0
  %v1608 = vadd.f32 0.0, %v1607
  %1609 = vmatmul.f32.gmra.mxu0 %v306
  %v1610 = vpop.f32.mrf.mxu0
  %v1611 = vadd.f32 0.0, %v1610
  %1612 = vmatmul.f32.gmra.mxu0 %v309
  %v1613 = vpop.f32.mrf.mxu0
  %v1614 = vadd.f32 0.0, %v1613
  %1615 = vdwg.mxu0
  %v1616 = vadd.f32 %v1528, %v1581
  %v1617 = vadd.f32 %v1531, %v1584
  %v1618 = vadd.f32 %v1534, %v1587
  %v1619 = vadd.f32 %v1537, %v1590
  %v1620 = vxor.u32 %v1616, 2147483648
  %v1621 = vxor.u32 %v1617, 2147483648
  %v1622 = vxor.u32 %v1618, 2147483648
  %v1623 = vxor.u32 %v1619, 2147483648
  %v1624 = vmul.f32 %v1620, 1.442695
  %v1625 = vpow.pop %v1624
  %v1626 = vmul.f32 %v1621, 1.442695
  %v1627 = vpow.pop %v1626
  %v1628 = vmul.f32 %v1622, 1.442695
  %v1629 = vpow.pop %v1628
  %v1630 = vmul.f32 %v1623, 1.442695
  %v1631 = vpow.pop %v1630
  %v1632 = vadd.f32 %v1625, 1.0
  %v1633 = vadd.f32 %v1627, 1.0
  %v1634 = vadd.f32 %v1629, 1.0
  %v1635 = vadd.f32 %v1631, 1.0
  %v1636 = vrcp.pop %v1632
  %v1637 = vmul.f32 %v1632, %v1636
  %v1638 = vsub.f32 1.0, %v1637
  %v1639 = vmul.f32 %v1636, %v1638
  %v1640 = vadd.f32 %v1636, %v1639
  %vm1641 = vweird.f32 %v1632
  %vm1642 = vweird.f32 %v1636
  %vm1643 = vmor %vm1641, %vm1642
  %v1644 = vsel %vm1643, %v1636, %v1640
  %v1645 = vand.u32 2147483647, %v1632
  %vm1646 = vcmp.eq.f32.partialorder %v1645, 8.507059e+37
  %v1647 = vand.u32 %v1632, 2147483648
  %v1648 = vor.u32 1.1754944e-38, %v1647
  %v1649 = vsel %vm1646, %v1648, %v1644
  %v1650 = vmul.f32 1.0, %v1649
  %v1651 = vrcp.pop %v1633
  %v1652 = vmul.f32 %v1633, %v1651
  %v1653 = vsub.f32 1.0, %v1652
  %v1654 = vmul.f32 %v1651, %v1653
  %v1655 = vadd.f32 %v1651, %v1654
  %vm1656 = vweird.f32 %v1633
  %vm1657 = vweird.f32 %v1651
  %vm1658 = vmor %vm1656, %vm1657
  %v1659 = vsel %vm1658, %v1651, %v1655
  %v1660 = vand.u32 2147483647, %v1633
  %vm1661 = vcmp.eq.f32.partialorder %v1660, 8.507059e+37
  %v1662 = vand.u32 %v1633, 2147483648
  %v1663 = vor.u32 1.1754944e-38, %v1662
  %v1664 = vsel %vm1661, %v1663, %v1659
  %v1665 = vmul.f32 1.0, %v1664
  %v1666 = vrcp.pop %v1634
  %v1667 = vmul.f32 %v1634, %v1666
  %v1668 = vsub.f32 1.0, %v1667
  %v1669 = vmul.f32 %v1666, %v1668
  %v1670 = vadd.f32 %v1666, %v1669
  %vm1671 = vweird.f32 %v1634
  %vm1672 = vweird.f32 %v1666
  %vm1673 = vmor %vm1671, %vm1672
  %v1674 = vsel %vm1673, %v1666, %v1670
  %v1675 = vand.u32 2147483647, %v1634
  %vm1676 = vcmp.eq.f32.partialorder %v1675, 8.507059e+37
  %v1677 = vand.u32 %v1634, 2147483648
  %v1678 = vor.u32 1.1754944e-38, %v1677
  %v1679 = vsel %vm1676, %v1678, %v1674
  %v1680 = vmul.f32 1.0, %v1679
  %v1681 = vrcp.pop %v1635
  %v1682 = vmul.f32 %v1635, %v1681
  %v1683 = vsub.f32 1.0, %v1682
  %v1684 = vmul.f32 %v1681, %v1683
  %v1685 = vadd.f32 %v1681, %v1684
  %vm1686 = vweird.f32 %v1635
  %vm1687 = vweird.f32 %v1681
  %vm1688 = vmor %vm1686, %vm1687
  %v1689 = vsel %vm1688, %v1681, %v1685
  %v1690 = vand.u32 2147483647, %v1635
  %vm1691 = vcmp.eq.f32.partialorder %v1690, 8.507059e+37
  %v1692 = vand.u32 %v1635, 2147483648
  %v1693 = vor.u32 1.1754944e-38, %v1692
  %v1694 = vsel %vm1691, %v1693, %v1689
  %v1695 = vmul.f32 1.0, %v1694
  %v1696 = vadd.f32 %v1540, %v1593
  %v1697 = vadd.f32 %v1543, %v1596
  %v1698 = vadd.f32 %v1546, %v1599
  %v1699 = vadd.f32 %v1549, %v1602
  %v1700 = vxor.u32 %v1696, 2147483648
  %v1701 = vxor.u32 %v1697, 2147483648
  %v1702 = vxor.u32 %v1698, 2147483648
  %v1703 = vxor.u32 %v1699, 2147483648
  %v1704 = vmul.f32 %v1700, 1.442695
  %v1705 = vpow.pop %v1704
  %v1706 = vmul.f32 %v1701, 1.442695
  %v1707 = vpow.pop %v1706
  %v1708 = vmul.f32 %v1702, 1.442695
  %v1709 = vpow.pop %v1708
  %v1710 = vmul.f32 %v1703, 1.442695
  %v1711 = vpow.pop %v1710
  %v1712 = vadd.f32 %v1705, 1.0
  %v1713 = vadd.f32 %v1707, 1.0
  %v1714 = vadd.f32 %v1709, 1.0
  %v1715 = vadd.f32 %v1711, 1.0
  %v1716 = vrcp.pop %v1712
  %v1717 = vmul.f32 %v1712, %v1716
  %v1718 = vsub.f32 1.0, %v1717
  %v1719 = vmul.f32 %v1716, %v1718
  %v1720 = vadd.f32 %v1716, %v1719
  %vm1721 = vweird.f32 %v1712
  %vm1722 = vweird.f32 %v1716
  %vm1723 = vmor %vm1721, %vm1722
  %v1724 = vsel %vm1723, %v1716, %v1720
  %v1725 = vand.u32 2147483647, %v1712
  %vm1726 = vcmp.eq.f32.partialorder %v1725, 8.507059e+37
  %v1727 = vand.u32 %v1712, 2147483648
  %v1728 = vor.u32 1.1754944e-38, %v1727
  %v1729 = vsel %vm1726, %v1728, %v1724
  %v1730 = vmul.f32 1.0, %v1729
  %v1731 = vrcp.pop %v1713
  %v1732 = vmul.f32 %v1713, %v1731
  %v1733 = vsub.f32 1.0, %v1732
  %v1734 = vmul.f32 %v1731, %v1733
  %v1735 = vadd.f32 %v1731, %v1734
  %vm1736 = vweird.f32 %v1713
  %vm1737 = vweird.f32 %v1731
  %vm1738 = vmor %vm1736, %vm1737
  %v1739 = vsel %vm1738, %v1731, %v1735
  %v1740 = vand.u32 2147483647, %v1713
  %vm1741 = vcmp.eq.f32.partialorder %v1740, 8.507059e+37
  %v1742 = vand.u32 %v1713, 2147483648
  %v1743 = vor.u32 1.1754944e-38, %v1742
  %v1744 = vsel %vm1741, %v1743, %v1739
  %v1745 = vmul.f32 1.0, %v1744
  %v1746 = vrcp.pop %v1714
  %v1747 = vmul.f32 %v1714, %v1746
  %v1748 = vsub.f32 1.0, %v1747
  %v1749 = vmul.f32 %v1746, %v1748
  %v1750 = vadd.f32 %v1746, %v1749
  %vm1751 = vweird.f32 %v1714
  %vm1752 = vweird.f32 %v1746
  %vm1753 = vmor %vm1751, %vm1752
  %v1754 = vsel %vm1753, %v1746, %v1750
  %v1755 = vand.u32 2147483647, %v1714
  %vm1756 = vcmp.eq.f32.partialorder %v1755, 8.507059e+37
  %v1757 = vand.u32 %v1714, 2147483648
  %v1758 = vor.u32 1.1754944e-38, %v1757
  %v1759 = vsel %vm1756, %v1758, %v1754
  %v1760 = vmul.f32 1.0, %v1759
  %v1761 = vrcp.pop %v1715
  %v1762 = vmul.f32 %v1715, %v1761
  %v1763 = vsub.f32 1.0, %v1762
  %v1764 = vmul.f32 %v1761, %v1763
  %v1765 = vadd.f32 %v1761, %v1764
  %vm1766 = vweird.f32 %v1715
  %vm1767 = vweird.f32 %v1761
  %vm1768 = vmor %vm1766, %vm1767
  %v1769 = vsel %vm1768, %v1761, %v1765
  %v1770 = vand.u32 2147483647, %v1715
  %vm1771 = vcmp.eq.f32.partialorder %v1770, 8.507059e+37
  %v1772 = vand.u32 %v1715, 2147483648
  %v1773 = vor.u32 1.1754944e-38, %v1772
  %v1774 = vsel %vm1771, %v1773, %v1769
  %v1775 = vmul.f32 1.0, %v1774
  %v1776 = vadd.f32 %v1605, %v134
  %v1777 = vadd.f32 %v1608, %v139
  %v1778 = vadd.f32 %v1611, %v144
  %v1779 = vadd.f32 %v1614, %v149
  %v1780 = vmul.f32 %v1650, %v1776
  %v1781 = vmul.f32 %v1665, %v1777
  %v1782 = vmul.f32 %v1680, %v1778
  %v1783 = vmul.f32 %v1695, %v1779
  %v1784 = vadd.f32 %v1552, %v1780
  %v1785 = vadd.f32 %v1555, %v1781
  %v1786 = vadd.f32 %v1558, %v1782
  %v1787 = vadd.f32 %v1561, %v1783
  %v1788 = vtanh.pop %v1784
  %v1789 = vtanh.pop %v1785
  %v1790 = vtanh.pop %v1786
  %v1791 = vtanh.pop %v1787
  %v1792 = vsub.f32 %v1487, %v1788
  %v1793 = vsub.f32 %v1488, %v1789
  %v1794 = vsub.f32 %v1489, %v1790
  %v1795 = vsub.f32 %v1490, %v1791
  %v1796 = vmul.f32 %v1730, %v1792
  %v1797 = vmul.f32 %v1745, %v1793
  %v1798 = vmul.f32 %v1760, %v1794
  %v1799 = vmul.f32 %v1775, %v1795
  %v1800 = vadd.f32 %v1788, %v1796
  %v1801 = vadd.f32 %v1789, %v1797
  %v1802 = vadd.f32 %v1790, %v1798
  %v1803 = vadd.f32 %v1791, %v1799
  %v1804 = vmul.f32 %v1800, %v158
  %v1805 = vmul.f32 %v1801, %v163
  %v1806 = vmul.f32 %v1802, %v168
  %v1807 = vmul.f32 %v1803, %v173
  %v1808 = vadd.f32 %v1804, %v1805
  %v1809 = vadd.f32 %v1808, %v1806
  %v1810 = vadd.f32 %v1809, %v1807
  %v1811 = vrot.slane %v1810, 4
  %v1812 = vadd.f32 %v1810, %v1811
  %v1813 = vrot.slane %v1812, 2
  %v1814 = vadd.f32 %v1812, %v1813
  %v1815 = vrot.slane %v1814, 1
  %v1816 = vadd.f32 %v1814, %v1815
  %1817 = vst [vmem:[%s6 + $0x4] sm:$0x1] %v1816
  %s1818 = scalar_lea.vmem %s0, 20
  %v1819 = vld [vmem:[%s1818] sm:$0xf]
  %v1821 = vsel %vm217, %v1819, 0
  %1823 = vmatpush.msra.mxu0 0.0
  %1824 = vmatpush.msra.mxu0 0.0
  %1825 = vmatpush.msra.mxu0 0.0
  %1826 = vmatpush.msra.mxu0 0.0
  %1827 = vmatpush.msra.mxu0 0.0
  %1828 = vmatpush.msra.mxu0 0.0
  %1829 = vmatpush.msra.mxu0 0.0
  %1830 = vmatpush.msra.mxu0 0.0
  %1831 = vmatpush.msra.mxu0 0.0
  %1832 = vmatpush.msra.mxu0 0.0
  %1833 = vmatpush.msra.mxu0 0.0
  %1834 = vmatpush.msra.mxu0 0.0
  %1835 = vmatpush.msra.mxu0 0.0
  %1836 = vmatpush.msra.mxu0 0.0
  %1837 = vmatpush.msra.mxu0 0.0
  %1838 = vmatpush.msra.mxu0 %v1821
  %1839 = vmatmul.f32.gmra.mxu0 %v182
  %v1840 = vpop.f32.mrf.mxu0
  %v1841 = vadd.f32 %v70, %v1840
  %1842 = vmatmul.f32.gmra.mxu0 %v185
  %v1843 = vpop.f32.mrf.mxu0
  %v1844 = vadd.f32 %v75, %v1843
  %1845 = vmatmul.f32.gmra.mxu0 %v188
  %v1846 = vpop.f32.mrf.mxu0
  %v1847 = vadd.f32 %v80, %v1846
  %1848 = vmatmul.f32.gmra.mxu0 %v191
  %v1849 = vpop.f32.mrf.mxu0
  %v1850 = vadd.f32 %v85, %v1849
  %1851 = vmatmul.f32.gmra.mxu0 %v194
  %v1852 = vpop.f32.mrf.mxu0
  %v1853 = vadd.f32 %v90, %v1852
  %1854 = vmatmul.f32.gmra.mxu0 %v197
  %v1855 = vpop.f32.mrf.mxu0
  %v1856 = vadd.f32 %v95, %v1855
  %1857 = vmatmul.f32.gmra.mxu0 %v200
  %v1858 = vpop.f32.mrf.mxu0
  %v1859 = vadd.f32 %v100, %v1858
  %1860 = vmatmul.f32.gmra.mxu0 %v203
  %v1861 = vpop.f32.mrf.mxu0
  %v1862 = vadd.f32 %v105, %v1861
  %1863 = vmatmul.f32.gmra.mxu0 %v206
  %v1864 = vpop.f32.mrf.mxu0
  %v1865 = vadd.f32 %v110, %v1864
  %1866 = vmatmul.f32.gmra.mxu0 %v209
  %v1867 = vpop.f32.mrf.mxu0
  %v1868 = vadd.f32 %v115, %v1867
  %1869 = vmatmul.f32.gmra.mxu0 %v212
  %v1870 = vpop.f32.mrf.mxu0
  %v1871 = vadd.f32 %v120, %v1870
  %1872 = vmatmul.f32.gmra.mxu0 %v215
  %v1873 = vpop.f32.mrf.mxu0
  %v1874 = vadd.f32 %v125, %v1873
  %1875 = vdwg.mxu0
  %1876 = vmatpush.msra.mxu0 0.0
  %1877 = vmatpush.msra.mxu0 0.0
  %1878 = vmatpush.msra.mxu0 0.0
  %1879 = vmatpush.msra.mxu0 0.0
  %1880 = vmatpush.msra.mxu0 0.0
  %1881 = vmatpush.msra.mxu0 0.0
  %1882 = vmatpush.msra.mxu0 0.0
  %1883 = vmatpush.msra.mxu0 0.0
  %1884 = vmatpush.msra.mxu0 0.0
  %1885 = vmatpush.msra.mxu0 0.0
  %1886 = vmatpush.msra.mxu0 0.0
  %1887 = vmatpush.msra.mxu0 0.0
  %1888 = vmatpush.msra.mxu0 %v1803
  %1889 = vmatpush.msra.mxu0 %v1802
  %1890 = vmatpush.msra.mxu0 %v1801
  %1891 = vmatpush.msra.mxu0 %v1800
  %1892 = vmatmul.f32.gmra.mxu0 %v276
  %v1893 = vpop.f32.mrf.mxu0
  %v1894 = vadd.f32 0.0, %v1893
  %1895 = vmatmul.f32.gmra.mxu0 %v279
  %v1896 = vpop.f32.mrf.mxu0
  %v1897 = vadd.f32 0.0, %v1896
  %1898 = vmatmul.f32.gmra.mxu0 %v282
  %v1899 = vpop.f32.mrf.mxu0
  %v1900 = vadd.f32 0.0, %v1899
  %1901 = vmatmul.f32.gmra.mxu0 %v285
  %v1902 = vpop.f32.mrf.mxu0
  %v1903 = vadd.f32 0.0, %v1902
  %1904 = vmatmul.f32.gmra.mxu0 %v288
  %v1905 = vpop.f32.mrf.mxu0
  %v1906 = vadd.f32 0.0, %v1905
  %1907 = vmatmul.f32.gmra.mxu0 %v291
  %v1908 = vpop.f32.mrf.mxu0
  %v1909 = vadd.f32 0.0, %v1908
  %1910 = vmatmul.f32.gmra.mxu0 %v294
  %v1911 = vpop.f32.mrf.mxu0
  %v1912 = vadd.f32 0.0, %v1911
  %1913 = vmatmul.f32.gmra.mxu0 %v297
  %v1914 = vpop.f32.mrf.mxu0
  %v1915 = vadd.f32 0.0, %v1914
  %1916 = vmatmul.f32.gmra.mxu0 %v300
  %v1917 = vpop.f32.mrf.mxu0
  %v1918 = vadd.f32 0.0, %v1917
  %1919 = vmatmul.f32.gmra.mxu0 %v303
  %v1920 = vpop.f32.mrf.mxu0
  %v1921 = vadd.f32 0.0, %v1920
  %1922 = vmatmul.f32.gmra.mxu0 %v306
  %v1923 = vpop.f32.mrf.mxu0
  %v1924 = vadd.f32 0.0, %v1923
  %1925 = vmatmul.f32.gmra.mxu0 %v309
  %v1926 = vpop.f32.mrf.mxu0
  %v1927 = vadd.f32 0.0, %v1926
  %1928 = vdwg.mxu0
  %v1929 = vadd.f32 %v1841, %v1894
  %v1930 = vadd.f32 %v1844, %v1897
  %v1931 = vadd.f32 %v1847, %v1900
  %v1932 = vadd.f32 %v1850, %v1903
  %v1933 = vxor.u32 %v1929, 2147483648
  %v1934 = vxor.u32 %v1930, 2147483648
  %v1935 = vxor.u32 %v1931, 2147483648
  %v1936 = vxor.u32 %v1932, 2147483648
  %v1937 = vmul.f32 %v1933, 1.442695
  %v1938 = vpow.pop %v1937
  %v1939 = vmul.f32 %v1934, 1.442695
  %v1940 = vpow.pop %v1939
  %v1941 = vmul.f32 %v1935, 1.442695
  %v1942 = vpow.pop %v1941
  %v1943 = vmul.f32 %v1936, 1.442695
  %v1944 = vpow.pop %v1943
  %v1945 = vadd.f32 %v1938, 1.0
  %v1946 = vadd.f32 %v1940, 1.0
  %v1947 = vadd.f32 %v1942, 1.0
  %v1948 = vadd.f32 %v1944, 1.0
  %v1949 = vrcp.pop %v1945
  %v1950 = vmul.f32 %v1945, %v1949
  %v1951 = vsub.f32 1.0, %v1950
  %v1952 = vmul.f32 %v1949, %v1951
  %v1953 = vadd.f32 %v1949, %v1952
  %vm1954 = vweird.f32 %v1945
  %vm1955 = vweird.f32 %v1949
  %vm1956 = vmor %vm1954, %vm1955
  %v1957 = vsel %vm1956, %v1949, %v1953
  %v1958 = vand.u32 2147483647, %v1945
  %vm1959 = vcmp.eq.f32.partialorder %v1958, 8.507059e+37
  %v1960 = vand.u32 %v1945, 2147483648
  %v1961 = vor.u32 1.1754944e-38, %v1960
  %v1962 = vsel %vm1959, %v1961, %v1957
  %v1963 = vmul.f32 1.0, %v1962
  %v1964 = vrcp.pop %v1946
  %v1965 = vmul.f32 %v1946, %v1964
  %v1966 = vsub.f32 1.0, %v1965
  %v1967 = vmul.f32 %v1964, %v1966
  %v1968 = vadd.f32 %v1964, %v1967
  %vm1969 = vweird.f32 %v1946
  %vm1970 = vweird.f32 %v1964
  %vm1971 = vmor %vm1969, %vm1970
  %v1972 = vsel %vm1971, %v1964, %v1968
  %v1973 = vand.u32 2147483647, %v1946
  %vm1974 = vcmp.eq.f32.partialorder %v1973, 8.507059e+37
  %v1975 = vand.u32 %v1946, 2147483648
  %v1976 = vor.u32 1.1754944e-38, %v1975
  %v1977 = vsel %vm1974, %v1976, %v1972
  %v1978 = vmul.f32 1.0, %v1977
  %v1979 = vrcp.pop %v1947
  %v1980 = vmul.f32 %v1947, %v1979
  %v1981 = vsub.f32 1.0, %v1980
  %v1982 = vmul.f32 %v1979, %v1981
  %v1983 = vadd.f32 %v1979, %v1982
  %vm1984 = vweird.f32 %v1947
  %vm1985 = vweird.f32 %v1979
  %vm1986 = vmor %vm1984, %vm1985
  %v1987 = vsel %vm1986, %v1979, %v1983
  %v1988 = vand.u32 2147483647, %v1947
  %vm1989 = vcmp.eq.f32.partialorder %v1988, 8.507059e+37
  %v1990 = vand.u32 %v1947, 2147483648
  %v1991 = vor.u32 1.1754944e-38, %v1990
  %v1992 = vsel %vm1989, %v1991, %v1987
  %v1993 = vmul.f32 1.0, %v1992
  %v1994 = vrcp.pop %v1948
  %v1995 = vmul.f32 %v1948, %v1994
  %v1996 = vsub.f32 1.0, %v1995
  %v1997 = vmul.f32 %v1994, %v1996
  %v1998 = vadd.f32 %v1994, %v1997
  %vm1999 = vweird.f32 %v1948
  %vm2000 = vweird.f32 %v1994
  %vm2001 = vmor %vm1999, %vm2000
  %v2002 = vsel %vm2001, %v1994, %v1998
  %v2003 = vand.u32 2147483647, %v1948
  %vm2004 = vcmp.eq.f32.partialorder %v2003, 8.507059e+37
  %v2005 = vand.u32 %v1948, 2147483648
  %v2006 = vor.u32 1.1754944e-38, %v2005
  %v2007 = vsel %vm2004, %v2006, %v2002
  %v2008 = vmul.f32 1.0, %v2007
  %v2009 = vadd.f32 %v1853, %v1906
  %v2010 = vadd.f32 %v1856, %v1909
  %v2011 = vadd.f32 %v1859, %v1912
  %v2012 = vadd.f32 %v1862, %v1915
  %v2013 = vxor.u32 %v2009, 2147483648
  %v2014 = vxor.u32 %v2010, 2147483648
  %v2015 = vxor.u32 %v2011, 2147483648
  %v2016 = vxor.u32 %v2012, 2147483648
  %v2017 = vmul.f32 %v2013, 1.442695
  %v2018 = vpow.pop %v2017
  %v2019 = vmul.f32 %v2014, 1.442695
  %v2020 = vpow.pop %v2019
  %v2021 = vmul.f32 %v2015, 1.442695
  %v2022 = vpow.pop %v2021
  %v2023 = vmul.f32 %v2016, 1.442695
  %v2024 = vpow.pop %v2023
  %v2025 = vadd.f32 %v2018, 1.0
  %v2026 = vadd.f32 %v2020, 1.0
  %v2027 = vadd.f32 %v2022, 1.0
  %v2028 = vadd.f32 %v2024, 1.0
  %v2029 = vrcp.pop %v2025
  %v2030 = vmul.f32 %v2025, %v2029
  %v2031 = vsub.f32 1.0, %v2030
  %v2032 = vmul.f32 %v2029, %v2031
  %v2033 = vadd.f32 %v2029, %v2032
  %vm2034 = vweird.f32 %v2025
  %vm2035 = vweird.f32 %v2029
  %vm2036 = vmor %vm2034, %vm2035
  %v2037 = vsel %vm2036, %v2029, %v2033
  %v2038 = vand.u32 2147483647, %v2025
  %vm2039 = vcmp.eq.f32.partialorder %v2038, 8.507059e+37
  %v2040 = vand.u32 %v2025, 2147483648
  %v2041 = vor.u32 1.1754944e-38, %v2040
  %v2042 = vsel %vm2039, %v2041, %v2037
  %v2043 = vmul.f32 1.0, %v2042
  %v2044 = vrcp.pop %v2026
  %v2045 = vmul.f32 %v2026, %v2044
  %v2046 = vsub.f32 1.0, %v2045
  %v2047 = vmul.f32 %v2044, %v2046
  %v2048 = vadd.f32 %v2044, %v2047
  %vm2049 = vweird.f32 %v2026
  %vm2050 = vweird.f32 %v2044
  %vm2051 = vmor %vm2049, %vm2050
  %v2052 = vsel %vm2051, %v2044, %v2048
  %v2053 = vand.u32 2147483647, %v2026
  %vm2054 = vcmp.eq.f32.partialorder %v2053, 8.507059e+37
  %v2055 = vand.u32 %v2026, 2147483648
  %v2056 = vor.u32 1.1754944e-38, %v2055
  %v2057 = vsel %vm2054, %v2056, %v2052
  %v2058 = vmul.f32 1.0, %v2057
  %v2059 = vrcp.pop %v2027
  %v2060 = vmul.f32 %v2027, %v2059
  %v2061 = vsub.f32 1.0, %v2060
  %v2062 = vmul.f32 %v2059, %v2061
  %v2063 = vadd.f32 %v2059, %v2062
  %vm2064 = vweird.f32 %v2027
  %vm2065 = vweird.f32 %v2059
  %vm2066 = vmor %vm2064, %vm2065
  %v2067 = vsel %vm2066, %v2059, %v2063
  %v2068 = vand.u32 2147483647, %v2027
  %vm2069 = vcmp.eq.f32.partialorder %v2068, 8.507059e+37
  %v2070 = vand.u32 %v2027, 2147483648
  %v2071 = vor.u32 1.1754944e-38, %v2070
  %v2072 = vsel %vm2069, %v2071, %v2067
  %v2073 = vmul.f32 1.0, %v2072
  %v2074 = vrcp.pop %v2028
  %v2075 = vmul.f32 %v2028, %v2074
  %v2076 = vsub.f32 1.0, %v2075
  %v2077 = vmul.f32 %v2074, %v2076
  %v2078 = vadd.f32 %v2074, %v2077
  %vm2079 = vweird.f32 %v2028
  %vm2080 = vweird.f32 %v2074
  %vm2081 = vmor %vm2079, %vm2080
  %v2082 = vsel %vm2081, %v2074, %v2078
  %v2083 = vand.u32 2147483647, %v2028
  %vm2084 = vcmp.eq.f32.partialorder %v2083, 8.507059e+37
  %v2085 = vand.u32 %v2028, 2147483648
  %v2086 = vor.u32 1.1754944e-38, %v2085
  %v2087 = vsel %vm2084, %v2086, %v2082
  %v2088 = vmul.f32 1.0, %v2087
  %v2089 = vadd.f32 %v1918, %v134
  %v2090 = vadd.f32 %v1921, %v139
  %v2091 = vadd.f32 %v1924, %v144
  %v2092 = vadd.f32 %v1927, %v149
  %v2093 = vmul.f32 %v1963, %v2089
  %v2094 = vmul.f32 %v1978, %v2090
  %v2095 = vmul.f32 %v1993, %v2091
  %v2096 = vmul.f32 %v2008, %v2092
  %v2097 = vadd.f32 %v1865, %v2093
  %v2098 = vadd.f32 %v1868, %v2094
  %v2099 = vadd.f32 %v1871, %v2095
  %v2100 = vadd.f32 %v1874, %v2096
  %v2101 = vtanh.pop %v2097
  %v2102 = vtanh.pop %v2098
  %v2103 = vtanh.pop %v2099
  %v2104 = vtanh.pop %v2100
  %v2105 = vsub.f32 %v1800, %v2101
  %v2106 = vsub.f32 %v1801, %v2102
  %v2107 = vsub.f32 %v1802, %v2103
  %v2108 = vsub.f32 %v1803, %v2104
  %v2109 = vmul.f32 %v2043, %v2105
  %v2110 = vmul.f32 %v2058, %v2106
  %v2111 = vmul.f32 %v2073, %v2107
  %v2112 = vmul.f32 %v2088, %v2108
  %v2113 = vadd.f32 %v2101, %v2109
  %v2114 = vadd.f32 %v2102, %v2110
  %v2115 = vadd.f32 %v2103, %v2111
  %v2116 = vadd.f32 %v2104, %v2112
  %v2117 = vmul.f32 %v2113, %v158
  %v2118 = vmul.f32 %v2114, %v163
  %v2119 = vmul.f32 %v2115, %v168
  %v2120 = vmul.f32 %v2116, %v173
  %v2121 = vadd.f32 %v2117, %v2118
  %v2122 = vadd.f32 %v2121, %v2119
  %v2123 = vadd.f32 %v2122, %v2120
  %v2124 = vrot.slane %v2123, 4
  %v2125 = vadd.f32 %v2123, %v2124
  %v2126 = vrot.slane %v2125, 2
  %v2127 = vadd.f32 %v2125, %v2126
  %v2128 = vrot.slane %v2127, 1
  %v2129 = vadd.f32 %v2127, %v2128
  %2130 = vst [vmem:[%s6 + $0x5] sm:$0x1] %v2129
  %s2131 = scalar_lea.vmem %s0, 24
  %v2132 = vld [vmem:[%s2131] sm:$0xf]
  %v2134 = vsel %vm217, %v2132, 0
  %2136 = vmatpush.msra.mxu0 0.0
  %2137 = vmatpush.msra.mxu0 0.0
  %2138 = vmatpush.msra.mxu0 0.0
  %2139 = vmatpush.msra.mxu0 0.0
  %2140 = vmatpush.msra.mxu0 0.0
  %2141 = vmatpush.msra.mxu0 0.0
  %2142 = vmatpush.msra.mxu0 0.0
  %2143 = vmatpush.msra.mxu0 0.0
  %2144 = vmatpush.msra.mxu0 0.0
  %2145 = vmatpush.msra.mxu0 0.0
  %2146 = vmatpush.msra.mxu0 0.0
  %2147 = vmatpush.msra.mxu0 0.0
  %2148 = vmatpush.msra.mxu0 0.0
  %2149 = vmatpush.msra.mxu0 0.0
  %2150 = vmatpush.msra.mxu0 0.0
  %2151 = vmatpush.msra.mxu0 %v2134
  %2152 = vmatmul.f32.gmra.mxu0 %v182
  %v2153 = vpop.f32.mrf.mxu0
  %v2154 = vadd.f32 %v70, %v2153
  %2155 = vmatmul.f32.gmra.mxu0 %v185
  %v2156 = vpop.f32.mrf.mxu0
  %v2157 = vadd.f32 %v75, %v2156
  %2158 = vmatmul.f32.gmra.mxu0 %v188
  %v2159 = vpop.f32.mrf.mxu0
  %v2160 = vadd.f32 %v80, %v2159
  %2161 = vmatmul.f32.gmra.mxu0 %v191
  %v2162 = vpop.f32.mrf.mxu0
  %v2163 = vadd.f32 %v85, %v2162
  %2164 = vmatmul.f32.gmra.mxu0 %v194
  %v2165 = vpop.f32.mrf.mxu0
  %v2166 = vadd.f32 %v90, %v2165
  %2167 = vmatmul.f32.gmra.mxu0 %v197
  %v2168 = vpop.f32.mrf.mxu0
  %v2169 = vadd.f32 %v95, %v2168
  %2170 = vmatmul.f32.gmra.mxu0 %v200
  %v2171 = vpop.f32.mrf.mxu0
  %v2172 = vadd.f32 %v100, %v2171
  %2173 = vmatmul.f32.gmra.mxu0 %v203
  %v2174 = vpop.f32.mrf.mxu0
  %v2175 = vadd.f32 %v105, %v2174
  %2176 = vmatmul.f32.gmra.mxu0 %v206
  %v2177 = vpop.f32.mrf.mxu0
  %v2178 = vadd.f32 %v110, %v2177
  %2179 = vmatmul.f32.gmra.mxu0 %v209
  %v2180 = vpop.f32.mrf.mxu0
  %v2181 = vadd.f32 %v115, %v2180
  %2182 = vmatmul.f32.gmra.mxu0 %v212
  %v2183 = vpop.f32.mrf.mxu0
  %v2184 = vadd.f32 %v120, %v2183
  %2185 = vmatmul.f32.gmra.mxu0 %v215
  %v2186 = vpop.f32.mrf.mxu0
  %v2187 = vadd.f32 %v125, %v2186
  %2188 = vdwg.mxu0
  %2189 = vmatpush.msra.mxu0 0.0
  %2190 = vmatpush.msra.mxu0 0.0
  %2191 = vmatpush.msra.mxu0 0.0
  %2192 = vmatpush.msra.mxu0 0.0
  %2193 = vmatpush.msra.mxu0 0.0
  %2194 = vmatpush.msra.mxu0 0.0
  %2195 = vmatpush.msra.mxu0 0.0
  %2196 = vmatpush.msra.mxu0 0.0
  %2197 = vmatpush.msra.mxu0 0.0
  %2198 = vmatpush.msra.mxu0 0.0
  %2199 = vmatpush.msra.mxu0 0.0
  %2200 = vmatpush.msra.mxu0 0.0
  %2201 = vmatpush.msra.mxu0 %v2116
  %2202 = vmatpush.msra.mxu0 %v2115
  %2203 = vmatpush.msra.mxu0 %v2114
  %2204 = vmatpush.msra.mxu0 %v2113
  %2205 = vmatmul.f32.gmra.mxu0 %v276
  %v2206 = vpop.f32.mrf.mxu0
  %v2207 = vadd.f32 0.0, %v2206
  %2208 = vmatmul.f32.gmra.mxu0 %v279
  %v2209 = vpop.f32.mrf.mxu0
  %v2210 = vadd.f32 0.0, %v2209
  %2211 = vmatmul.f32.gmra.mxu0 %v282
  %v2212 = vpop.f32.mrf.mxu0
  %v2213 = vadd.f32 0.0, %v2212
  %2214 = vmatmul.f32.gmra.mxu0 %v285
  %v2215 = vpop.f32.mrf.mxu0
  %v2216 = vadd.f32 0.0, %v2215
  %2217 = vmatmul.f32.gmra.mxu0 %v288
  %v2218 = vpop.f32.mrf.mxu0
  %v2219 = vadd.f32 0.0, %v2218
  %2220 = vmatmul.f32.gmra.mxu0 %v291
  %v2221 = vpop.f32.mrf.mxu0
  %v2222 = vadd.f32 0.0, %v2221
  %2223 = vmatmul.f32.gmra.mxu0 %v294
  %v2224 = vpop.f32.mrf.mxu0
  %v2225 = vadd.f32 0.0, %v2224
  %2226 = vmatmul.f32.gmra.mxu0 %v297
  %v2227 = vpop.f32.mrf.mxu0
  %v2228 = vadd.f32 0.0, %v2227
  %2229 = vmatmul.f32.gmra.mxu0 %v300
  %v2230 = vpop.f32.mrf.mxu0
  %v2231 = vadd.f32 0.0, %v2230
  %2232 = vmatmul.f32.gmra.mxu0 %v303
  %v2233 = vpop.f32.mrf.mxu0
  %v2234 = vadd.f32 0.0, %v2233
  %2235 = vmatmul.f32.gmra.mxu0 %v306
  %v2236 = vpop.f32.mrf.mxu0
  %v2237 = vadd.f32 0.0, %v2236
  %2238 = vmatmul.f32.gmra.mxu0 %v309
  %v2239 = vpop.f32.mrf.mxu0
  %v2240 = vadd.f32 0.0, %v2239
  %2241 = vdwg.mxu0
  %v2242 = vadd.f32 %v2154, %v2207
  %v2243 = vadd.f32 %v2157, %v2210
  %v2244 = vadd.f32 %v2160, %v2213
  %v2245 = vadd.f32 %v2163, %v2216
  %v2246 = vxor.u32 %v2242, 2147483648
  %v2247 = vxor.u32 %v2243, 2147483648
  %v2248 = vxor.u32 %v2244, 2147483648
  %v2249 = vxor.u32 %v2245, 2147483648
  %v2250 = vmul.f32 %v2246, 1.442695
  %v2251 = vpow.pop %v2250
  %v2252 = vmul.f32 %v2247, 1.442695
  %v2253 = vpow.pop %v2252
  %v2254 = vmul.f32 %v2248, 1.442695
  %v2255 = vpow.pop %v2254
  %v2256 = vmul.f32 %v2249, 1.442695
  %v2257 = vpow.pop %v2256
  %v2258 = vadd.f32 %v2251, 1.0
  %v2259 = vadd.f32 %v2253, 1.0
  %v2260 = vadd.f32 %v2255, 1.0
  %v2261 = vadd.f32 %v2257, 1.0
  %v2262 = vrcp.pop %v2258
  %v2263 = vmul.f32 %v2258, %v2262
  %v2264 = vsub.f32 1.0, %v2263
  %v2265 = vmul.f32 %v2262, %v2264
  %v2266 = vadd.f32 %v2262, %v2265
  %vm2267 = vweird.f32 %v2258
  %vm2268 = vweird.f32 %v2262
  %vm2269 = vmor %vm2267, %vm2268
  %v2270 = vsel %vm2269, %v2262, %v2266
  %v2271 = vand.u32 2147483647, %v2258
  %vm2272 = vcmp.eq.f32.partialorder %v2271, 8.507059e+37
  %v2273 = vand.u32 %v2258, 2147483648
  %v2274 = vor.u32 1.1754944e-38, %v2273
  %v2275 = vsel %vm2272, %v2274, %v2270
  %v2276 = vmul.f32 1.0, %v2275
  %v2277 = vrcp.pop %v2259
  %v2278 = vmul.f32 %v2259, %v2277
  %v2279 = vsub.f32 1.0, %v2278
  %v2280 = vmul.f32 %v2277, %v2279
  %v2281 = vadd.f32 %v2277, %v2280
  %vm2282 = vweird.f32 %v2259
  %vm2283 = vweird.f32 %v2277
  %vm2284 = vmor %vm2282, %vm2283
  %v2285 = vsel %vm2284, %v2277, %v2281
  %v2286 = vand.u32 2147483647, %v2259
  %vm2287 = vcmp.eq.f32.partialorder %v2286, 8.507059e+37
  %v2288 = vand.u32 %v2259, 2147483648
  %v2289 = vor.u32 1.1754944e-38, %v2288
  %v2290 = vsel %vm2287, %v2289, %v2285
  %v2291 = vmul.f32 1.0, %v2290
  %v2292 = vrcp.pop %v2260
  %v2293 = vmul.f32 %v2260, %v2292
  %v2294 = vsub.f32 1.0, %v2293
  %v2295 = vmul.f32 %v2292, %v2294
  %v2296 = vadd.f32 %v2292, %v2295
  %vm2297 = vweird.f32 %v2260
  %vm2298 = vweird.f32 %v2292
  %vm2299 = vmor %vm2297, %vm2298
  %v2300 = vsel %vm2299, %v2292, %v2296
  %v2301 = vand.u32 2147483647, %v2260
  %vm2302 = vcmp.eq.f32.partialorder %v2301, 8.507059e+37
  %v2303 = vand.u32 %v2260, 2147483648
  %v2304 = vor.u32 1.1754944e-38, %v2303
  %v2305 = vsel %vm2302, %v2304, %v2300
  %v2306 = vmul.f32 1.0, %v2305
  %v2307 = vrcp.pop %v2261
  %v2308 = vmul.f32 %v2261, %v2307
  %v2309 = vsub.f32 1.0, %v2308
  %v2310 = vmul.f32 %v2307, %v2309
  %v2311 = vadd.f32 %v2307, %v2310
  %vm2312 = vweird.f32 %v2261
  %vm2313 = vweird.f32 %v2307
  %vm2314 = vmor %vm2312, %vm2313
  %v2315 = vsel %vm2314, %v2307, %v2311
  %v2316 = vand.u32 2147483647, %v2261
  %vm2317 = vcmp.eq.f32.partialorder %v2316, 8.507059e+37
  %v2318 = vand.u32 %v2261, 2147483648
  %v2319 = vor.u32 1.1754944e-38, %v2318
  %v2320 = vsel %vm2317, %v2319, %v2315
  %v2321 = vmul.f32 1.0, %v2320
  %v2322 = vadd.f32 %v2166, %v2219
  %v2323 = vadd.f32 %v2169, %v2222
  %v2324 = vadd.f32 %v2172, %v2225
  %v2325 = vadd.f32 %v2175, %v2228
  %v2326 = vxor.u32 %v2322, 2147483648
  %v2327 = vxor.u32 %v2323, 2147483648
  %v2328 = vxor.u32 %v2324, 2147483648
  %v2329 = vxor.u32 %v2325, 2147483648
  %v2330 = vmul.f32 %v2326, 1.442695
  %v2331 = vpow.pop %v2330
  %v2332 = vmul.f32 %v2327, 1.442695
  %v2333 = vpow.pop %v2332
  %v2334 = vmul.f32 %v2328, 1.442695
  %v2335 = vpow.pop %v2334
  %v2336 = vmul.f32 %v2329, 1.442695
  %v2337 = vpow.pop %v2336
  %v2338 = vadd.f32 %v2331, 1.0
  %v2339 = vadd.f32 %v2333, 1.0
  %v2340 = vadd.f32 %v2335, 1.0
  %v2341 = vadd.f32 %v2337, 1.0
  %v2342 = vrcp.pop %v2338
  %v2343 = vmul.f32 %v2338, %v2342
  %v2344 = vsub.f32 1.0, %v2343
  %v2345 = vmul.f32 %v2342, %v2344
  %v2346 = vadd.f32 %v2342, %v2345
  %vm2347 = vweird.f32 %v2338
  %vm2348 = vweird.f32 %v2342
  %vm2349 = vmor %vm2347, %vm2348
  %v2350 = vsel %vm2349, %v2342, %v2346
  %v2351 = vand.u32 2147483647, %v2338
  %vm2352 = vcmp.eq.f32.partialorder %v2351, 8.507059e+37
  %v2353 = vand.u32 %v2338, 2147483648
  %v2354 = vor.u32 1.1754944e-38, %v2353
  %v2355 = vsel %vm2352, %v2354, %v2350
  %v2356 = vmul.f32 1.0, %v2355
  %v2357 = vrcp.pop %v2339
  %v2358 = vmul.f32 %v2339, %v2357
  %v2359 = vsub.f32 1.0, %v2358
  %v2360 = vmul.f32 %v2357, %v2359
  %v2361 = vadd.f32 %v2357, %v2360
  %vm2362 = vweird.f32 %v2339
  %vm2363 = vweird.f32 %v2357
  %vm2364 = vmor %vm2362, %vm2363
  %v2365 = vsel %vm2364, %v2357, %v2361
  %v2366 = vand.u32 2147483647, %v2339
  %vm2367 = vcmp.eq.f32.partialorder %v2366, 8.507059e+37
  %v2368 = vand.u32 %v2339, 2147483648
  %v2369 = vor.u32 1.1754944e-38, %v2368
  %v2370 = vsel %vm2367, %v2369, %v2365
  %v2371 = vmul.f32 1.0, %v2370
  %v2372 = vrcp.pop %v2340
  %v2373 = vmul.f32 %v2340, %v2372
  %v2374 = vsub.f32 1.0, %v2373
  %v2375 = vmul.f32 %v2372, %v2374
  %v2376 = vadd.f32 %v2372, %v2375
  %vm2377 = vweird.f32 %v2340
  %vm2378 = vweird.f32 %v2372
  %vm2379 = vmor %vm2377, %vm2378
  %v2380 = vsel %vm2379, %v2372, %v2376
  %v2381 = vand.u32 2147483647, %v2340
  %vm2382 = vcmp.eq.f32.partialorder %v2381, 8.507059e+37
  %v2383 = vand.u32 %v2340, 2147483648
  %v2384 = vor.u32 1.1754944e-38, %v2383
  %v2385 = vsel %vm2382, %v2384, %v2380
  %v2386 = vmul.f32 1.0, %v2385
  %v2387 = vrcp.pop %v2341
  %v2388 = vmul.f32 %v2341, %v2387
  %v2389 = vsub.f32 1.0, %v2388
  %v2390 = vmul.f32 %v2387, %v2389
  %v2391 = vadd.f32 %v2387, %v2390
  %vm2392 = vweird.f32 %v2341
  %vm2393 = vweird.f32 %v2387
  %vm2394 = vmor %vm2392, %vm2393
  %v2395 = vsel %vm2394, %v2387, %v2391
  %v2396 = vand.u32 2147483647, %v2341
  %vm2397 = vcmp.eq.f32.partialorder %v2396, 8.507059e+37
  %v2398 = vand.u32 %v2341, 2147483648
  %v2399 = vor.u32 1.1754944e-38, %v2398
  %v2400 = vsel %vm2397, %v2399, %v2395
  %v2401 = vmul.f32 1.0, %v2400
  %v2402 = vadd.f32 %v2231, %v134
  %v2403 = vadd.f32 %v2234, %v139
  %v2404 = vadd.f32 %v2237, %v144
  %v2405 = vadd.f32 %v2240, %v149
  %v2406 = vmul.f32 %v2276, %v2402
  %v2407 = vmul.f32 %v2291, %v2403
  %v2408 = vmul.f32 %v2306, %v2404
  %v2409 = vmul.f32 %v2321, %v2405
  %v2410 = vadd.f32 %v2178, %v2406
  %v2411 = vadd.f32 %v2181, %v2407
  %v2412 = vadd.f32 %v2184, %v2408
  %v2413 = vadd.f32 %v2187, %v2409
  %v2414 = vtanh.pop %v2410
  %v2415 = vtanh.pop %v2411
  %v2416 = vtanh.pop %v2412
  %v2417 = vtanh.pop %v2413
  %v2418 = vsub.f32 %v2113, %v2414
  %v2419 = vsub.f32 %v2114, %v2415
  %v2420 = vsub.f32 %v2115, %v2416
  %v2421 = vsub.f32 %v2116, %v2417
  %v2422 = vmul.f32 %v2356, %v2418
  %v2423 = vmul.f32 %v2371, %v2419
  %v2424 = vmul.f32 %v2386, %v2420
  %v2425 = vmul.f32 %v2401, %v2421
  %v2426 = vadd.f32 %v2414, %v2422
  %v2427 = vadd.f32 %v2415, %v2423
  %v2428 = vadd.f32 %v2416, %v2424
  %v2429 = vadd.f32 %v2417, %v2425
  %v2430 = vmul.f32 %v2426, %v158
  %v2431 = vmul.f32 %v2427, %v163
  %v2432 = vmul.f32 %v2428, %v168
  %v2433 = vmul.f32 %v2429, %v173
  %v2434 = vadd.f32 %v2430, %v2431
  %v2435 = vadd.f32 %v2434, %v2432
  %v2436 = vadd.f32 %v2435, %v2433
  %v2437 = vrot.slane %v2436, 4
  %v2438 = vadd.f32 %v2436, %v2437
  %v2439 = vrot.slane %v2438, 2
  %v2440 = vadd.f32 %v2438, %v2439
  %v2441 = vrot.slane %v2440, 1
  %v2442 = vadd.f32 %v2440, %v2441
  %2443 = vst [vmem:[%s6 + $0x6] sm:$0x1] %v2442
  %s2444 = scalar_lea.vmem %s0, 28
  %v2445 = vld [vmem:[%s2444] sm:$0xf]
  %v2447 = vsel %vm217, %v2445, 0
  %2449 = vmatpush.msra.mxu0 0.0
  %2450 = vmatpush.msra.mxu0 0.0
  %2451 = vmatpush.msra.mxu0 0.0
  %2452 = vmatpush.msra.mxu0 0.0
  %2453 = vmatpush.msra.mxu0 0.0
  %2454 = vmatpush.msra.mxu0 0.0
  %2455 = vmatpush.msra.mxu0 0.0
  %2456 = vmatpush.msra.mxu0 0.0
  %2457 = vmatpush.msra.mxu0 0.0
  %2458 = vmatpush.msra.mxu0 0.0
  %2459 = vmatpush.msra.mxu0 0.0
  %2460 = vmatpush.msra.mxu0 0.0
  %2461 = vmatpush.msra.mxu0 0.0
  %2462 = vmatpush.msra.mxu0 0.0
  %2463 = vmatpush.msra.mxu0 0.0
  %2464 = vmatpush.msra.mxu0 %v2447
  %2465 = vmatmul.f32.gmra.mxu0 %v182
  %v2466 = vpop.f32.mrf.mxu0
  %v2467 = vadd.f32 %v70, %v2466
  %2468 = vmatmul.f32.gmra.mxu0 %v185
  %v2469 = vpop.f32.mrf.mxu0
  %v2470 = vadd.f32 %v75, %v2469
  %2471 = vmatmul.f32.gmra.mxu0 %v188
  %v2472 = vpop.f32.mrf.mxu0
  %v2473 = vadd.f32 %v80, %v2472
  %2474 = vmatmul.f32.gmra.mxu0 %v191
  %v2475 = vpop.f32.mrf.mxu0
  %v2476 = vadd.f32 %v85, %v2475
  %2477 = vmatmul.f32.gmra.mxu0 %v194
  %v2478 = vpop.f32.mrf.mxu0
  %v2479 = vadd.f32 %v90, %v2478
  %2480 = vmatmul.f32.gmra.mxu0 %v197
  %v2481 = vpop.f32.mrf.mxu0
  %v2482 = vadd.f32 %v95, %v2481
  %2483 = vmatmul.f32.gmra.mxu0 %v200
  %v2484 = vpop.f32.mrf.mxu0
  %v2485 = vadd.f32 %v100, %v2484
  %2486 = vmatmul.f32.gmra.mxu0 %v203
  %v2487 = vpop.f32.mrf.mxu0
  %v2488 = vadd.f32 %v105, %v2487
  %2489 = vmatmul.f32.gmra.mxu0 %v206
  %v2490 = vpop.f32.mrf.mxu0
  %v2491 = vadd.f32 %v110, %v2490
  %2492 = vmatmul.f32.gmra.mxu0 %v209
  %v2493 = vpop.f32.mrf.mxu0
  %v2494 = vadd.f32 %v115, %v2493
  %2495 = vmatmul.f32.gmra.mxu0 %v212
  %v2496 = vpop.f32.mrf.mxu0
  %v2497 = vadd.f32 %v120, %v2496
  %2498 = vmatmul.f32.gmra.mxu0 %v215
  %v2499 = vpop.f32.mrf.mxu0
  %v2500 = vadd.f32 %v125, %v2499
  %2501 = vdwg.mxu0
  %2502 = vmatpush.msra.mxu0 0.0
  %2503 = vmatpush.msra.mxu0 0.0
  %2504 = vmatpush.msra.mxu0 0.0
  %2505 = vmatpush.msra.mxu0 0.0
  %2506 = vmatpush.msra.mxu0 0.0
  %2507 = vmatpush.msra.mxu0 0.0
  %2508 = vmatpush.msra.mxu0 0.0
  %2509 = vmatpush.msra.mxu0 0.0
  %2510 = vmatpush.msra.mxu0 0.0
  %2511 = vmatpush.msra.mxu0 0.0
  %2512 = vmatpush.msra.mxu0 0.0
  %2513 = vmatpush.msra.mxu0 0.0
  %2514 = vmatpush.msra.mxu0 %v2429
  %2515 = vmatpush.msra.mxu0 %v2428
  %2516 = vmatpush.msra.mxu0 %v2427
  %2517 = vmatpush.msra.mxu0 %v2426
  %2518 = vmatmul.f32.gmra.mxu0 %v276
  %v2519 = vpop.f32.mrf.mxu0
  %v2520 = vadd.f32 0.0, %v2519
  %2521 = vmatmul.f32.gmra.mxu0 %v279
  %v2522 = vpop.f32.mrf.mxu0
  %v2523 = vadd.f32 0.0, %v2522
  %2524 = vmatmul.f32.gmra.mxu0 %v282
  %v2525 = vpop.f32.mrf.mxu0
  %v2526 = vadd.f32 0.0, %v2525
  %2527 = vmatmul.f32.gmra.mxu0 %v285
  %v2528 = vpop.f32.mrf.mxu0
  %v2529 = vadd.f32 0.0, %v2528
  %2530 = vmatmul.f32.gmra.mxu0 %v288
  %v2531 = vpop.f32.mrf.mxu0
  %v2532 = vadd.f32 0.0, %v2531
  %2533 = vmatmul.f32.gmra.mxu0 %v291
  %v2534 = vpop.f32.mrf.mxu0
  %v2535 = vadd.f32 0.0, %v2534
  %2536 = vmatmul.f32.gmra.mxu0 %v294
  %v2537 = vpop.f32.mrf.mxu0
  %v2538 = vadd.f32 0.0, %v2537
  %2539 = vmatmul.f32.gmra.mxu0 %v297
  %v2540 = vpop.f32.mrf.mxu0
  %v2541 = vadd.f32 0.0, %v2540
  %2542 = vmatmul.f32.gmra.mxu0 %v300
  %v2543 = vpop.f32.mrf.mxu0
  %v2544 = vadd.f32 0.0, %v2543
  %2545 = vmatmul.f32.gmra.mxu0 %v303
  %v2546 = vpop.f32.mrf.mxu0
  %v2547 = vadd.f32 0.0, %v2546
  %2548 = vmatmul.f32.gmra.mxu0 %v306
  %v2549 = vpop.f32.mrf.mxu0
  %v2550 = vadd.f32 0.0, %v2549
  %2551 = vmatmul.f32.gmra.mxu0 %v309
  %v2552 = vpop.f32.mrf.mxu0
  %v2553 = vadd.f32 0.0, %v2552
  %2554 = vdwg.mxu0
  %v2555 = vadd.f32 %v2467, %v2520
  %v2556 = vadd.f32 %v2470, %v2523
  %v2557 = vadd.f32 %v2473, %v2526
  %v2558 = vadd.f32 %v2476, %v2529
  %v2559 = vxor.u32 %v2555, 2147483648
  %v2560 = vxor.u32 %v2556, 2147483648
  %v2561 = vxor.u32 %v2557, 2147483648
  %v2562 = vxor.u32 %v2558, 2147483648
  %v2563 = vmul.f32 %v2559, 1.442695
  %v2564 = vpow.pop %v2563
  %v2565 = vmul.f32 %v2560, 1.442695
  %v2566 = vpow.pop %v2565
  %v2567 = vmul.f32 %v2561, 1.442695
  %v2568 = vpow.pop %v2567
  %v2569 = vmul.f32 %v2562, 1.442695
  %v2570 = vpow.pop %v2569
  %v2571 = vadd.f32 %v2564, 1.0
  %v2572 = vadd.f32 %v2566, 1.0
  %v2573 = vadd.f32 %v2568, 1.0
  %v2574 = vadd.f32 %v2570, 1.0
  %v2575 = vrcp.pop %v2571
  %v2576 = vmul.f32 %v2571, %v2575
  %v2577 = vsub.f32 1.0, %v2576
  %v2578 = vmul.f32 %v2575, %v2577
  %v2579 = vadd.f32 %v2575, %v2578
  %vm2580 = vweird.f32 %v2571
  %vm2581 = vweird.f32 %v2575
  %vm2582 = vmor %vm2580, %vm2581
  %v2583 = vsel %vm2582, %v2575, %v2579
  %v2584 = vand.u32 2147483647, %v2571
  %vm2585 = vcmp.eq.f32.partialorder %v2584, 8.507059e+37
  %v2586 = vand.u32 %v2571, 2147483648
  %v2587 = vor.u32 1.1754944e-38, %v2586
  %v2588 = vsel %vm2585, %v2587, %v2583
  %v2589 = vmul.f32 1.0, %v2588
  %v2590 = vrcp.pop %v2572
  %v2591 = vmul.f32 %v2572, %v2590
  %v2592 = vsub.f32 1.0, %v2591
  %v2593 = vmul.f32 %v2590, %v2592
  %v2594 = vadd.f32 %v2590, %v2593
  %vm2595 = vweird.f32 %v2572
  %vm2596 = vweird.f32 %v2590
  %vm2597 = vmor %vm2595, %vm2596
  %v2598 = vsel %vm2597, %v2590, %v2594
  %v2599 = vand.u32 2147483647, %v2572
  %vm2600 = vcmp.eq.f32.partialorder %v2599, 8.507059e+37
  %v2601 = vand.u32 %v2572, 2147483648
  %v2602 = vor.u32 1.1754944e-38, %v2601
  %v2603 = vsel %vm2600, %v2602, %v2598
  %v2604 = vmul.f32 1.0, %v2603
  %v2605 = vrcp.pop %v2573
  %v2606 = vmul.f32 %v2573, %v2605
  %v2607 = vsub.f32 1.0, %v2606
  %v2608 = vmul.f32 %v2605, %v2607
  %v2609 = vadd.f32 %v2605, %v2608
  %vm2610 = vweird.f32 %v2573
  %vm2611 = vweird.f32 %v2605
  %vm2612 = vmor %vm2610, %vm2611
  %v2613 = vsel %vm2612, %v2605, %v2609
  %v2614 = vand.u32 2147483647, %v2573
  %vm2615 = vcmp.eq.f32.partialorder %v2614, 8.507059e+37
  %v2616 = vand.u32 %v2573, 2147483648
  %v2617 = vor.u32 1.1754944e-38, %v2616
  %v2618 = vsel %vm2615, %v2617, %v2613
  %v2619 = vmul.f32 1.0, %v2618
  %v2620 = vrcp.pop %v2574
  %v2621 = vmul.f32 %v2574, %v2620
  %v2622 = vsub.f32 1.0, %v2621
  %v2623 = vmul.f32 %v2620, %v2622
  %v2624 = vadd.f32 %v2620, %v2623
  %vm2625 = vweird.f32 %v2574
  %vm2626 = vweird.f32 %v2620
  %vm2627 = vmor %vm2625, %vm2626
  %v2628 = vsel %vm2627, %v2620, %v2624
  %v2629 = vand.u32 2147483647, %v2574
  %vm2630 = vcmp.eq.f32.partialorder %v2629, 8.507059e+37
  %v2631 = vand.u32 %v2574, 2147483648
  %v2632 = vor.u32 1.1754944e-38, %v2631
  %v2633 = vsel %vm2630, %v2632, %v2628
  %v2634 = vmul.f32 1.0, %v2633
  %v2635 = vadd.f32 %v2479, %v2532
  %v2636 = vadd.f32 %v2482, %v2535
  %v2637 = vadd.f32 %v2485, %v2538
  %v2638 = vadd.f32 %v2488, %v2541
  %v2639 = vxor.u32 %v2635, 2147483648
  %v2640 = vxor.u32 %v2636, 2147483648
  %v2641 = vxor.u32 %v2637, 2147483648
  %v2642 = vxor.u32 %v2638, 2147483648
  %v2643 = vmul.f32 %v2639, 1.442695
  %v2644 = vpow.pop %v2643
  %v2645 = vmul.f32 %v2640, 1.442695
  %v2646 = vpow.pop %v2645
  %v2647 = vmul.f32 %v2641, 1.442695
  %v2648 = vpow.pop %v2647
  %v2649 = vmul.f32 %v2642, 1.442695
  %v2650 = vpow.pop %v2649
  %v2651 = vadd.f32 %v2644, 1.0
  %v2652 = vadd.f32 %v2646, 1.0
  %v2653 = vadd.f32 %v2648, 1.0
  %v2654 = vadd.f32 %v2650, 1.0
  %v2655 = vrcp.pop %v2651
  %v2656 = vmul.f32 %v2651, %v2655
  %v2657 = vsub.f32 1.0, %v2656
  %v2658 = vmul.f32 %v2655, %v2657
  %v2659 = vadd.f32 %v2655, %v2658
  %vm2660 = vweird.f32 %v2651
  %vm2661 = vweird.f32 %v2655
  %vm2662 = vmor %vm2660, %vm2661
  %v2663 = vsel %vm2662, %v2655, %v2659
  %v2664 = vand.u32 2147483647, %v2651
  %vm2665 = vcmp.eq.f32.partialorder %v2664, 8.507059e+37
  %v2666 = vand.u32 %v2651, 2147483648
  %v2667 = vor.u32 1.1754944e-38, %v2666
  %v2668 = vsel %vm2665, %v2667, %v2663
  %v2669 = vmul.f32 1.0, %v2668
  %v2670 = vrcp.pop %v2652
  %v2671 = vmul.f32 %v2652, %v2670
  %v2672 = vsub.f32 1.0, %v2671
  %v2673 = vmul.f32 %v2670, %v2672
  %v2674 = vadd.f32 %v2670, %v2673
  %vm2675 = vweird.f32 %v2652
  %vm2676 = vweird.f32 %v2670
  %vm2677 = vmor %vm2675, %vm2676
  %v2678 = vsel %vm2677, %v2670, %v2674
  %v2679 = vand.u32 2147483647, %v2652
  %vm2680 = vcmp.eq.f32.partialorder %v2679, 8.507059e+37
  %v2681 = vand.u32 %v2652, 2147483648
  %v2682 = vor.u32 1.1754944e-38, %v2681
  %v2683 = vsel %vm2680, %v2682, %v2678
  %v2684 = vmul.f32 1.0, %v2683
  %v2685 = vrcp.pop %v2653
  %v2686 = vmul.f32 %v2653, %v2685
  %v2687 = vsub.f32 1.0, %v2686
  %v2688 = vmul.f32 %v2685, %v2687
  %v2689 = vadd.f32 %v2685, %v2688
  %vm2690 = vweird.f32 %v2653
  %vm2691 = vweird.f32 %v2685
  %vm2692 = vmor %vm2690, %vm2691
  %v2693 = vsel %vm2692, %v2685, %v2689
  %v2694 = vand.u32 2147483647, %v2653
  %vm2695 = vcmp.eq.f32.partialorder %v2694, 8.507059e+37
  %v2696 = vand.u32 %v2653, 2147483648
  %v2697 = vor.u32 1.1754944e-38, %v2696
  %v2698 = vsel %vm2695, %v2697, %v2693
  %v2699 = vmul.f32 1.0, %v2698
  %v2700 = vrcp.pop %v2654
  %v2701 = vmul.f32 %v2654, %v2700
  %v2702 = vsub.f32 1.0, %v2701
  %v2703 = vmul.f32 %v2700, %v2702
  %v2704 = vadd.f32 %v2700, %v2703
  %vm2705 = vweird.f32 %v2654
  %vm2706 = vweird.f32 %v2700
  %vm2707 = vmor %vm2705, %vm2706
  %v2708 = vsel %vm2707, %v2700, %v2704
  %v2709 = vand.u32 2147483647, %v2654
  %vm2710 = vcmp.eq.f32.partialorder %v2709, 8.507059e+37
  %v2711 = vand.u32 %v2654, 2147483648
  %v2712 = vor.u32 1.1754944e-38, %v2711
  %v2713 = vsel %vm2710, %v2712, %v2708
  %v2714 = vmul.f32 1.0, %v2713
  %v2715 = vadd.f32 %v2544, %v134
  %v2716 = vadd.f32 %v2547, %v139
  %v2717 = vadd.f32 %v2550, %v144
  %v2718 = vadd.f32 %v2553, %v149
  %v2719 = vmul.f32 %v2589, %v2715
  %v2720 = vmul.f32 %v2604, %v2716
  %v2721 = vmul.f32 %v2619, %v2717
  %v2722 = vmul.f32 %v2634, %v2718
  %v2723 = vadd.f32 %v2491, %v2719
  %v2724 = vadd.f32 %v2494, %v2720
  %v2725 = vadd.f32 %v2497, %v2721
  %v2726 = vadd.f32 %v2500, %v2722
  %v2727 = vtanh.pop %v2723
  %v2728 = vtanh.pop %v2724
  %v2729 = vtanh.pop %v2725
  %v2730 = vtanh.pop %v2726
  %v2731 = vsub.f32 %v2426, %v2727
  %v2732 = vsub.f32 %v2427, %v2728
  %v2733 = vsub.f32 %v2428, %v2729
  %v2734 = vsub.f32 %v2429, %v2730
  %v2735 = vmul.f32 %v2669, %v2731
  %v2736 = vmul.f32 %v2684, %v2732
  %v2737 = vmul.f32 %v2699, %v2733
  %v2738 = vmul.f32 %v2714, %v2734
  %v2739 = vadd.f32 %v2727, %v2735
  %v2740 = vadd.f32 %v2728, %v2736
  %v2741 = vadd.f32 %v2729, %v2737
  %v2742 = vadd.f32 %v2730, %v2738
  %v2743 = vmul.f32 %v2739, %v158
  %v2744 = vmul.f32 %v2740, %v163
  %v2745 = vmul.f32 %v2741, %v168
  %v2746 = vmul.f32 %v2742, %v173
  %v2747 = vadd.f32 %v2743, %v2744
  %v2748 = vadd.f32 %v2747, %v2745
  %v2749 = vadd.f32 %v2748, %v2746
  %v2750 = vrot.slane %v2749, 4
  %v2751 = vadd.f32 %v2749, %v2750
  %v2752 = vrot.slane %v2751, 2
  %v2753 = vadd.f32 %v2751, %v2752
  %v2754 = vrot.slane %v2753, 1
  %v2755 = vadd.f32 %v2753, %v2754
  %2756 = vst [vmem:[%s6 + $0x7] sm:$0x1] %v2755
  %2757 = vst [vmem:[#allocation2] sm:$0xff] %v2739
  %2758 = vst [vmem:[#allocation2 + $0x8] sm:$0xff] %v2740
  %2759 = vst [vmem:[#allocation2 + $0x10] sm:$0xff] %v2741
  %2760 = vst [vmem:[#allocation2 + $0x18] sm:$0xff] %v2742
  // Predicated region
  $region30: #{posthoc_rnn_forward.1} parent=0 // pred_check
    _
  $region31: #{posthoc_rnn_forward.1} parent=0 // pred_check_branch
    %2762 = sbr.rel (0) target = $region33
  $region32: #{posthoc_rnn_forward.1} parent=0 // pred_region
    _
  $region33: #{posthoc_rnn_forward.1} parent=0 // pred_fallthru
    _
  // Predicated region
  $region34: #{posthoc_rnn_forward.1} parent=0 // pred_check
    _
  $region35: #{posthoc_rnn_forward.1} parent=0 // pred_check_branch
    %2764 = sbr.rel (0) target = $region37
  $region36: #{posthoc_rnn_forward.1} parent=0 // pred_region
    _
  $region37: #{posthoc_rnn_forward.1} parent=0 // pred_fallthru
    _

</llo_original>
